<compile_context>
chip_gen: v6e
topology: v6e:2x2x1
jax: 0.10.0
libtpu: 0.0.40
codegen_flags: <defaults>
</compile_context>

<pallas_src>
import jax
import jax.numpy as jnp
from jax.experimental import pallas as pl
from jax.experimental.pallas import tpu as pltpu

D = 768


def _round_up(x, m):
    return ((x + m - 1) // m) * m


def offset_kernel(x_ref, w1_ref, b1_ref, w2_ref, b2_ref, o_ref):
    # Hoisted bias reads (f32, VPU path).
    b1 = b1_ref[...]
    b2 = b2_ref[...]

    # First linear + tanh: bf16 operands into the MXU, f32 accumulation.
    x = x_ref[...].astype(jnp.bfloat16)
    h = jnp.tanh(
        jnp.dot(x, w1_ref[...], preferred_element_type=jnp.float32) + b1
    )

    # TODO(synk): Dropout(p=0.2) is identity in eval mode; training-mode mask
    # (pltpu.prng_random_bits + 1/0.8 scale) intentionally not implemented.

    # Second linear.
    y = (
        jnp.dot(h.astype(jnp.bfloat16), w2_ref[...],
                preferred_element_type=jnp.float32)
        + b2
    )
    o_ref[...] = y.astype(o_ref.dtype)


def offset_component(embs, w1, b1, w2, b2, *, tm=512):
    """OffsetComponent forward.

    embs : (N, 768) f32
    w1/w2: (768, 768) stored as (in_features, out_features) == torch weight.T
    b1/b2: (768,)
    returns (1, N, 768) f32
    """
    N, Din = embs.shape
    assert Din == D

    # bf16 weights for the MXU / halved weight DMA; biases stay f32.
    w1_bf = w1.astype(jnp.bfloat16)
    w2_bf = w2.astype(jnp.bfloat16)
    b1_2d = b1.reshape(1, D).astype(jnp.float32)
    b2_2d = b2.reshape(1, D).astype(jnp.float32)

    # Row tile: as large as possible up to `tm`, 8-aligned, never larger than
    # the (sublane-aligned) row count.  The grid uses cdiv; the boundary block
    # is handled by Pallas (padded reads, masked stores) so no explicit padding
    # of `embs` is needed.
    tm_eff = min(tm, _round_up(N, 8))
    grid = pl.cdiv(N, tm_eff)

    cost = pl.CostEstimate(
        flops=4 * N * D * D,                        # two (tm,768)x(768,768) matmuls
        transcendentals=N * D,                      # tanh
        bytes_accessed=(N * D * 4                   # x (f32)
                        + N * D * 4                 # out (f32)
                        + 2 * D * D * 2             # two bf16 weights
                        + 2 * D * 4),               # two f32 biases
    )

    out = pl.pallas_call(
        offset_kernel,
        out_shape=jax.ShapeDtypeStruct((N, D), embs.dtype),
        grid_spec=pltpu.PrefetchScalarGridSpec(
            num_scalar_prefetch=0,
            grid=(grid,),
            in_specs=[
                pl.BlockSpec((tm_eff, D), lambda i: (i, 0)),  # x row tile
                pl.BlockSpec((D, D), lambda i: (0, 0)),       # W1 (resident)
                pl.BlockSpec((1, D), lambda i: (0, 0)),       # b1 (resident)
                pl.BlockSpec((D, D), lambda i: (0, 0)),       # W2 (resident)
                pl.BlockSpec((1, D), lambda i: (0, 0)),       # b2 (resident)
            ],
            out_specs=pl.BlockSpec((tm_eff, D), lambda i: (i, 0)),
        ),
        compiler_params=pltpu.CompilerParams(
            dimension_semantics=("parallel",),  # row grid shards across TCs on v7x
            vmem_limit_bytes=32 * 1024 * 1024,  # headroom for 512-row tile on v5e
        ),
        cost_estimate=cost,
    )(embs, w1_bf, b1_2d, w2_bf, b2_2d)

    return out[None, :, :]  # unsqueeze(0)


def _reference_f32(embs, w1, b1, w2, b2):
    h = jnp.tanh(embs @ w1 + b1)          # dropout is identity in eval
    return (h @ w2 + b2)[None, :, :]


def _reference_bf16(embs, w1, b1, w2, b2):
    # Same numerics as the kernel: bf16 operands, f32 accumulation.
    w1b = w1.astype(jnp.bfloat16)
    w2b = w2.astype(jnp.bfloat16)
    h = jnp.tanh(
        jnp.dot(embs.astype(jnp.bfloat16), w1b,
                preferred_element_type=jnp.float32) + b1
    )
    y = jnp.dot(h.astype(jnp.bfloat16), w2b,
                preferred_element_type=jnp.float32) + b2
    return y[None, :, :]


if __name__ == "__main__":
    key = jax.random.PRNGKey(0)
    k_x, k_w1, k_b1, k_w2, k_b2, k_x2 = jax.random.split(key, 6)

    # nn.Linear default init bounds (+-1/sqrt(in_features)); weights stored
    # as (in, out) == PyTorch weight.T
    bound = 1.0 / (D ** 0.5)
    w1 = jax.random.uniform(k_w1, (D, D), jnp.float32, -bound, bound)
    b1 = jax.random.uniform(k_b1, (D,), jnp.float32, -bound, bound)
    w2 = jax.random.uniform(k_w2, (D, D), jnp.float32, -bound, bound)
    b2 = jax.random.uniform(k_b2, (D,), jnp.float32, -bound, bound)

    # Small sequence, matching the module's (N, 768) input.
    N1 = 8
    embs1 = jax.random.normal(k_x, (N1, D), jnp.float32)
    out1 = jax.block_until_ready(offset_component(embs1, w1, b1, w2, b2))
    assert out1.shape == (1, N1, D), out1.shape
    assert jnp.allclose(out1, _reference_bf16(embs1, w1, b1, w2, b2),
                        atol=5e-3, rtol=5e-3)
    assert jnp.allclose(out1, _reference_f32(embs1, w1, b1, w2, b2),
                        atol=5e-2, rtol=5e-2)

    # Second case exercising a multi-step (parallel) row grid with a partial
    # boundary block (520 rows, 512-row tile, grid=2).
    N2 = 520
    embs2 = jax.random.normal(k_x2, (N2, D), jnp.float32)
    out2 = jax.block_until_ready(offset_component(embs2, w1, b1, w2, b2))
    assert out2.shape == (1, N2, D), out2.shape
    assert jnp.allclose(out2, _reference_bf16(embs2, w1, b1, w2, b2),
                        atol=5e-3, rtol=5e-3)
    assert jnp.allclose(out2, _reference_f32(embs2, w1, b1, w2, b2),
                        atol=5e-2, rtol=5e-2)

    print("KERNEL_OK")
</pallas_src>

<mosaic_0001>
module attributes {stable_mosaic.version = 11 : i64} {
  func.func @offset_kernel(%arg0: i32, %arg1: memref<8x768xf32, #tpu.memory_space<vmem>>, %arg2: memref<768x768xbf16, #tpu.memory_space<vmem>>, %arg3: memref<1x768xf32, #tpu.memory_space<vmem>>, %arg4: memref<768x768xbf16, #tpu.memory_space<vmem>>, %arg5: memref<1x768xf32, #tpu.memory_space<vmem>>, %arg6: memref<8x768xf32, #tpu.memory_space<vmem>>) attributes {dimension_semantics = [#tpu.dimension_semantics<parallel>], iteration_bounds = array<i64: 1>, scalar_prefetch = 0 : i64, scratch_operands = 0 : i64, tpu.core_type = #tpu.core_type<tc>, window_params = [{transform_indices = @transform_0, window_bounds = array<i64: 8, 768>}, {pipeline_mode = #tpu.pipeline_mode<synchronous>, transform_indices = @transform_1, window_bounds = array<i64: 768, 768>}, {pipeline_mode = #tpu.pipeline_mode<synchronous>, transform_indices = @transform_2, window_bounds = array<i64: 1, 768>}, {pipeline_mode = #tpu.pipeline_mode<synchronous>, transform_indices = @transform_3, window_bounds = array<i64: 768, 768>}, {pipeline_mode = #tpu.pipeline_mode<synchronous>, transform_indices = @transform_4, window_bounds = array<i64: 1, 768>}, {transform_indices = @transform_5, window_bounds = array<i64: 8, 768>}]} {
    %c0 = arith.constant 0 : index
    %c0_0 = arith.constant 0 : index
    %0 = vector.load %arg3[%c0, %c0_0] : memref<1x768xf32, #tpu.memory_space<vmem>>, vector<1x768xf32>
    %c0_1 = arith.constant 0 : index
    %c0_2 = arith.constant 0 : index
    %1 = vector.load %arg5[%c0_1, %c0_2] : memref<1x768xf32, #tpu.memory_space<vmem>>, vector<1x768xf32>
    %c0_3 = arith.constant 0 : index
    %c0_4 = arith.constant 0 : index
    %2 = vector.load %arg1[%c0_3, %c0_4] : memref<8x768xf32, #tpu.memory_space<vmem>>, vector<8x768xf32>
    %3 = arith.truncf %2 : vector<8x768xf32> to vector<8x768xbf16>
    %c0_5 = arith.constant 0 : index
    %c0_6 = arith.constant 0 : index
    %4 = vector.load %arg2[%c0_5, %c0_6] : memref<768x768xbf16, #tpu.memory_space<vmem>>, vector<768x768xbf16>
    %cst = arith.constant dense<0.000000e+00> : vector<8x768xf32>
    %5 = tpu.matmul %3, %4, %cst {dimension_numbers = #tpu.dot_dimension_numbers<[1], [0], [0], [1], [0, 0, 1, 1], [], []>} : vector<8x768xbf16>, vector<768x768xbf16>, vector<8x768xf32> -> vector<8x768xf32>
    %6 = vector.broadcast %0 : vector<1x768xf32> to vector<8x768xf32>
    %7 = arith.addf %5, %6 : vector<8x768xf32>
    %8 = math.tanh %7 : vector<8x768xf32>
    %9 = arith.truncf %8 : vector<8x768xf32> to vector<8x768xbf16>
    %c0_7 = arith.constant 0 : index
    %c0_8 = arith.constant 0 : index
    %10 = vector.load %arg4[%c0_7, %c0_8] : memref<768x768xbf16, #tpu.memory_space<vmem>>, vector<768x768xbf16>
    %cst_9 = arith.constant dense<0.000000e+00> : vector<8x768xf32>
    %11 = tpu.matmul %9, %10, %cst_9 {dimension_numbers = #tpu.dot_dimension_numbers<[1], [0], [0], [1], [0, 0, 1, 1], [], []>} : vector<8x768xbf16>, vector<768x768xbf16>, vector<8x768xf32> -> vector<8x768xf32>
    %12 = vector.broadcast %1 : vector<1x768xf32> to vector<8x768xf32>
    %13 = arith.addf %11, %12 : vector<8x768xf32>
    %c0_10 = arith.constant 0 : index
    %c0_11 = arith.constant 0 : index
    %14 = vector.load %arg6[%c0_10, %c0_11] : memref<8x768xf32, #tpu.memory_space<vmem>>, vector<8x768xf32>
    tpu.vector_store %arg6[%c0_10, %c0_11], %13 {strides = array<i32>} : memref<8x768xf32, #tpu.memory_space<vmem>>, vector<8x768xf32>,
    return
  }
  func.func @transform_0(%arg0: i32) -> (i32, i32) {
    %c0_i32 = arith.constant 0 : i32
    %c0_i32_0 = arith.constant 0 : i32
    return %arg0, %c0_i32 : i32, i32
  }
  func.func @transform_1(%arg0: i32) -> (i32, i32) {
    %c0_i32 = arith.constant 0 : i32
    %c0_i32_0 = arith.constant 0 : i32
    %c0_i32_1 = arith.constant 0 : i32
    return %c0_i32, %c0_i32_0 : i32, i32
  }
  func.func @transform_2(%arg0: i32) -> (i32, i32) {
    %c0_i32 = arith.constant 0 : i32
    %c0_i32_0 = arith.constant 0 : i32
    %c0_i32_1 = arith.constant 0 : i32
    return %c0_i32, %c0_i32_0 : i32, i32
  }
  func.func @transform_3(%arg0: i32) -> (i32, i32) {
    %c0_i32 = arith.constant 0 : i32
    %c0_i32_0 = arith.constant 0 : i32
    %c0_i32_1 = arith.constant 0 : i32
    return %c0_i32, %c0_i32_0 : i32, i32
  }
  func.func @transform_4(%arg0: i32) -> (i32, i32) {
    %c0_i32 = arith.constant 0 : i32
    %c0_i32_0 = arith.constant 0 : i32
    %c0_i32_1 = arith.constant 0 : i32
    return %c0_i32, %c0_i32_0 : i32, i32
  }
  func.func @transform_5(%arg0: i32) -> (i32, i32) {
    %c0_i32 = arith.constant 0 : i32
    %c0_i32_0 = arith.constant 0 : i32
    return %arg0, %c0_i32 : i32, i32
  }
}

</mosaic_0001>

<llo_original>
// kernel: tpu_custom_call.1
$region0: #{tpu_custom_call.1}
  #allocation0 [shape = 'u32[]', space=smem, size = 0x4, offset = 0x4, fixed_abs, tag = 'smem constant byte address 0x4 - core index']
  #allocation1 [shape = 'u32[144,128]{1,0:T(1,128)}', space=vmem, size = 0x12000, scoped, tag = 'internal scratch']
  %s0 = inlined_call_operand.hbm [shape: f32[8,768], index: 0, kind: input, shape index: {}]
  %s1 = inlined_call_operand.hbm [shape: bf16[768,768], index: 1, kind: input, shape index: {}]
  %s2 = inlined_call_operand.hbm [shape: f32[1,768], index: 2, kind: input, shape index: {}]
  %s3 = inlined_call_operand.hbm [shape: bf16[768,768], index: 3, kind: input, shape index: {}]
  %s4 = inlined_call_operand.hbm [shape: f32[1,768], index: 4, kind: input, shape index: {}]
  %s5 = inlined_call_operand.hbm [shape: f32[8,768], index: 5, kind: output, shape index: {}]
  %s6 = sld [smem:[#allocation0]]
  $region50: #{tpu_custom_call.1} parent=0
    _
  %s8 = ssub.s32 1, %s6
  %s9 = scalar_select 0, %s8, %s6
  $region1: #{tpu_custom_call.1} parent=0
    #allocation2 [shape = 'u8[24576]{0}', space=vmem, size = 0x6000, scoped, tag = 'input window, operand 0, single buffered']
    #allocation3 [shape = 's32[1]{0}', space=sflag, size = 0x4, scoped, tag = 'scoped memory for tpu_custom_call.1']
    #allocation4 [shape = 's32[1]{0}', space=sflag, size = 0x4, scoped, tag = 'scoped memory for tpu_custom_call.1']
    #allocation5 [shape = 'u8[1179648]{0}', space=vmem, size = 0x120000, scoped, tag = 'input window, operand 1, single buffered']
    #allocation6 [shape = 's32[1]{0}', space=sflag, size = 0x4, scoped, tag = 'scoped memory for tpu_custom_call.1']
    #allocation7 [shape = 'u8[3072]{0}', space=vmem, size = 0xc00, scoped, tag = 'input window, operand 2, single buffered']
    #allocation8 [shape = 'u8[1179648]{0}', space=vmem, size = 0x120000, scoped, tag = 'input window, operand 3, single buffered']
    #allocation9 [shape = 's32[1]{0}', space=sflag, size = 0x4, scoped, tag = 'scoped memory for tpu_custom_call.1']
    #allocation10 [shape = 'u8[3072]{0}', space=vmem, size = 0xc00, scoped, tag = 'input window, operand 4, single buffered']
    #allocation11 [shape = 'u8[24576]{0}', space=vmem, size = 0x6000, scoped, tag = 'output window, operand 0, single buffered']
    %10 = vsyncpa [#allocation3], 0
    %11 = vsyncpa [#allocation6], 0
    %12 = vsyncpa [#allocation9], 0
    %13 = vsyncpa [#allocation4], 0
    // Predicated region
    $region2: #{tpu_custom_call.1} parent=1 // pred_check
      _
    $region3: #{tpu_custom_call.1} parent=1 // pred_check_branch
      %15 = sbr.rel (0) target = $region5
    $region4: #{tpu_custom_call.1} parent=1 // pred_region
      %s17 = ssub.s32 768, 768
      %18 = vsyncadd [#allocation3], %s17
      %s20 = sshll.u32 [#allocation2], 4
      %s21 = int_to_ptr.vmem [resolvable:$true] %s20
      %23 = dma.hbm_to_vmem [thread:$0]  %s0, 768, %s21, [#allocation3]
    $region5: #{tpu_custom_call.1} parent=1 // pred_fallthru
      _
    // Predicated region
    $region6: #{tpu_custom_call.1} parent=1 // pred_check
      _
    $region7: #{tpu_custom_call.1} parent=1 // pred_check_branch
      %25 = sbr.rel (0) target = $region9
    $region8: #{tpu_custom_call.1} parent=1 // pred_region
      %s27 = ssub.s32 36864, 36864
      %28 = vsyncadd [#allocation6], %s27
      %s29 = sshll.u32 [#allocation5], 4
      %s30 = int_to_ptr.vmem [resolvable:$true] %s29
      %35 = dma.hbm_to_vmem [thread:$0]  %s1, 36864, %s30, [#allocation6], 384, 384, 24
    $region9: #{tpu_custom_call.1} parent=1 // pred_fallthru
      _
    // Predicated region
    $region10: #{tpu_custom_call.1} parent=1 // pred_check
      _
    $region11: #{tpu_custom_call.1} parent=1 // pred_check_branch
      %37 = sbr.rel (0) target = $region13
    $region12: #{tpu_custom_call.1} parent=1 // pred_region
      %s39 = ssub.s32 96, 96
      %40 = vsyncadd [#allocation6], %s39
      %s42 = sshll.u32 [#allocation7], 4
      %s43 = int_to_ptr.vmem [resolvable:$true] %s42
      %45 = dma.hbm_to_vmem [thread:$0]  %s2, 96, %s43, [#allocation6]
    $region13: #{tpu_custom_call.1} parent=1 // pred_fallthru
      _
    // Predicated region
    $region14: #{tpu_custom_call.1} parent=1 // pred_check
      _
    $region15: #{tpu_custom_call.1} parent=1 // pred_check_branch
      %47 = sbr.rel (0) target = $region17
    $region16: #{tpu_custom_call.1} parent=1 // pred_region
      %s49 = ssub.s32 36864, 36864
      %50 = vsyncadd [#allocation9], %s49
      %s51 = sshll.u32 [#allocation8], 4
      %s52 = int_to_ptr.vmem [resolvable:$true] %s51
      %57 = dma.hbm_to_vmem [thread:$0]  %s3, 36864, %s52, [#allocation9], 384, 384, 24
    $region17: #{tpu_custom_call.1} parent=1 // pred_fallthru
      _
    // Predicated region
    $region18: #{tpu_custom_call.1} parent=1 // pred_check
      _
    $region19: #{tpu_custom_call.1} parent=1 // pred_check_branch
      %59 = sbr.rel (0) target = $region21
    $region20: #{tpu_custom_call.1} parent=1 // pred_region
      %s61 = ssub.s32 96, 96
      %62 = vsyncadd [#allocation9], %s61
      %s64 = sshll.u32 [#allocation10], 4
      %s65 = int_to_ptr.vmem [resolvable:$true] %s64
      %67 = dma.hbm_to_vmem [thread:$0]  %s4, 96, %s65, [#allocation9]
    $region21: #{tpu_custom_call.1} parent=1 // pred_fallthru
      _
    // Predicated region
    $region22: #{tpu_custom_call.1} parent=1 // pred_check
      _
    $region23: #{tpu_custom_call.1} parent=1 // pred_check_branch
      %69 = sbr.rel (0) target = $region25
    $region24: #{tpu_custom_call.1} parent=1 // pred_region
      %70 = dma.done [#allocation3], 768
    $region25: #{tpu_custom_call.1} parent=1 // pred_fallthru
      _
    // Predicated region
    $region26: #{tpu_custom_call.1} parent=1 // pred_check
      _
    $region27: #{tpu_custom_call.1} parent=1 // pred_check_branch
      %72 = sbr.rel (0) target = $region29
    $region28: #{tpu_custom_call.1} parent=1 // pred_region
      %73 = dma.done [#allocation6], 36864
    $region29: #{tpu_custom_call.1} parent=1 // pred_fallthru
      _
    // Predicated region
    $region30: #{tpu_custom_call.1} parent=1 // pred_check
      _
    $region31: #{tpu_custom_call.1} parent=1 // pred_check_branch
      %75 = sbr.rel (0) target = $region33
    $region32: #{tpu_custom_call.1} parent=1 // pred_region
      %76 = dma.done [#allocation6], 96
    $region33: #{tpu_custom_call.1} parent=1 // pred_fallthru
      _
    // Predicated region
    $region34: #{tpu_custom_call.1} parent=1 // pred_check
      _
    $region35: #{tpu_custom_call.1} parent=1 // pred_check_branch
      %78 = sbr.rel (0) target = $region37
    $region36: #{tpu_custom_call.1} parent=1 // pred_region
      %79 = dma.done [#allocation9], 36864
    $region37: #{tpu_custom_call.1} parent=1 // pred_fallthru
      _
    // Predicated region
    $region38: #{tpu_custom_call.1} parent=1 // pred_check
      _
    $region39: #{tpu_custom_call.1} parent=1 // pred_check_branch
      %81 = sbr.rel (0) target = $region41
    $region40: #{tpu_custom_call.1} parent=1 // pred_region
      %82 = dma.done [#allocation9], 96
    $region41: #{tpu_custom_call.1} parent=1 // pred_fallthru
      _
    %v83 = vld [vmem:[#allocation7] sm:$0x3f]
    %v84 = vld [vmem:[#allocation10] sm:$0x3f]
    %v85 = vld [vmem:[#allocation2] sm:$0xff]
    %v86 = vld [vmem:[#allocation2 + $0x8] sm:$0xff]
    %v87 = vld [vmem:[#allocation2 + $0x10] sm:$0xff]
    %v88 = vld [vmem:[#allocation2 + $0x18] sm:$0xff]
    %v89 = vld [vmem:[#allocation2 + $0x20] sm:$0xff]
    %v90 = vld [vmem:[#allocation2 + $0x28] sm:$0xff]
    %v91 = vpack.c.bf16 %v85, %v85
    %v92 = vpack.c.bf16 %v86, %v86
    %v93 = vpack.c.bf16 %v87, %v87
    %v94 = vpack.c.bf16 %v88, %v88
    %v95 = vpack.c.bf16 %v89, %v89
    %v96 = vpack.c.bf16 %v90, %v90
    %v97 = vld [vmem:[#allocation5] sm:$0xff]
    %v98 = vld [vmem:[#allocation5 + $0x8] sm:$0xff]
    %v99 = vld [vmem:[#allocation5 + $0x10] sm:$0xff]
    %v100 = vld [vmem:[#allocation5 + $0x18] sm:$0xff]
    %v101 = vld [vmem:[#allocation5 + $0x20] sm:$0xff]
    %v102 = vld [vmem:[#allocation5 + $0x28] sm:$0xff]
    %v103 = vld [vmem:[#allocation5 + $0x30] sm:$0xff]
    %v104 = vld [vmem:[#allocation5 + $0x38] sm:$0xff]
    %v105 = vld [vmem:[#allocation5 + $0x40] sm:$0xff]
    %v106 = vld [vmem:[#allocation5 + $0x48] sm:$0xff]
    %v107 = vld [vmem:[#allocation5 + $0x50] sm:$0xff]
    %v108 = vld [vmem:[#allocation5 + $0x58] sm:$0xff]
    %v109 = vld [vmem:[#allocation5 + $0x60] sm:$0xff]
    %v110 = vld [vmem:[#allocation5 + $0x68] sm:$0xff]
    %v111 = vld [vmem:[#allocation5 + $0x70] sm:$0xff]
    %v112 = vld [vmem:[#allocation5 + $0x78] sm:$0xff]
    %v113 = vld [vmem:[#allocation5 + $0x80] sm:$0xff]
    %v114 = vld [vmem:[#allocation5 + $0x88] sm:$0xff]
    %v115 = vld [vmem:[#allocation5 + $0x90] sm:$0xff]
    %v116 = vld [vmem:[#allocation5 + $0x98] sm:$0xff]
    %v117 = vld [vmem:[#allocation5 + $0xa0] sm:$0xff]
    %v118 = vld [vmem:[#allocation5 + $0xa8] sm:$0xff]
    %v119 = vld [vmem:[#allocation5 + $0xb0] sm:$0xff]
    %v120 = vld [vmem:[#allocation5 + $0xb8] sm:$0xff]
    %v121 = vld [vmem:[#allocation5 + $0xc0] sm:$0xff]
    %v122 = vld [vmem:[#allocation5 + $0xc8] sm:$0xff]
    %v123 = vld [vmem:[#allocation5 + $0xd0] sm:$0xff]
    %v124 = vld [vmem:[#allocation5 + $0xd8] sm:$0xff]
    %v125 = vld [vmem:[#allocation5 + $0xe0] sm:$0xff]
    %v126 = vld [vmem:[#allocation5 + $0xe8] sm:$0xff]
    %v127 = vld [vmem:[#allocation5 + $0xf0] sm:$0xff]
    %v128 = vld [vmem:[#allocation5 + $0xf8] sm:$0xff]
    %v129 = vld [vmem:[#allocation5 + $0x100] sm:$0xff]
    %v130 = vld [vmem:[#allocation5 + $0x108] sm:$0xff]
    %v131 = vld [vmem:[#allocation5 + $0x110] sm:$0xff]
    %v132 = vld [vmem:[#allocation5 + $0x118] sm:$0xff]
    %v133 = vld [vmem:[#allocation5 + $0x120] sm:$0xff]
    %v134 = vld [vmem:[#allocation5 + $0x128] sm:$0xff]
    %v135 = vld [vmem:[#allocation5 + $0x130] sm:$0xff]
    %v136 = vld [vmem:[#allocation5 + $0x138] sm:$0xff]
    %v137 = vld [vmem:[#allocation5 + $0x140] sm:$0xff]
    %v138 = vld [vmem:[#allocation5 + $0x148] sm:$0xff]
    %v139 = vld [vmem:[#allocation5 + $0x150] sm:$0xff]
    %v140 = vld [vmem:[#allocation5 + $0x158] sm:$0xff]
    %v141 = vld [vmem:[#allocation5 + $0x160] sm:$0xff]
    %v142 = vld [vmem:[#allocation5 + $0x168] sm:$0xff]
    %v143 = vld [vmem:[#allocation5 + $0x170] sm:$0xff]
    %v144 = vld [vmem:[#allocation5 + $0x178] sm:$0xff]
    %v145 = vld [vmem:[#allocation5 + $0x180] sm:$0xff]
    %v146 = vld [vmem:[#allocation5 + $0x188] sm:$0xff]
    %v147 = vld [vmem:[#allocation5 + $0x190] sm:$0xff]
    %v148 = vld [vmem:[#allocation5 + $0x198] sm:$0xff]
    %v149 = vld [vmem:[#allocation5 + $0x1a0] sm:$0xff]
    %v150 = vld [vmem:[#allocation5 + $0x1a8] sm:$0xff]
    %v151 = vld [vmem:[#allocation5 + $0x1b0] sm:$0xff]
    %v152 = vld [vmem:[#allocation5 + $0x1b8] sm:$0xff]
    %v153 = vld [vmem:[#allocation5 + $0x1c0] sm:$0xff]
    %v154 = vld [vmem:[#allocation5 + $0x1c8] sm:$0xff]
    %v155 = vld [vmem:[#allocation5 + $0x1d0] sm:$0xff]
    %v156 = vld [vmem:[#allocation5 + $0x1d8] sm:$0xff]
    %v157 = vld [vmem:[#allocation5 + $0x1e0] sm:$0xff]
    %v158 = vld [vmem:[#allocation5 + $0x1e8] sm:$0xff]
    %v159 = vld [vmem:[#allocation5 + $0x1f0] sm:$0xff]
    %v160 = vld [vmem:[#allocation5 + $0x1f8] sm:$0xff]
    %v161 = vld [vmem:[#allocation5 + $0x200] sm:$0xff]
    %v162 = vld [vmem:[#allocation5 + $0x208] sm:$0xff]
    %v163 = vld [vmem:[#allocation5 + $0x210] sm:$0xff]
    %v164 = vld [vmem:[#allocation5 + $0x218] sm:$0xff]
    %v165 = vld [vmem:[#allocation5 + $0x220] sm:$0xff]
    %v166 = vld [vmem:[#allocation5 + $0x228] sm:$0xff]
    %v167 = vld [vmem:[#allocation5 + $0x230] sm:$0xff]
    %v168 = vld [vmem:[#allocation5 + $0x238] sm:$0xff]
    %v169 = vld [vmem:[#allocation5 + $0x240] sm:$0xff]
    %v170 = vld [vmem:[#allocation5 + $0x248] sm:$0xff]
    %v171 = vld [vmem:[#allocation5 + $0x250] sm:$0xff]
    %v172 = vld [vmem:[#allocation5 + $0x258] sm:$0xff]
    %v173 = vld [vmem:[#allocation5 + $0x260] sm:$0xff]
    %v174 = vld [vmem:[#allocation5 + $0x268] sm:$0xff]
    %v175 = vld [vmem:[#allocation5 + $0x270] sm:$0xff]
    %v176 = vld [vmem:[#allocation5 + $0x278] sm:$0xff]
    %v177 = vld [vmem:[#allocation5 + $0x280] sm:$0xff]
    %v178 = vld [vmem:[#allocation5 + $0x288] sm:$0xff]
    %v179 = vld [vmem:[#allocation5 + $0x290] sm:$0xff]
    %v180 = vld [vmem:[#allocation5 + $0x298] sm:$0xff]
    %v181 = vld [vmem:[#allocation5 + $0x2a0] sm:$0xff]
    %v182 = vld [vmem:[#allocation5 + $0x2a8] sm:$0xff]
    %v183 = vld [vmem:[#allocation5 + $0x2b0] sm:$0xff]
    %v184 = vld [vmem:[#allocation5 + $0x2b8] sm:$0xff]
    %v185 = vld [vmem:[#allocation5 + $0x2c0] sm:$0xff]
    %v186 = vld [vmem:[#allocation5 + $0x2c8] sm:$0xff]
    %v187 = vld [vmem:[#allocation5 + $0x2d0] sm:$0xff]
    %v188 = vld [vmem:[#allocation5 + $0x2d8] sm:$0xff]
    %v189 = vld [vmem:[#allocation5 + $0x2e0] sm:$0xff]
    %v190 = vld [vmem:[#allocation5 + $0x2e8] sm:$0xff]
    %v191 = vld [vmem:[#allocation5 + $0x2f0] sm:$0xff]
    %v192 = vld [vmem:[#allocation5 + $0x2f8] sm:$0xff]
    %v193 = vld [vmem:[#allocation5 + $0x300] sm:$0xff]
    %v194 = vld [vmem:[#allocation5 + $0x308] sm:$0xff]
    %v195 = vld [vmem:[#allocation5 + $0x310] sm:$0xff]
    %v196 = vld [vmem:[#allocation5 + $0x318] sm:$0xff]
    %v197 = vld [vmem:[#allocation5 + $0x320] sm:$0xff]
    %v198 = vld [vmem:[#allocation5 + $0x328] sm:$0xff]
    %v199 = vld [vmem:[#allocation5 + $0x330] sm:$0xff]
    %v200 = vld [vmem:[#allocation5 + $0x338] sm:$0xff]
    %v201 = vld [vmem:[#allocation5 + $0x340] sm:$0xff]
    %v202 = vld [vmem:[#allocation5 + $0x348] sm:$0xff]
    %v203 = vld [vmem:[#allocation5 + $0x350] sm:$0xff]
    %v204 = vld [vmem:[#allocation5 + $0x358] sm:$0xff]
    %v205 = vld [vmem:[#allocation5 + $0x360] sm:$0xff]
    %v206 = vld [vmem:[#allocation5 + $0x368] sm:$0xff]
    %v207 = vld [vmem:[#allocation5 + $0x370] sm:$0xff]
    %v208 = vld [vmem:[#allocation5 + $0x378] sm:$0xff]
    %v209 = vld [vmem:[#allocation5 + $0x380] sm:$0xff]
    %v210 = vld [vmem:[#allocation5 + $0x388] sm:$0xff]
    %v211 = vld [vmem:[#allocation5 + $0x390] sm:$0xff]
    %v212 = vld [vmem:[#allocation5 + $0x398] sm:$0xff]
    %v213 = vld [vmem:[#allocation5 + $0x3a0] sm:$0xff]
    %v214 = vld [vmem:[#allocation5 + $0x3a8] sm:$0xff]
    %v215 = vld [vmem:[#allocation5 + $0x3b0] sm:$0xff]
    %v216 = vld [vmem:[#allocation5 + $0x3b8] sm:$0xff]
    %v217 = vld [vmem:[#allocation5 + $0x3c0] sm:$0xff]
    %v218 = vld [vmem:[#allocation5 + $0x3c8] sm:$0xff]
    %v219 = vld [vmem:[#allocation5 + $0x3d0] sm:$0xff]
    %v220 = vld [vmem:[#allocation5 + $0x3d8] sm:$0xff]
    %v221 = vld [vmem:[#allocation5 + $0x3e0] sm:$0xff]
    %v222 = vld [vmem:[#allocation5 + $0x3e8] sm:$0xff]
    %v223 = vld [vmem:[#allocation5 + $0x3f0] sm:$0xff]
    %v224 = vld [vmem:[#allocation5 + $0x3f8] sm:$0xff]
    %v225 = vld [vmem:[#allocation5 + $0x400] sm:$0xff]
    %v226 = vld [vmem:[#allocation5 + $0x408] sm:$0xff]
    %v227 = vld [vmem:[#allocation5 + $0x410] sm:$0xff]
    %v228 = vld [vmem:[#allocation5 + $0x418] sm:$0xff]
    %v229 = vld [vmem:[#allocation5 + $0x420] sm:$0xff]
    %v230 = vld [vmem:[#allocation5 + $0x428] sm:$0xff]
    %v231 = vld [vmem:[#allocation5 + $0x430] sm:$0xff]
    %v232 = vld [vmem:[#allocation5 + $0x438] sm:$0xff]
    %v233 = vld [vmem:[#allocation5 + $0x440] sm:$0xff]
    %v234 = vld [vmem:[#allocation5 + $0x448] sm:$0xff]
    %v235 = vld [vmem:[#allocation5 + $0x450] sm:$0xff]
    %v236 = vld [vmem:[#allocation5 + $0x458] sm:$0xff]
    %v237 = vld [vmem:[#allocation5 + $0x460] sm:$0xff]
    %v238 = vld [vmem:[#allocation5 + $0x468] sm:$0xff]
    %v239 = vld [vmem:[#allocation5 + $0x470] sm:$0xff]
    %v240 = vld [vmem:[#allocation5 + $0x478] sm:$0xff]
    %v241 = vld [vmem:[#allocation5 + $0x480] sm:$0xff]
    %v242 = vld [vmem:[#allocation5 + $0x488] sm:$0xff]
    %v243 = vld [vmem:[#allocation5 + $0x490] sm:$0xff]
    %v244 = vld [vmem:[#allocation5 + $0x498] sm:$0xff]
    %v245 = vld [vmem:[#allocation5 + $0x4a0] sm:$0xff]
    %v246 = vld [vmem:[#allocation5 + $0x4a8] sm:$0xff]
    %v247 = vld [vmem:[#allocation5 + $0x4b0] sm:$0xff]
    %v248 = vld [vmem:[#allocation5 + $0x4b8] sm:$0xff]
    %v249 = vld [vmem:[#allocation5 + $0x4c0] sm:$0xff]
    %v250 = vld [vmem:[#allocation5 + $0x4c8] sm:$0xff]
    %v251 = vld [vmem:[#allocation5 + $0x4d0] sm:$0xff]
    %v252 = vld [vmem:[#allocation5 + $0x4d8] sm:$0xff]
    %v253 = vld [vmem:[#allocation5 + $0x4e0] sm:$0xff]
    %v254 = vld [vmem:[#allocation5 + $0x4e8] sm:$0xff]
    %v255 = vld [vmem:[#allocation5 + $0x4f0] sm:$0xff]
    %v256 = vld [vmem:[#allocation5 + $0x4f8] sm:$0xff]
    %v257 = vld [vmem:[#allocation5 + $0x500] sm:$0xff]
    %v258 = vld [vmem:[#allocation5 + $0x508] sm:$0xff]
    %v259 = vld [vmem:[#allocation5 + $0x510] sm:$0xff]
    %v260 = vld [vmem:[#allocation5 + $0x518] sm:$0xff]
    %v261 = vld [vmem:[#allocation5 + $0x520] sm:$0xff]
    %v262 = vld [vmem:[#allocation5 + $0x528] sm:$0xff]
    %v263 = vld [vmem:[#allocation5 + $0x530] sm:$0xff]
    %v264 = vld [vmem:[#allocation5 + $0x538] sm:$0xff]
    %v265 = vld [vmem:[#allocation5 + $0x540] sm:$0xff]
    %v266 = vld [vmem:[#allocation5 + $0x548] sm:$0xff]
    %v267 = vld [vmem:[#allocation5 + $0x550] sm:$0xff]
    %v268 = vld [vmem:[#allocation5 + $0x558] sm:$0xff]
    %v269 = vld [vmem:[#allocation5 + $0x560] sm:$0xff]
    %v270 = vld [vmem:[#allocation5 + $0x568] sm:$0xff]
    %v271 = vld [vmem:[#allocation5 + $0x570] sm:$0xff]
    %v272 = vld [vmem:[#allocation5 + $0x578] sm:$0xff]
    %v273 = vld [vmem:[#allocation5 + $0x580] sm:$0xff]
    %v274 = vld [vmem:[#allocation5 + $0x588] sm:$0xff]
    %v275 = vld [vmem:[#allocation5 + $0x590] sm:$0xff]
    %v276 = vld [vmem:[#allocation5 + $0x598] sm:$0xff]
    %v277 = vld [vmem:[#allocation5 + $0x5a0] sm:$0xff]
    %v278 = vld [vmem:[#allocation5 + $0x5a8] sm:$0xff]
    %v279 = vld [vmem:[#allocation5 + $0x5b0] sm:$0xff]
    %v280 = vld [vmem:[#allocation5 + $0x5b8] sm:$0xff]
    %v281 = vld [vmem:[#allocation5 + $0x5c0] sm:$0xff]
    %v282 = vld [vmem:[#allocation5 + $0x5c8] sm:$0xff]
    %v283 = vld [vmem:[#allocation5 + $0x5d0] sm:$0xff]
    %v284 = vld [vmem:[#allocation5 + $0x5d8] sm:$0xff]
    %v285 = vld [vmem:[#allocation5 + $0x5e0] sm:$0xff]
    %v286 = vld [vmem:[#allocation5 + $0x5e8] sm:$0xff]
    %v287 = vld [vmem:[#allocation5 + $0x5f0] sm:$0xff]
    %v288 = vld [vmem:[#allocation5 + $0x5f8] sm:$0xff]
    %v289 = vld [vmem:[#allocation5 + $0x600] sm:$0xff]
    %v290 = vld [vmem:[#allocation5 + $0x608] sm:$0xff]
    %v291 = vld [vmem:[#allocation5 + $0x610] sm:$0xff]
    %v292 = vld [vmem:[#allocation5 + $0x618] sm:$0xff]
    %v293 = vld [vmem:[#allocation5 + $0x620] sm:$0xff]
    %v294 = vld [vmem:[#allocation5 + $0x628] sm:$0xff]
    %v295 = vld [vmem:[#allocation5 + $0x630] sm:$0xff]
    %v296 = vld [vmem:[#allocation5 + $0x638] sm:$0xff]
    %v297 = vld [vmem:[#allocation5 + $0x640] sm:$0xff]
    %v298 = vld [vmem:[#allocation5 + $0x648] sm:$0xff]
    %v299 = vld [vmem:[#allocation5 + $0x650] sm:$0xff]
    %v300 = vld [vmem:[#allocation5 + $0x658] sm:$0xff]
    %v301 = vld [vmem:[#allocation5 + $0x660] sm:$0xff]
    %v302 = vld [vmem:[#allocation5 + $0x668] sm:$0xff]
    %v303 = vld [vmem:[#allocation5 + $0x670] sm:$0xff]
    %v304 = vld [vmem:[#allocation5 + $0x678] sm:$0xff]
    %v305 = vld [vmem:[#allocation5 + $0x680] sm:$0xff]
    %v306 = vld [vmem:[#allocation5 + $0x688] sm:$0xff]
    %v307 = vld [vmem:[#allocation5 + $0x690] sm:$0xff]
    %v308 = vld [vmem:[#allocation5 + $0x698] sm:$0xff]
    %v309 = vld [vmem:[#allocation5 + $0x6a0] sm:$0xff]
    %v310 = vld [vmem:[#allocation5 + $0x6a8] sm:$0xff]
    %v311 = vld [vmem:[#allocation5 + $0x6b0] sm:$0xff]
    %v312 = vld [vmem:[#allocation5 + $0x6b8] sm:$0xff]
    %v313 = vld [vmem:[#allocation5 + $0x6c0] sm:$0xff]
    %v314 = vld [vmem:[#allocation5 + $0x6c8] sm:$0xff]
    %v315 = vld [vmem:[#allocation5 + $0x6d0] sm:$0xff]
    %v316 = vld [vmem:[#allocation5 + $0x6d8] sm:$0xff]
    %v317 = vld [vmem:[#allocation5 + $0x6e0] sm:$0xff]
    %v318 = vld [vmem:[#allocation5 + $0x6e8] sm:$0xff]
    %v319 = vld [vmem:[#allocation5 + $0x6f0] sm:$0xff]
    %v320 = vld [vmem:[#allocation5 + $0x6f8] sm:$0xff]
    %v321 = vld [vmem:[#allocation5 + $0x700] sm:$0xff]
    %v322 = vld [vmem:[#allocation5 + $0x708] sm:$0xff]
    %v323 = vld [vmem:[#allocation5 + $0x710] sm:$0xff]
    %v324 = vld [vmem:[#allocation5 + $0x718] sm:$0xff]
    %v325 = vld [vmem:[#allocation5 + $0x720] sm:$0xff]
    %v326 = vld [vmem:[#allocation5 + $0x728] sm:$0xff]
    %v327 = vld [vmem:[#allocation5 + $0x730] sm:$0xff]
    %v328 = vld [vmem:[#allocation5 + $0x738] sm:$0xff]
    %v329 = vld [vmem:[#allocation5 + $0x740] sm:$0xff]
    %v330 = vld [vmem:[#allocation5 + $0x748] sm:$0xff]
    %v331 = vld [vmem:[#allocation5 + $0x750] sm:$0xff]
    %v332 = vld [vmem:[#allocation5 + $0x758] sm:$0xff]
    %v333 = vld [vmem:[#allocation5 + $0x760] sm:$0xff]
    %v334 = vld [vmem:[#allocation5 + $0x768] sm:$0xff]
    %v335 = vld [vmem:[#allocation5 + $0x770] sm:$0xff]
    %v336 = vld [vmem:[#allocation5 + $0x778] sm:$0xff]
    %v337 = vld [vmem:[#allocation5 + $0x780] sm:$0xff]
    %v338 = vld [vmem:[#allocation5 + $0x788] sm:$0xff]
    %v339 = vld [vmem:[#allocation5 + $0x790] sm:$0xff]
    %v340 = vld [vmem:[#allocation5 + $0x798] sm:$0xff]
    %v341 = vld [vmem:[#allocation5 + $0x7a0] sm:$0xff]
    %v342 = vld [vmem:[#allocation5 + $0x7a8] sm:$0xff]
    %v343 = vld [vmem:[#allocation5 + $0x7b0] sm:$0xff]
    %v344 = vld [vmem:[#allocation5 + $0x7b8] sm:$0xff]
    %v345 = vld [vmem:[#allocation5 + $0x7c0] sm:$0xff]
    %v346 = vld [vmem:[#allocation5 + $0x7c8] sm:$0xff]
    %v347 = vld [vmem:[#allocation5 + $0x7d0] sm:$0xff]
    %v348 = vld [vmem:[#allocation5 + $0x7d8] sm:$0xff]
    %v349 = vld [vmem:[#allocation5 + $0x7e0] sm:$0xff]
    %v350 = vld [vmem:[#allocation5 + $0x7e8] sm:$0xff]
    %v351 = vld [vmem:[#allocation5 + $0x7f0] sm:$0xff]
    %v352 = vld [vmem:[#allocation5 + $0x7f8] sm:$0xff]
    %v353 = vld [vmem:[#allocation5 + $0x800] sm:$0xff]
    %v354 = vld [vmem:[#allocation5 + $0x808] sm:$0xff]
    %v355 = vld [vmem:[#allocation5 + $0x810] sm:$0xff]
    %v356 = vld [vmem:[#allocation5 + $0x818] sm:$0xff]
    %v357 = vld [vmem:[#allocation5 + $0x820] sm:$0xff]
    %v358 = vld [vmem:[#allocation5 + $0x828] sm:$0xff]
    %v359 = vld [vmem:[#allocation5 + $0x830] sm:$0xff]
    %v360 = vld [vmem:[#allocation5 + $0x838] sm:$0xff]
    %v361 = vld [vmem:[#allocation5 + $0x840] sm:$0xff]
    %v362 = vld [vmem:[#allocation5 + $0x848] sm:$0xff]
    %v363 = vld [vmem:[#allocation5 + $0x850] sm:$0xff]
    %v364 = vld [vmem:[#allocation5 + $0x858] sm:$0xff]
    %v365 = vld [vmem:[#allocation5 + $0x860] sm:$0xff]
    %v366 = vld [vmem:[#allocation5 + $0x868] sm:$0xff]
    %v367 = vld [vmem:[#allocation5 + $0x870] sm:$0xff]
    %v368 = vld [vmem:[#allocation5 + $0x878] sm:$0xff]
    %v369 = vld [vmem:[#allocation5 + $0x880] sm:$0xff]
    %v370 = vld [vmem:[#allocation5 + $0x888] sm:$0xff]
    %v371 = vld [vmem:[#allocation5 + $0x890] sm:$0xff]
    %v372 = vld [vmem:[#allocation5 + $0x898] sm:$0xff]
    %v373 = vld [vmem:[#allocation5 + $0x8a0] sm:$0xff]
    %v374 = vld [vmem:[#allocation5 + $0x8a8] sm:$0xff]
    %v375 = vld [vmem:[#allocation5 + $0x8b0] sm:$0xff]
    %v376 = vld [vmem:[#allocation5 + $0x8b8] sm:$0xff]
    %v377 = vld [vmem:[#allocation5 + $0x8c0] sm:$0xff]
    %v378 = vld [vmem:[#allocation5 + $0x8c8] sm:$0xff]
    %v379 = vld [vmem:[#allocation5 + $0x8d0] sm:$0xff]
    %v380 = vld [vmem:[#allocation5 + $0x8d8] sm:$0xff]
    %v381 = vld [vmem:[#allocation5 + $0x8e0] sm:$0xff]
    %v382 = vld [vmem:[#allocation5 + $0x8e8] sm:$0xff]
    %v383 = vld [vmem:[#allocation5 + $0x8f0] sm:$0xff]
    %v384 = vld [vmem:[#allocation5 + $0x8f8] sm:$0xff]
    %v386 = vlaneseq
    %v387 = vshrl.u32 %v386, 7
    %v388 = vsub.s32 0, %v387
    %v389 = vrot.slane %v83, %v388
    %v390 = vlaneseq
    %v391 = vshrl.u32 %v390, 7
    %v392 = vsub.s32 1, %v391
    %v393 = vrot.slane %v83, %v392
    %v394 = vlaneseq
    %v395 = vshrl.u32 %v394, 7
    %v396 = vsub.s32 2, %v395
    %v397 = vrot.slane %v83, %v396
    %v398 = vlaneseq
    %v399 = vshrl.u32 %v398, 7
    %v400 = vsub.s32 3, %v399
    %v401 = vrot.slane %v83, %v400
    %v402 = vlaneseq
    %v403 = vshrl.u32 %v402, 7
    %v404 = vsub.s32 4, %v403
    %v405 = vrot.slane %v83, %v404
    %v406 = vlaneseq
    %v407 = vshrl.u32 %v406, 7
    %v408 = vsub.s32 5, %v407
    %v409 = vrot.slane %v83, %v408
    %v704 = vunpack.c.l.b16 %v97
    %v705 = vunpack.c.h.b16 %v97
    %v706 = vunpack.c.l.b16 %v98
    %v707 = vunpack.c.h.b16 %v98
    %v708 = vunpack.c.l.b16 %v99
    %v709 = vunpack.c.h.b16 %v99
    %v710 = vunpack.c.l.b16 %v100
    %v711 = vunpack.c.h.b16 %v100
    %v712 = vunpack.c.l.b16 %v101
    %v713 = vunpack.c.h.b16 %v101
    %v714 = vunpack.c.l.b16 %v102
    %v715 = vunpack.c.h.b16 %v102
    %v716 = vunpack.c.l.b16 %v103
    %v717 = vunpack.c.h.b16 %v103
    %v718 = vunpack.c.l.b16 %v104
    %v719 = vunpack.c.h.b16 %v104
    %v720 = vunpack.c.l.b16 %v105
    %v721 = vunpack.c.h.b16 %v105
    %v722 = vunpack.c.l.b16 %v106
    %v723 = vunpack.c.h.b16 %v106
    %v724 = vunpack.c.l.b16 %v107
    %v725 = vunpack.c.h.b16 %v107
    %v726 = vunpack.c.l.b16 %v108
    %v727 = vunpack.c.h.b16 %v108
    %v728 = vunpack.c.l.b16 %v109
    %v729 = vunpack.c.h.b16 %v109
    %v730 = vunpack.c.l.b16 %v110
    %v731 = vunpack.c.h.b16 %v110
    %v732 = vunpack.c.l.b16 %v111
    %v733 = vunpack.c.h.b16 %v111
    %v734 = vunpack.c.l.b16 %v112
    %v735 = vunpack.c.h.b16 %v112
    %v736 = vunpack.c.l.b16 %v113
    %v737 = vunpack.c.h.b16 %v113
    %v738 = vunpack.c.l.b16 %v114
    %v739 = vunpack.c.h.b16 %v114
    %v740 = vunpack.c.l.b16 %v115
    %v741 = vunpack.c.h.b16 %v115
    %v742 = vunpack.c.l.b16 %v116
    %v743 = vunpack.c.h.b16 %v116
    %v744 = vunpack.c.l.b16 %v117
    %v745 = vunpack.c.h.b16 %v117
    %v746 = vunpack.c.l.b16 %v118
    %v747 = vunpack.c.h.b16 %v118
    %v748 = vunpack.c.l.b16 %v119
    %v749 = vunpack.c.h.b16 %v119
    %v750 = vunpack.c.l.b16 %v120
    %v751 = vunpack.c.h.b16 %v120
    %v752 = vunpack.c.l.b16 %v121
    %v753 = vunpack.c.h.b16 %v121
    %v754 = vunpack.c.l.b16 %v122
    %v755 = vunpack.c.h.b16 %v122
    %v756 = vunpack.c.l.b16 %v123
    %v757 = vunpack.c.h.b16 %v123
    %v758 = vunpack.c.l.b16 %v124
    %v759 = vunpack.c.h.b16 %v124
    %v760 = vunpack.c.l.b16 %v125
    %v761 = vunpack.c.h.b16 %v125
    %v762 = vunpack.c.l.b16 %v126
    %v763 = vunpack.c.h.b16 %v126
    %v764 = vunpack.c.l.b16 %v127
    %v765 = vunpack.c.h.b16 %v127
    %v766 = vunpack.c.l.b16 %v128
    %v767 = vunpack.c.h.b16 %v128
    %v768 = vunpack.c.l.b16 %v129
    %v769 = vunpack.c.h.b16 %v129
    %v770 = vunpack.c.l.b16 %v130
    %v771 = vunpack.c.h.b16 %v130
    %v772 = vunpack.c.l.b16 %v131
    %v773 = vunpack.c.h.b16 %v131
    %v774 = vunpack.c.l.b16 %v132
    %v775 = vunpack.c.h.b16 %v132
    %v776 = vunpack.c.l.b16 %v133
    %v777 = vunpack.c.h.b16 %v133
    %v778 = vunpack.c.l.b16 %v134
    %v779 = vunpack.c.h.b16 %v134
    %v780 = vunpack.c.l.b16 %v135
    %v781 = vunpack.c.h.b16 %v135
    %v782 = vunpack.c.l.b16 %v136
    %v783 = vunpack.c.h.b16 %v136
    %v784 = vunpack.c.l.b16 %v137
    %v785 = vunpack.c.h.b16 %v137
    %v786 = vunpack.c.l.b16 %v138
    %v787 = vunpack.c.h.b16 %v138
    %v788 = vunpack.c.l.b16 %v139
    %v789 = vunpack.c.h.b16 %v139
    %v790 = vunpack.c.l.b16 %v140
    %v791 = vunpack.c.h.b16 %v140
    %v792 = vunpack.c.l.b16 %v141
    %v793 = vunpack.c.h.b16 %v141
    %v794 = vunpack.c.l.b16 %v142
    %v795 = vunpack.c.h.b16 %v142
    %v796 = vunpack.c.l.b16 %v143
    %v797 = vunpack.c.h.b16 %v143
    %v798 = vunpack.c.l.b16 %v144
    %v799 = vunpack.c.h.b16 %v144
    %v800 = vunpack.c.l.b16 %v145
    %v801 = vunpack.c.h.b16 %v145
    %v802 = vunpack.c.l.b16 %v146
    %v803 = vunpack.c.h.b16 %v146
    %v804 = vunpack.c.l.b16 %v147
    %v805 = vunpack.c.h.b16 %v147
    %v806 = vunpack.c.l.b16 %v148
    %v807 = vunpack.c.h.b16 %v148
    %v808 = vunpack.c.l.b16 %v149
    %v809 = vunpack.c.h.b16 %v149
    %v810 = vunpack.c.l.b16 %v150
    %v811 = vunpack.c.h.b16 %v150
    %v812 = vunpack.c.l.b16 %v151
    %v813 = vunpack.c.h.b16 %v151
    %v814 = vunpack.c.l.b16 %v152
    %v815 = vunpack.c.h.b16 %v152
    %v816 = vunpack.c.l.b16 %v153
    %v817 = vunpack.c.h.b16 %v153
    %v818 = vunpack.c.l.b16 %v154
    %v819 = vunpack.c.h.b16 %v154
    %v820 = vunpack.c.l.b16 %v155
    %v821 = vunpack.c.h.b16 %v155
    %v822 = vunpack.c.l.b16 %v156
    %v823 = vunpack.c.h.b16 %v156
    %v824 = vunpack.c.l.b16 %v157
    %v825 = vunpack.c.h.b16 %v157
    %v826 = vunpack.c.l.b16 %v158
    %v827 = vunpack.c.h.b16 %v158
    %v828 = vunpack.c.l.b16 %v159
    %v829 = vunpack.c.h.b16 %v159
    %v830 = vunpack.c.l.b16 %v160
    %v831 = vunpack.c.h.b16 %v160
    %v832 = vunpack.c.l.b16 %v161
    %v833 = vunpack.c.h.b16 %v161
    %v834 = vunpack.c.l.b16 %v162
    %v835 = vunpack.c.h.b16 %v162
    %v836 = vunpack.c.l.b16 %v163
    %v837 = vunpack.c.h.b16 %v163
    %v838 = vunpack.c.l.b16 %v164
    %v839 = vunpack.c.h.b16 %v164
    %v840 = vunpack.c.l.b16 %v165
    %v841 = vunpack.c.h.b16 %v165
    %v842 = vunpack.c.l.b16 %v166
    %v843 = vunpack.c.h.b16 %v166
    %v844 = vunpack.c.l.b16 %v167
    %v845 = vunpack.c.h.b16 %v167
    %v846 = vunpack.c.l.b16 %v168
    %v847 = vunpack.c.h.b16 %v168
    %v848 = vunpack.c.l.b16 %v169
    %v849 = vunpack.c.h.b16 %v169
    %v850 = vunpack.c.l.b16 %v170
    %v851 = vunpack.c.h.b16 %v170
    %v852 = vunpack.c.l.b16 %v171
    %v853 = vunpack.c.h.b16 %v171
    %v854 = vunpack.c.l.b16 %v172
    %v855 = vunpack.c.h.b16 %v172
    %v856 = vunpack.c.l.b16 %v173
    %v857 = vunpack.c.h.b16 %v173
    %v858 = vunpack.c.l.b16 %v174
    %v859 = vunpack.c.h.b16 %v174
    %v860 = vunpack.c.l.b16 %v175
    %v861 = vunpack.c.h.b16 %v175
    %v862 = vunpack.c.l.b16 %v176
    %v863 = vunpack.c.h.b16 %v176
    %v864 = vunpack.c.l.b16 %v177
    %v865 = vunpack.c.h.b16 %v177
    %v866 = vunpack.c.l.b16 %v178
    %v867 = vunpack.c.h.b16 %v178
    %v868 = vunpack.c.l.b16 %v179
    %v869 = vunpack.c.h.b16 %v179
    %v870 = vunpack.c.l.b16 %v180
    %v871 = vunpack.c.h.b16 %v180
    %v872 = vunpack.c.l.b16 %v181
    %v873 = vunpack.c.h.b16 %v181
    %v874 = vunpack.c.l.b16 %v182
    %v875 = vunpack.c.h.b16 %v182
    %v876 = vunpack.c.l.b16 %v183
    %v877 = vunpack.c.h.b16 %v183
    %v878 = vunpack.c.l.b16 %v184
    %v879 = vunpack.c.h.b16 %v184
    %v880 = vunpack.c.l.b16 %v185
    %v881 = vunpack.c.h.b16 %v185
    %v882 = vunpack.c.l.b16 %v186
    %v883 = vunpack.c.h.b16 %v186
    %v884 = vunpack.c.l.b16 %v187
    %v885 = vunpack.c.h.b16 %v187
    %v886 = vunpack.c.l.b16 %v188
    %v887 = vunpack.c.h.b16 %v188
    %v888 = vunpack.c.l.b16 %v189
    %v889 = vunpack.c.h.b16 %v189
    %v890 = vunpack.c.l.b16 %v190
    %v891 = vunpack.c.h.b16 %v190
    %v892 = vunpack.c.l.b16 %v191
    %v893 = vunpack.c.h.b16 %v191
    %v894 = vunpack.c.l.b16 %v192
    %v895 = vunpack.c.h.b16 %v192
    %v896 = vunpack.c.l.b16 %v193
    %v897 = vunpack.c.h.b16 %v193
    %v898 = vunpack.c.l.b16 %v194
    %v899 = vunpack.c.h.b16 %v194
    %v900 = vunpack.c.l.b16 %v195
    %v901 = vunpack.c.h.b16 %v195
    %v902 = vunpack.c.l.b16 %v196
    %v903 = vunpack.c.h.b16 %v196
    %v904 = vunpack.c.l.b16 %v197
    %v905 = vunpack.c.h.b16 %v197
    %v906 = vunpack.c.l.b16 %v198
    %v907 = vunpack.c.h.b16 %v198
    %v908 = vunpack.c.l.b16 %v199
    %v909 = vunpack.c.h.b16 %v199
    %v910 = vunpack.c.l.b16 %v200
    %v911 = vunpack.c.h.b16 %v200
    %v912 = vunpack.c.l.b16 %v201
    %v913 = vunpack.c.h.b16 %v201
    %v914 = vunpack.c.l.b16 %v202
    %v915 = vunpack.c.h.b16 %v202
    %v916 = vunpack.c.l.b16 %v203
    %v917 = vunpack.c.h.b16 %v203
    %v918 = vunpack.c.l.b16 %v204
    %v919 = vunpack.c.h.b16 %v204
    %v920 = vunpack.c.l.b16 %v205
    %v921 = vunpack.c.h.b16 %v205
    %v922 = vunpack.c.l.b16 %v206
    %v923 = vunpack.c.h.b16 %v206
    %v924 = vunpack.c.l.b16 %v207
    %v925 = vunpack.c.h.b16 %v207
    %v926 = vunpack.c.l.b16 %v208
    %v927 = vunpack.c.h.b16 %v208
    %v928 = vunpack.c.l.b16 %v209
    %v929 = vunpack.c.h.b16 %v209
    %v930 = vunpack.c.l.b16 %v210
    %v931 = vunpack.c.h.b16 %v210
    %v932 = vunpack.c.l.b16 %v211
    %v933 = vunpack.c.h.b16 %v211
    %v934 = vunpack.c.l.b16 %v212
    %v935 = vunpack.c.h.b16 %v212
    %v936 = vunpack.c.l.b16 %v213
    %v937 = vunpack.c.h.b16 %v213
    %v938 = vunpack.c.l.b16 %v214
    %v939 = vunpack.c.h.b16 %v214
    %v940 = vunpack.c.l.b16 %v215
    %v941 = vunpack.c.h.b16 %v215
    %v942 = vunpack.c.l.b16 %v216
    %v943 = vunpack.c.h.b16 %v216
    %v944 = vunpack.c.l.b16 %v217
    %v945 = vunpack.c.h.b16 %v217
    %v946 = vunpack.c.l.b16 %v218
    %v947 = vunpack.c.h.b16 %v218
    %v948 = vunpack.c.l.b16 %v219
    %v949 = vunpack.c.h.b16 %v219
    %v950 = vunpack.c.l.b16 %v220
    %v951 = vunpack.c.h.b16 %v220
    %v952 = vunpack.c.l.b16 %v221
    %v953 = vunpack.c.h.b16 %v221
    %v954 = vunpack.c.l.b16 %v222
    %v955 = vunpack.c.h.b16 %v222
    %v956 = vunpack.c.l.b16 %v223
    %v957 = vunpack.c.h.b16 %v223
    %v958 = vunpack.c.l.b16 %v224
    %v959 = vunpack.c.h.b16 %v224
    %v960 = vunpack.c.l.b16 %v225
    %v961 = vunpack.c.h.b16 %v225
    %v962 = vunpack.c.l.b16 %v226
    %v963 = vunpack.c.h.b16 %v226
    %v964 = vunpack.c.l.b16 %v227
    %v965 = vunpack.c.h.b16 %v227
    %v966 = vunpack.c.l.b16 %v228
    %v967 = vunpack.c.h.b16 %v228
    %v968 = vunpack.c.l.b16 %v229
    %v969 = vunpack.c.h.b16 %v229
    %v970 = vunpack.c.l.b16 %v230
    %v971 = vunpack.c.h.b16 %v230
    %v972 = vunpack.c.l.b16 %v231
    %v973 = vunpack.c.h.b16 %v231
    %v974 = vunpack.c.l.b16 %v232
    %v975 = vunpack.c.h.b16 %v232
    %v976 = vunpack.c.l.b16 %v233
    %v977 = vunpack.c.h.b16 %v233
    %v978 = vunpack.c.l.b16 %v234
    %v979 = vunpack.c.h.b16 %v234
    %v980 = vunpack.c.l.b16 %v235
    %v981 = vunpack.c.h.b16 %v235
    %v982 = vunpack.c.l.b16 %v236
    %v983 = vunpack.c.h.b16 %v236
    %v984 = vunpack.c.l.b16 %v237
    %v985 = vunpack.c.h.b16 %v237
    %v986 = vunpack.c.l.b16 %v238
    %v987 = vunpack.c.h.b16 %v238
    %v988 = vunpack.c.l.b16 %v239
    %v989 = vunpack.c.h.b16 %v239
    %v990 = vunpack.c.l.b16 %v240
    %v991 = vunpack.c.h.b16 %v240
    %v992 = vunpack.c.l.b16 %v241
    %v993 = vunpack.c.h.b16 %v241
    %v994 = vunpack.c.l.b16 %v242
    %v995 = vunpack.c.h.b16 %v242
    %v996 = vunpack.c.l.b16 %v243
    %v997 = vunpack.c.h.b16 %v243
    %v998 = vunpack.c.l.b16 %v244
    %v999 = vunpack.c.h.b16 %v244
    %v1000 = vunpack.c.l.b16 %v245
    %v1001 = vunpack.c.h.b16 %v245
    %v1002 = vunpack.c.l.b16 %v246
    %v1003 = vunpack.c.h.b16 %v246
    %v1004 = vunpack.c.l.b16 %v247
    %v1005 = vunpack.c.h.b16 %v247
    %v1006 = vunpack.c.l.b16 %v248
    %v1007 = vunpack.c.h.b16 %v248
    %v1008 = vunpack.c.l.b16 %v249
    %v1009 = vunpack.c.h.b16 %v249
    %v1010 = vunpack.c.l.b16 %v250
    %v1011 = vunpack.c.h.b16 %v250
    %v1012 = vunpack.c.l.b16 %v251
    %v1013 = vunpack.c.h.b16 %v251
    %v1014 = vunpack.c.l.b16 %v252
    %v1015 = vunpack.c.h.b16 %v252
    %v1016 = vunpack.c.l.b16 %v253
    %v1017 = vunpack.c.h.b16 %v253
    %v1018 = vunpack.c.l.b16 %v254
    %v1019 = vunpack.c.h.b16 %v254
    %v1020 = vunpack.c.l.b16 %v255
    %v1021 = vunpack.c.h.b16 %v255
    %v1022 = vunpack.c.l.b16 %v256
    %v1023 = vunpack.c.h.b16 %v256
    %v1024 = vunpack.c.l.b16 %v257
    %v1025 = vunpack.c.h.b16 %v257
    %v1026 = vunpack.c.l.b16 %v258
    %v1027 = vunpack.c.h.b16 %v258
    %v1028 = vunpack.c.l.b16 %v259
    %v1029 = vunpack.c.h.b16 %v259
    %v1030 = vunpack.c.l.b16 %v260
    %v1031 = vunpack.c.h.b16 %v260
    %v1032 = vunpack.c.l.b16 %v261
    %v1033 = vunpack.c.h.b16 %v261
    %v1034 = vunpack.c.l.b16 %v262
    %v1035 = vunpack.c.h.b16 %v262
    %v1036 = vunpack.c.l.b16 %v263
    %v1037 = vunpack.c.h.b16 %v263
    %v1038 = vunpack.c.l.b16 %v264
    %v1039 = vunpack.c.h.b16 %v264
    %v1040 = vunpack.c.l.b16 %v265
    %v1041 = vunpack.c.h.b16 %v265
    %v1042 = vunpack.c.l.b16 %v266
    %v1043 = vunpack.c.h.b16 %v266
    %v1044 = vunpack.c.l.b16 %v267
    %v1045 = vunpack.c.h.b16 %v267
    %v1046 = vunpack.c.l.b16 %v268
    %v1047 = vunpack.c.h.b16 %v268
    %v1048 = vunpack.c.l.b16 %v269
    %v1049 = vunpack.c.h.b16 %v269
    %v1050 = vunpack.c.l.b16 %v270
    %v1051 = vunpack.c.h.b16 %v270
    %v1052 = vunpack.c.l.b16 %v271
    %v1053 = vunpack.c.h.b16 %v271
    %v1054 = vunpack.c.l.b16 %v272
    %v1055 = vunpack.c.h.b16 %v272
    %v1056 = vunpack.c.l.b16 %v273
    %v1057 = vunpack.c.h.b16 %v273
    %v1058 = vunpack.c.l.b16 %v274
    %v1059 = vunpack.c.h.b16 %v274
    %v1060 = vunpack.c.l.b16 %v275
    %v1061 = vunpack.c.h.b16 %v275
    %v1062 = vunpack.c.l.b16 %v276
    %v1063 = vunpack.c.h.b16 %v276
    %v1064 = vunpack.c.l.b16 %v277
    %v1065 = vunpack.c.h.b16 %v277
    %v1066 = vunpack.c.l.b16 %v278
    %v1067 = vunpack.c.h.b16 %v278
    %v1068 = vunpack.c.l.b16 %v279
    %v1069 = vunpack.c.h.b16 %v279
    %v1070 = vunpack.c.l.b16 %v280
    %v1071 = vunpack.c.h.b16 %v280
    %v1072 = vunpack.c.l.b16 %v281
    %v1073 = vunpack.c.h.b16 %v281
    %v1074 = vunpack.c.l.b16 %v282
    %v1075 = vunpack.c.h.b16 %v282
    %v1076 = vunpack.c.l.b16 %v283
    %v1077 = vunpack.c.h.b16 %v283
    %v1078 = vunpack.c.l.b16 %v284
    %v1079 = vunpack.c.h.b16 %v284
    %v1080 = vunpack.c.l.b16 %v285
    %v1081 = vunpack.c.h.b16 %v285
    %v1082 = vunpack.c.l.b16 %v286
    %v1083 = vunpack.c.h.b16 %v286
    %v1084 = vunpack.c.l.b16 %v287
    %v1085 = vunpack.c.h.b16 %v287
    %v1086 = vunpack.c.l.b16 %v288
    %v1087 = vunpack.c.h.b16 %v288
    %v1088 = vunpack.c.l.b16 %v289
    %v1089 = vunpack.c.h.b16 %v289
    %v1090 = vunpack.c.l.b16 %v290
    %v1091 = vunpack.c.h.b16 %v290
    %v1092 = vunpack.c.l.b16 %v291
    %v1093 = vunpack.c.h.b16 %v291
    %v1094 = vunpack.c.l.b16 %v292
    %v1095 = vunpack.c.h.b16 %v292
    %v1096 = vunpack.c.l.b16 %v293
    %v1097 = vunpack.c.h.b16 %v293
    %v1098 = vunpack.c.l.b16 %v294
    %v1099 = vunpack.c.h.b16 %v294
    %v1100 = vunpack.c.l.b16 %v295
    %v1101 = vunpack.c.h.b16 %v295
    %v1102 = vunpack.c.l.b16 %v296
    %v1103 = vunpack.c.h.b16 %v296
    %v1104 = vunpack.c.l.b16 %v297
    %v1105 = vunpack.c.h.b16 %v297
    %v1106 = vunpack.c.l.b16 %v298
    %v1107 = vunpack.c.h.b16 %v298
    %v1108 = vunpack.c.l.b16 %v299
    %v1109 = vunpack.c.h.b16 %v299
    %v1110 = vunpack.c.l.b16 %v300
    %v1111 = vunpack.c.h.b16 %v300
    %v1112 = vunpack.c.l.b16 %v301
    %v1113 = vunpack.c.h.b16 %v301
    %v1114 = vunpack.c.l.b16 %v302
    %v1115 = vunpack.c.h.b16 %v302
    %v1116 = vunpack.c.l.b16 %v303
    %v1117 = vunpack.c.h.b16 %v303
    %v1118 = vunpack.c.l.b16 %v304
    %v1119 = vunpack.c.h.b16 %v304
    %v1120 = vunpack.c.l.b16 %v305
    %v1121 = vunpack.c.h.b16 %v305
    %v1122 = vunpack.c.l.b16 %v306
    %v1123 = vunpack.c.h.b16 %v306
    %v1124 = vunpack.c.l.b16 %v307
    %v1125 = vunpack.c.h.b16 %v307
    %v1126 = vunpack.c.l.b16 %v308
    %v1127 = vunpack.c.h.b16 %v308
    %v1128 = vunpack.c.l.b16 %v309
    %v1129 = vunpack.c.h.b16 %v309
    %v1130 = vunpack.c.l.b16 %v310
    %v1131 = vunpack.c.h.b16 %v310
    %v1132 = vunpack.c.l.b16 %v311
    %v1133 = vunpack.c.h.b16 %v311
    %v1134 = vunpack.c.l.b16 %v312
    %v1135 = vunpack.c.h.b16 %v312
    %v1136 = vunpack.c.l.b16 %v313
    %v1137 = vunpack.c.h.b16 %v313
    %v1138 = vunpack.c.l.b16 %v314
    %v1139 = vunpack.c.h.b16 %v314
    %v1140 = vunpack.c.l.b16 %v315
    %v1141 = vunpack.c.h.b16 %v315
    %v1142 = vunpack.c.l.b16 %v316
    %v1143 = vunpack.c.h.b16 %v316
    %v1144 = vunpack.c.l.b16 %v317
    %v1145 = vunpack.c.h.b16 %v317
    %v1146 = vunpack.c.l.b16 %v318
    %v1147 = vunpack.c.h.b16 %v318
    %v1148 = vunpack.c.l.b16 %v319
    %v1149 = vunpack.c.h.b16 %v319
    %v1150 = vunpack.c.l.b16 %v320
    %v1151 = vunpack.c.h.b16 %v320
    %v1152 = vunpack.c.l.b16 %v321
    %v1153 = vunpack.c.h.b16 %v321
    %v1154 = vunpack.c.l.b16 %v322
    %v1155 = vunpack.c.h.b16 %v322
    %v1156 = vunpack.c.l.b16 %v323
    %v1157 = vunpack.c.h.b16 %v323
    %v1158 = vunpack.c.l.b16 %v324
    %v1159 = vunpack.c.h.b16 %v324
    %v1160 = vunpack.c.l.b16 %v325
    %v1161 = vunpack.c.h.b16 %v325
    %v1162 = vunpack.c.l.b16 %v326
    %v1163 = vunpack.c.h.b16 %v326
    %v1164 = vunpack.c.l.b16 %v327
    %v1165 = vunpack.c.h.b16 %v327
    %v1166 = vunpack.c.l.b16 %v328
    %v1167 = vunpack.c.h.b16 %v328
    %v1168 = vunpack.c.l.b16 %v329
    %v1169 = vunpack.c.h.b16 %v329
    %v1170 = vunpack.c.l.b16 %v330
    %v1171 = vunpack.c.h.b16 %v330
    %v1172 = vunpack.c.l.b16 %v331
    %v1173 = vunpack.c.h.b16 %v331
    %v1174 = vunpack.c.l.b16 %v332
    %v1175 = vunpack.c.h.b16 %v332
    %v1176 = vunpack.c.l.b16 %v333
    %v1177 = vunpack.c.h.b16 %v333
    %v1178 = vunpack.c.l.b16 %v334
    %v1179 = vunpack.c.h.b16 %v334
    %v1180 = vunpack.c.l.b16 %v335
    %v1181 = vunpack.c.h.b16 %v335
    %v1182 = vunpack.c.l.b16 %v336
    %v1183 = vunpack.c.h.b16 %v336
    %v1184 = vunpack.c.l.b16 %v337
    %v1185 = vunpack.c.h.b16 %v337
    %v1186 = vunpack.c.l.b16 %v338
    %v1187 = vunpack.c.h.b16 %v338
    %v1188 = vunpack.c.l.b16 %v339
    %v1189 = vunpack.c.h.b16 %v339
    %v1190 = vunpack.c.l.b16 %v340
    %v1191 = vunpack.c.h.b16 %v340
    %v1192 = vunpack.c.l.b16 %v341
    %v1193 = vunpack.c.h.b16 %v341
    %v1194 = vunpack.c.l.b16 %v342
    %v1195 = vunpack.c.h.b16 %v342
    %v1196 = vunpack.c.l.b16 %v343
    %v1197 = vunpack.c.h.b16 %v343
    %v1198 = vunpack.c.l.b16 %v344
    %v1199 = vunpack.c.h.b16 %v344
    %v1200 = vunpack.c.l.b16 %v345
    %v1201 = vunpack.c.h.b16 %v345
    %v1202 = vunpack.c.l.b16 %v346
    %v1203 = vunpack.c.h.b16 %v346
    %v1204 = vunpack.c.l.b16 %v347
    %v1205 = vunpack.c.h.b16 %v347
    %v1206 = vunpack.c.l.b16 %v348
    %v1207 = vunpack.c.h.b16 %v348
    %v1208 = vunpack.c.l.b16 %v349
    %v1209 = vunpack.c.h.b16 %v349
    %v1210 = vunpack.c.l.b16 %v350
    %v1211 = vunpack.c.h.b16 %v350
    %v1212 = vunpack.c.l.b16 %v351
    %v1213 = vunpack.c.h.b16 %v351
    %v1214 = vunpack.c.l.b16 %v352
    %v1215 = vunpack.c.h.b16 %v352
    %v1216 = vunpack.c.l.b16 %v353
    %v1217 = vunpack.c.h.b16 %v353
    %v1218 = vunpack.c.l.b16 %v354
    %v1219 = vunpack.c.h.b16 %v354
    %v1220 = vunpack.c.l.b16 %v355
    %v1221 = vunpack.c.h.b16 %v355
    %v1222 = vunpack.c.l.b16 %v356
    %v1223 = vunpack.c.h.b16 %v356
    %v1224 = vunpack.c.l.b16 %v357
    %v1225 = vunpack.c.h.b16 %v357
    %v1226 = vunpack.c.l.b16 %v358
    %v1227 = vunpack.c.h.b16 %v358
    %v1228 = vunpack.c.l.b16 %v359
    %v1229 = vunpack.c.h.b16 %v359
    %v1230 = vunpack.c.l.b16 %v360
    %v1231 = vunpack.c.h.b16 %v360
    %v1232 = vunpack.c.l.b16 %v361
    %v1233 = vunpack.c.h.b16 %v361
    %v1234 = vunpack.c.l.b16 %v362
    %v1235 = vunpack.c.h.b16 %v362
    %v1236 = vunpack.c.l.b16 %v363
    %v1237 = vunpack.c.h.b16 %v363
    %v1238 = vunpack.c.l.b16 %v364
    %v1239 = vunpack.c.h.b16 %v364
    %v1240 = vunpack.c.l.b16 %v365
    %v1241 = vunpack.c.h.b16 %v365
    %v1242 = vunpack.c.l.b16 %v366
    %v1243 = vunpack.c.h.b16 %v366
    %v1244 = vunpack.c.l.b16 %v367
    %v1245 = vunpack.c.h.b16 %v367
    %v1246 = vunpack.c.l.b16 %v368
    %v1247 = vunpack.c.h.b16 %v368
    %v1248 = vunpack.c.l.b16 %v369
    %v1249 = vunpack.c.h.b16 %v369
    %v1250 = vunpack.c.l.b16 %v370
    %v1251 = vunpack.c.h.b16 %v370
    %v1252 = vunpack.c.l.b16 %v371
    %v1253 = vunpack.c.h.b16 %v371
    %v1254 = vunpack.c.l.b16 %v372
    %v1255 = vunpack.c.h.b16 %v372
    %v1256 = vunpack.c.l.b16 %v373
    %v1257 = vunpack.c.h.b16 %v373
    %v1258 = vunpack.c.l.b16 %v374
    %v1259 = vunpack.c.h.b16 %v374
    %v1260 = vunpack.c.l.b16 %v375
    %v1261 = vunpack.c.h.b16 %v375
    %v1262 = vunpack.c.l.b16 %v376
    %v1263 = vunpack.c.h.b16 %v376
    %v1264 = vunpack.c.l.b16 %v377
    %v1265 = vunpack.c.h.b16 %v377
    %v1266 = vunpack.c.l.b16 %v378
    %v1267 = vunpack.c.h.b16 %v378
    %v1268 = vunpack.c.l.b16 %v379
    %v1269 = vunpack.c.h.b16 %v379
    %v1270 = vunpack.c.l.b16 %v380
    %v1271 = vunpack.c.h.b16 %v380
    %v1272 = vunpack.c.l.b16 %v381
    %v1273 = vunpack.c.h.b16 %v381
    %v1274 = vunpack.c.l.b16 %v382
    %v1275 = vunpack.c.h.b16 %v382
    %v1276 = vunpack.c.l.b16 %v383
    %v1277 = vunpack.c.h.b16 %v383
    %v1278 = vunpack.c.l.b16 %v384
    %v1279 = vunpack.c.h.b16 %v384
    %v1280 = vpack.c.b16 %v710, %v704
    %v1281 = vpack.c.b16 %v711, %v705
    %v1282 = vpack.c.b16 %v712, %v706
    %v1283 = vpack.c.b16 %v713, %v707
    %v1284 = vpack.c.b16 %v714, %v708
    %v1285 = vpack.c.b16 %v715, %v709
    %v1286 = vpack.c.b16 %v722, %v716
    %v1287 = vpack.c.b16 %v723, %v717
    %v1288 = vpack.c.b16 %v724, %v718
    %v1289 = vpack.c.b16 %v725, %v719
    %v1290 = vpack.c.b16 %v726, %v720
    %v1291 = vpack.c.b16 %v727, %v721
    %v1292 = vpack.c.b16 %v734, %v728
    %v1293 = vpack.c.b16 %v735, %v729
    %v1294 = vpack.c.b16 %v736, %v730
    %v1295 = vpack.c.b16 %v737, %v731
    %v1296 = vpack.c.b16 %v738, %v732
    %v1297 = vpack.c.b16 %v739, %v733
    %v1298 = vpack.c.b16 %v746, %v740
    %v1299 = vpack.c.b16 %v747, %v741
    %v1300 = vpack.c.b16 %v748, %v742
    %v1301 = vpack.c.b16 %v749, %v743
    %v1302 = vpack.c.b16 %v750, %v744
    %v1303 = vpack.c.b16 %v751, %v745
    %v1304 = vpack.c.b16 %v758, %v752
    %v1305 = vpack.c.b16 %v759, %v753
    %v1306 = vpack.c.b16 %v760, %v754
    %v1307 = vpack.c.b16 %v761, %v755
    %v1308 = vpack.c.b16 %v762, %v756
    %v1309 = vpack.c.b16 %v763, %v757
    %v1310 = vpack.c.b16 %v770, %v764
    %v1311 = vpack.c.b16 %v771, %v765
    %v1312 = vpack.c.b16 %v772, %v766
    %v1313 = vpack.c.b16 %v773, %v767
    %v1314 = vpack.c.b16 %v774, %v768
    %v1315 = vpack.c.b16 %v775, %v769
    %v1316 = vpack.c.b16 %v782, %v776
    %v1317 = vpack.c.b16 %v783, %v777
    %v1318 = vpack.c.b16 %v784, %v778
    %v1319 = vpack.c.b16 %v785, %v779
    %v1320 = vpack.c.b16 %v786, %v780
    %v1321 = vpack.c.b16 %v787, %v781
    %v1322 = vpack.c.b16 %v794, %v788
    %v1323 = vpack.c.b16 %v795, %v789
    %v1324 = vpack.c.b16 %v796, %v790
    %v1325 = vpack.c.b16 %v797, %v791
    %v1326 = vpack.c.b16 %v798, %v792
    %v1327 = vpack.c.b16 %v799, %v793
    %v1328 = vpack.c.b16 %v806, %v800
    %v1329 = vpack.c.b16 %v807, %v801
    %v1330 = vpack.c.b16 %v808, %v802
    %v1331 = vpack.c.b16 %v809, %v803
    %v1332 = vpack.c.b16 %v810, %v804
    %v1333 = vpack.c.b16 %v811, %v805
    %v1334 = vpack.c.b16 %v818, %v812
    %v1335 = vpack.c.b16 %v819, %v813
    %v1336 = vpack.c.b16 %v820, %v814
    %v1337 = vpack.c.b16 %v821, %v815
    %v1338 = vpack.c.b16 %v822, %v816
    %v1339 = vpack.c.b16 %v823, %v817
    %v1340 = vpack.c.b16 %v830, %v824
    %v1341 = vpack.c.b16 %v831, %v825
    %v1342 = vpack.c.b16 %v832, %v826
    %v1343 = vpack.c.b16 %v833, %v827
    %v1344 = vpack.c.b16 %v834, %v828
    %v1345 = vpack.c.b16 %v835, %v829
    %v1346 = vpack.c.b16 %v842, %v836
    %v1347 = vpack.c.b16 %v843, %v837
    %v1348 = vpack.c.b16 %v844, %v838
    %v1349 = vpack.c.b16 %v845, %v839
    %v1350 = vpack.c.b16 %v846, %v840
    %v1351 = vpack.c.b16 %v847, %v841
    %v1352 = vpack.c.b16 %v854, %v848
    %v1353 = vpack.c.b16 %v855, %v849
    %v1354 = vpack.c.b16 %v856, %v850
    %v1355 = vpack.c.b16 %v857, %v851
    %v1356 = vpack.c.b16 %v858, %v852
    %v1357 = vpack.c.b16 %v859, %v853
    %v1358 = vpack.c.b16 %v866, %v860
    %v1359 = vpack.c.b16 %v867, %v861
    %v1360 = vpack.c.b16 %v868, %v862
    %v1361 = vpack.c.b16 %v869, %v863
    %v1362 = vpack.c.b16 %v870, %v864
    %v1363 = vpack.c.b16 %v871, %v865
    %v1364 = vpack.c.b16 %v878, %v872
    %v1365 = vpack.c.b16 %v879, %v873
    %v1366 = vpack.c.b16 %v880, %v874
    %v1367 = vpack.c.b16 %v881, %v875
    %v1368 = vpack.c.b16 %v882, %v876
    %v1369 = vpack.c.b16 %v883, %v877
    %v1370 = vpack.c.b16 %v890, %v884
    %v1371 = vpack.c.b16 %v891, %v885
    %v1372 = vpack.c.b16 %v892, %v886
    %v1373 = vpack.c.b16 %v893, %v887
    %v1374 = vpack.c.b16 %v894, %v888
    %v1375 = vpack.c.b16 %v895, %v889
    %v1376 = vpack.c.b16 %v902, %v896
    %v1377 = vpack.c.b16 %v903, %v897
    %v1378 = vpack.c.b16 %v904, %v898
    %v1379 = vpack.c.b16 %v905, %v899
    %v1380 = vpack.c.b16 %v906, %v900
    %v1381 = vpack.c.b16 %v907, %v901
    %v1382 = vpack.c.b16 %v914, %v908
    %v1383 = vpack.c.b16 %v915, %v909
    %v1384 = vpack.c.b16 %v916, %v910
    %v1385 = vpack.c.b16 %v917, %v911
    %v1386 = vpack.c.b16 %v918, %v912
    %v1387 = vpack.c.b16 %v919, %v913
    %v1388 = vpack.c.b16 %v926, %v920
    %v1389 = vpack.c.b16 %v927, %v921
    %v1390 = vpack.c.b16 %v928, %v922
    %v1391 = vpack.c.b16 %v929, %v923
    %v1392 = vpack.c.b16 %v930, %v924
    %v1393 = vpack.c.b16 %v931, %v925
    %v1394 = vpack.c.b16 %v938, %v932
    %v1395 = vpack.c.b16 %v939, %v933
    %v1396 = vpack.c.b16 %v940, %v934
    %v1397 = vpack.c.b16 %v941, %v935
    %v1398 = vpack.c.b16 %v942, %v936
    %v1399 = vpack.c.b16 %v943, %v937
    %v1400 = vpack.c.b16 %v950, %v944
    %v1401 = vpack.c.b16 %v951, %v945
    %v1402 = vpack.c.b16 %v952, %v946
    %v1403 = vpack.c.b16 %v953, %v947
    %v1404 = vpack.c.b16 %v954, %v948
    %v1405 = vpack.c.b16 %v955, %v949
    %v1406 = vpack.c.b16 %v962, %v956
    %v1407 = vpack.c.b16 %v963, %v957
    %v1408 = vpack.c.b16 %v964, %v958
    %v1409 = vpack.c.b16 %v965, %v959
    %v1410 = vpack.c.b16 %v966, %v960
    %v1411 = vpack.c.b16 %v967, %v961
    %v1412 = vpack.c.b16 %v974, %v968
    %v1413 = vpack.c.b16 %v975, %v969
    %v1414 = vpack.c.b16 %v976, %v970
    %v1415 = vpack.c.b16 %v977, %v971
    %v1416 = vpack.c.b16 %v978, %v972
    %v1417 = vpack.c.b16 %v979, %v973
    %v1418 = vpack.c.b16 %v986, %v980
    %v1419 = vpack.c.b16 %v987, %v981
    %v1420 = vpack.c.b16 %v988, %v982
    %v1421 = vpack.c.b16 %v989, %v983
    %v1422 = vpack.c.b16 %v990, %v984
    %v1423 = vpack.c.b16 %v991, %v985
    %v1424 = vpack.c.b16 %v998, %v992
    %v1425 = vpack.c.b16 %v999, %v993
    %v1426 = vpack.c.b16 %v1000, %v994
    %v1427 = vpack.c.b16 %v1001, %v995
    %v1428 = vpack.c.b16 %v1002, %v996
    %v1429 = vpack.c.b16 %v1003, %v997
    %v1430 = vpack.c.b16 %v1010, %v1004
    %v1431 = vpack.c.b16 %v1011, %v1005
    %v1432 = vpack.c.b16 %v1012, %v1006
    %v1433 = vpack.c.b16 %v1013, %v1007
    %v1434 = vpack.c.b16 %v1014, %v1008
    %v1435 = vpack.c.b16 %v1015, %v1009
    %v1436 = vpack.c.b16 %v1022, %v1016
    %v1437 = vpack.c.b16 %v1023, %v1017
    %v1438 = vpack.c.b16 %v1024, %v1018
    %v1439 = vpack.c.b16 %v1025, %v1019
    %v1440 = vpack.c.b16 %v1026, %v1020
    %v1441 = vpack.c.b16 %v1027, %v1021
    %v1442 = vpack.c.b16 %v1034, %v1028
    %v1443 = vpack.c.b16 %v1035, %v1029
    %v1444 = vpack.c.b16 %v1036, %v1030
    %v1445 = vpack.c.b16 %v1037, %v1031
    %v1446 = vpack.c.b16 %v1038, %v1032
    %v1447 = vpack.c.b16 %v1039, %v1033
    %v1448 = vpack.c.b16 %v1046, %v1040
    %v1449 = vpack.c.b16 %v1047, %v1041
    %v1450 = vpack.c.b16 %v1048, %v1042
    %v1451 = vpack.c.b16 %v1049, %v1043
    %v1452 = vpack.c.b16 %v1050, %v1044
    %v1453 = vpack.c.b16 %v1051, %v1045
    %v1454 = vpack.c.b16 %v1058, %v1052
    %v1455 = vpack.c.b16 %v1059, %v1053
    %v1456 = vpack.c.b16 %v1060, %v1054
    %v1457 = vpack.c.b16 %v1061, %v1055
    %v1458 = vpack.c.b16 %v1062, %v1056
    %v1459 = vpack.c.b16 %v1063, %v1057
    %v1460 = vpack.c.b16 %v1070, %v1064
    %v1461 = vpack.c.b16 %v1071, %v1065
    %v1462 = vpack.c.b16 %v1072, %v1066
    %v1463 = vpack.c.b16 %v1073, %v1067
    %v1464 = vpack.c.b16 %v1074, %v1068
    %v1465 = vpack.c.b16 %v1075, %v1069
    %v1466 = vpack.c.b16 %v1082, %v1076
    %v1467 = vpack.c.b16 %v1083, %v1077
    %v1468 = vpack.c.b16 %v1084, %v1078
    %v1469 = vpack.c.b16 %v1085, %v1079
    %v1470 = vpack.c.b16 %v1086, %v1080
    %v1471 = vpack.c.b16 %v1087, %v1081
    %v1472 = vpack.c.b16 %v1094, %v1088
    %v1473 = vpack.c.b16 %v1095, %v1089
    %v1474 = vpack.c.b16 %v1096, %v1090
    %v1475 = vpack.c.b16 %v1097, %v1091
    %v1476 = vpack.c.b16 %v1098, %v1092
    %v1477 = vpack.c.b16 %v1099, %v1093
    %v1478 = vpack.c.b16 %v1106, %v1100
    %v1479 = vpack.c.b16 %v1107, %v1101
    %v1480 = vpack.c.b16 %v1108, %v1102
    %v1481 = vpack.c.b16 %v1109, %v1103
    %v1482 = vpack.c.b16 %v1110, %v1104
    %v1483 = vpack.c.b16 %v1111, %v1105
    %v1484 = vpack.c.b16 %v1118, %v1112
    %v1485 = vpack.c.b16 %v1119, %v1113
    %v1486 = vpack.c.b16 %v1120, %v1114
    %v1487 = vpack.c.b16 %v1121, %v1115
    %v1488 = vpack.c.b16 %v1122, %v1116
    %v1489 = vpack.c.b16 %v1123, %v1117
    %v1490 = vpack.c.b16 %v1130, %v1124
    %v1491 = vpack.c.b16 %v1131, %v1125
    %v1492 = vpack.c.b16 %v1132, %v1126
    %v1493 = vpack.c.b16 %v1133, %v1127
    %v1494 = vpack.c.b16 %v1134, %v1128
    %v1495 = vpack.c.b16 %v1135, %v1129
    %v1496 = vpack.c.b16 %v1142, %v1136
    %v1497 = vpack.c.b16 %v1143, %v1137
    %v1498 = vpack.c.b16 %v1144, %v1138
    %v1499 = vpack.c.b16 %v1145, %v1139
    %v1500 = vpack.c.b16 %v1146, %v1140
    %v1501 = vpack.c.b16 %v1147, %v1141
    %v1502 = vpack.c.b16 %v1154, %v1148
    %v1503 = vpack.c.b16 %v1155, %v1149
    %v1504 = vpack.c.b16 %v1156, %v1150
    %v1505 = vpack.c.b16 %v1157, %v1151
    %v1506 = vpack.c.b16 %v1158, %v1152
    %v1507 = vpack.c.b16 %v1159, %v1153
    %v1508 = vpack.c.b16 %v1166, %v1160
    %v1509 = vpack.c.b16 %v1167, %v1161
    %v1510 = vpack.c.b16 %v1168, %v1162
    %v1511 = vpack.c.b16 %v1169, %v1163
    %v1512 = vpack.c.b16 %v1170, %v1164
    %v1513 = vpack.c.b16 %v1171, %v1165
    %v1514 = vpack.c.b16 %v1178, %v1172
    %v1515 = vpack.c.b16 %v1179, %v1173
    %v1516 = vpack.c.b16 %v1180, %v1174
    %v1517 = vpack.c.b16 %v1181, %v1175
    %v1518 = vpack.c.b16 %v1182, %v1176
    %v1519 = vpack.c.b16 %v1183, %v1177
    %v1520 = vpack.c.b16 %v1190, %v1184
    %v1521 = vpack.c.b16 %v1191, %v1185
    %v1522 = vpack.c.b16 %v1192, %v1186
    %v1523 = vpack.c.b16 %v1193, %v1187
    %v1524 = vpack.c.b16 %v1194, %v1188
    %v1525 = vpack.c.b16 %v1195, %v1189
    %v1526 = vpack.c.b16 %v1202, %v1196
    %v1527 = vpack.c.b16 %v1203, %v1197
    %v1528 = vpack.c.b16 %v1204, %v1198
    %v1529 = vpack.c.b16 %v1205, %v1199
    %v1530 = vpack.c.b16 %v1206, %v1200
    %v1531 = vpack.c.b16 %v1207, %v1201
    %v1532 = vpack.c.b16 %v1214, %v1208
    %v1533 = vpack.c.b16 %v1215, %v1209
    %v1534 = vpack.c.b16 %v1216, %v1210
    %v1535 = vpack.c.b16 %v1217, %v1211
    %v1536 = vpack.c.b16 %v1218, %v1212
    %v1537 = vpack.c.b16 %v1219, %v1213
    %v1538 = vpack.c.b16 %v1226, %v1220
    %v1539 = vpack.c.b16 %v1227, %v1221
    %v1540 = vpack.c.b16 %v1228, %v1222
    %v1541 = vpack.c.b16 %v1229, %v1223
    %v1542 = vpack.c.b16 %v1230, %v1224
    %v1543 = vpack.c.b16 %v1231, %v1225
    %v1544 = vpack.c.b16 %v1238, %v1232
    %v1545 = vpack.c.b16 %v1239, %v1233
    %v1546 = vpack.c.b16 %v1240, %v1234
    %v1547 = vpack.c.b16 %v1241, %v1235
    %v1548 = vpack.c.b16 %v1242, %v1236
    %v1549 = vpack.c.b16 %v1243, %v1237
    %v1550 = vpack.c.b16 %v1250, %v1244
    %v1551 = vpack.c.b16 %v1251, %v1245
    %v1552 = vpack.c.b16 %v1252, %v1246
    %v1553 = vpack.c.b16 %v1253, %v1247
    %v1554 = vpack.c.b16 %v1254, %v1248
    %v1555 = vpack.c.b16 %v1255, %v1249
    %v1556 = vpack.c.b16 %v1262, %v1256
    %v1557 = vpack.c.b16 %v1263, %v1257
    %v1558 = vpack.c.b16 %v1264, %v1258
    %v1559 = vpack.c.b16 %v1265, %v1259
    %v1560 = vpack.c.b16 %v1266, %v1260
    %v1561 = vpack.c.b16 %v1267, %v1261
    %v1562 = vpack.c.b16 %v1274, %v1268
    %v1563 = vpack.c.b16 %v1275, %v1269
    %v1564 = vpack.c.b16 %v1276, %v1270
    %v1565 = vpack.c.b16 %v1277, %v1271
    %v1566 = vpack.c.b16 %v1278, %v1272
    %v1567 = vpack.c.b16 %v1279, %v1273
    %1856 = vmatprep.subr.bf16.mxu0 %v1323
    %1857 = vmatpush1.bf16.msra.mxu0 %v1322
    %1858 = vmatprep.subr.bf16.mxu0 %v1317
    %1859 = vmatpush1.bf16.msra.mxu0 %v1316
    %1860 = vmatprep.subr.bf16.mxu0 %v1311
    %1861 = vmatpush1.bf16.msra.mxu0 %v1310
    %1862 = vmatprep.subr.bf16.mxu0 %v1305
    %1863 = vmatpush1.bf16.msra.mxu0 %v1304
    %1864 = vmatprep.subr.bf16.mxu0 %v1299
    %1865 = vmatpush1.bf16.msra.mxu0 %v1298
    %1866 = vmatprep.subr.bf16.mxu0 %v1293
    %1867 = vmatpush1.bf16.msra.mxu0 %v1292
    %1868 = vmatprep.subr.bf16.mxu0 %v1287
    %1869 = vmatpush1.bf16.msra.mxu0 %v1286
    %1870 = vmatprep.subr.bf16.mxu0 %v1281
    %1871 = vmatpush1.bf16.msra.mxu0 %v1280
    %1872 = vmatprep.subr.bf16.mxu0 %v1371
    %1873 = vmatpush2.bf16.msra.mxu0 %v1370
    %1874 = vmatprep.subr.bf16.mxu0 %v1365
    %1875 = vmatpush2.bf16.msra.mxu0 %v1364
    %1876 = vmatprep.subr.bf16.mxu0 %v1359
    %1877 = vmatpush2.bf16.msra.mxu0 %v1358
    %1878 = vmatprep.subr.bf16.mxu0 %v1353
    %1879 = vmatpush2.bf16.msra.mxu0 %v1352
    %1880 = vmatprep.subr.bf16.mxu0 %v1347
    %1881 = vmatpush2.bf16.msra.mxu0 %v1346
    %1882 = vmatprep.subr.bf16.mxu0 %v1341
    %1883 = vmatpush2.bf16.msra.mxu0 %v1340
    %1884 = vmatprep.subr.bf16.mxu0 %v1335
    %1885 = vmatpush2.bf16.msra.mxu0 %v1334
    %1886 = vmatprep.subr.bf16.mxu0 %v1329
    %1887 = vmatpush2.bf16.msra.mxu0 %v1328
    %1888 = vmatprep.mubr.bf16.mxu0 %v92
    %1889 = vmatmul.mubr.bf16.gmra.mxu0 %v91
    %v1890 = vpop.f32.mrf.mxu0
    %v1891 = vadd.f32 %v389, %v1890
    %v1892 = vpop.f32.mrf.mxu0
    %v1893 = vadd.f32 %v393, %v1892
    %v1894 = vpop.f32.mrf.mxu0
    %v1895 = vpop.f32.mrf.mxu0
    %1896 = vdwg.mxu0
    %1897 = vmatprep.subr.bf16.mxu0 %v1419
    %1898 = vmatpush1.bf16.msra.mxu0 %v1418
    %1899 = vmatprep.subr.bf16.mxu0 %v1413
    %1900 = vmatpush1.bf16.msra.mxu0 %v1412
    %1901 = vmatprep.subr.bf16.mxu0 %v1407
    %1902 = vmatpush1.bf16.msra.mxu0 %v1406
    %1903 = vmatprep.subr.bf16.mxu0 %v1401
    %1904 = vmatpush1.bf16.msra.mxu0 %v1400
    %1905 = vmatprep.subr.bf16.mxu0 %v1395
    %1906 = vmatpush1.bf16.msra.mxu0 %v1394
    %1907 = vmatprep.subr.bf16.mxu0 %v1389
    %1908 = vmatpush1.bf16.msra.mxu0 %v1388
    %1909 = vmatprep.subr.bf16.mxu0 %v1383
    %1910 = vmatpush1.bf16.msra.mxu0 %v1382
    %1911 = vmatprep.subr.bf16.mxu0 %v1377
    %1912 = vmatpush1.bf16.msra.mxu0 %v1376
    %1913 = vmatprep.subr.bf16.mxu0 %v1467
    %1914 = vmatpush2.bf16.msra.mxu0 %v1466
    %1915 = vmatprep.subr.bf16.mxu0 %v1461
    %1916 = vmatpush2.bf16.msra.mxu0 %v1460
    %1917 = vmatprep.subr.bf16.mxu0 %v1455
    %1918 = vmatpush2.bf16.msra.mxu0 %v1454
    %1919 = vmatprep.subr.bf16.mxu0 %v1449
    %1920 = vmatpush2.bf16.msra.mxu0 %v1448
    %1921 = vmatprep.subr.bf16.mxu0 %v1443
    %1922 = vmatpush2.bf16.msra.mxu0 %v1442
    %1923 = vmatprep.subr.bf16.mxu0 %v1437
    %1924 = vmatpush2.bf16.msra.mxu0 %v1436
    %1925 = vmatprep.subr.bf16.mxu0 %v1431
    %1926 = vmatpush2.bf16.msra.mxu0 %v1430
    %1927 = vmatprep.subr.bf16.mxu0 %v1425
    %1928 = vmatpush2.bf16.msra.mxu0 %v1424
    %1929 = vmatprep.mubr.bf16.mxu0 %v94
    %1930 = vmatmul.mubr.bf16.gmra.mxu0 %v93
    %v1931 = vpop.f32.mrf.mxu0
    %v1932 = vadd.f32 %v1891, %v1931
    %v1933 = vpop.f32.mrf.mxu0
    %v1934 = vadd.f32 %v1893, %v1933
    %v1935 = vpop.f32.mrf.mxu0
    %v1936 = vpop.f32.mrf.mxu0
    %1937 = vdwg.mxu0
    %1938 = vmatprep.subr.bf16.mxu0 %v1515
    %1939 = vmatpush1.bf16.msra.mxu0 %v1514
    %1940 = vmatprep.subr.bf16.mxu0 %v1509
    %1941 = vmatpush1.bf16.msra.mxu0 %v1508
    %1942 = vmatprep.subr.bf16.mxu0 %v1503
    %1943 = vmatpush1.bf16.msra.mxu0 %v1502
    %1944 = vmatprep.subr.bf16.mxu0 %v1497
    %1945 = vmatpush1.bf16.msra.mxu0 %v1496
    %1946 = vmatprep.subr.bf16.mxu0 %v1491
    %1947 = vmatpush1.bf16.msra.mxu0 %v1490
    %1948 = vmatprep.subr.bf16.mxu0 %v1485
    %1949 = vmatpush1.bf16.msra.mxu0 %v1484
    %1950 = vmatprep.subr.bf16.mxu0 %v1479
    %1951 = vmatpush1.bf16.msra.mxu0 %v1478
    %1952 = vmatprep.subr.bf16.mxu0 %v1473
    %1953 = vmatpush1.bf16.msra.mxu0 %v1472
    %1954 = vmatprep.subr.bf16.mxu0 %v1563
    %1955 = vmatpush2.bf16.msra.mxu0 %v1562
    %1956 = vmatprep.subr.bf16.mxu0 %v1557
    %1957 = vmatpush2.bf16.msra.mxu0 %v1556
    %1958 = vmatprep.subr.bf16.mxu0 %v1551
    %1959 = vmatpush2.bf16.msra.mxu0 %v1550
    %1960 = vmatprep.subr.bf16.mxu0 %v1545
    %1961 = vmatpush2.bf16.msra.mxu0 %v1544
    %1962 = vmatprep.subr.bf16.mxu0 %v1539
    %1963 = vmatpush2.bf16.msra.mxu0 %v1538
    %1964 = vmatprep.subr.bf16.mxu0 %v1533
    %1965 = vmatpush2.bf16.msra.mxu0 %v1532
    %1966 = vmatprep.subr.bf16.mxu0 %v1527
    %1967 = vmatpush2.bf16.msra.mxu0 %v1526
    %1968 = vmatprep.subr.bf16.mxu0 %v1521
    %1969 = vmatpush2.bf16.msra.mxu0 %v1520
    %1970 = vmatprep.mubr.bf16.mxu0 %v96
    %1971 = vmatmul.mubr.bf16.gmra.mxu0 %v95
    %v1972 = vpop.f32.mrf.mxu0
    %v1973 = vadd.f32 %v1932, %v1972
    %v1974 = vpop.f32.mrf.mxu0
    %v1975 = vadd.f32 %v1934, %v1974
    %v1976 = vpop.f32.mrf.mxu0
    %v1977 = vpop.f32.mrf.mxu0
    %1978 = vdwg.mxu0
    %1979 = vmatprep.subr.bf16.mxu0 %v1325
    %1980 = vmatpush1.bf16.msra.mxu0 %v1324
    %1981 = vmatprep.subr.bf16.mxu0 %v1319
    %1982 = vmatpush1.bf16.msra.mxu0 %v1318
    %1983 = vmatprep.subr.bf16.mxu0 %v1313
    %1984 = vmatpush1.bf16.msra.mxu0 %v1312
    %1985 = vmatprep.subr.bf16.mxu0 %v1307
    %1986 = vmatpush1.bf16.msra.mxu0 %v1306
    %1987 = vmatprep.subr.bf16.mxu0 %v1301
    %1988 = vmatpush1.bf16.msra.mxu0 %v1300
    %1989 = vmatprep.subr.bf16.mxu0 %v1295
    %1990 = vmatpush1.bf16.msra.mxu0 %v1294
    %1991 = vmatprep.subr.bf16.mxu0 %v1289
    %1992 = vmatpush1.bf16.msra.mxu0 %v1288
    %1993 = vmatprep.subr.bf16.mxu0 %v1283
    %1994 = vmatpush1.bf16.msra.mxu0 %v1282
    %1995 = vmatprep.subr.bf16.mxu0 %v1373
    %1996 = vmatpush2.bf16.msra.mxu0 %v1372
    %1997 = vmatprep.subr.bf16.mxu0 %v1367
    %1998 = vmatpush2.bf16.msra.mxu0 %v1366
    %1999 = vmatprep.subr.bf16.mxu0 %v1361
    %2000 = vmatpush2.bf16.msra.mxu0 %v1360
    %2001 = vmatprep.subr.bf16.mxu0 %v1355
    %2002 = vmatpush2.bf16.msra.mxu0 %v1354
    %2003 = vmatprep.subr.bf16.mxu0 %v1349
    %2004 = vmatpush2.bf16.msra.mxu0 %v1348
    %2005 = vmatprep.subr.bf16.mxu0 %v1343
    %2006 = vmatpush2.bf16.msra.mxu0 %v1342
    %2007 = vmatprep.subr.bf16.mxu0 %v1337
    %2008 = vmatpush2.bf16.msra.mxu0 %v1336
    %2009 = vmatprep.subr.bf16.mxu0 %v1331
    %2010 = vmatpush2.bf16.msra.mxu0 %v1330
    %2011 = vmatprep.mubr.bf16.mxu0 %v92
    %2012 = vmatmul.mubr.bf16.gmra.mxu0 %v91
    %v2013 = vpop.f32.mrf.mxu0
    %v2014 = vadd.f32 %v397, %v2013
    %v2015 = vpop.f32.mrf.mxu0
    %v2016 = vadd.f32 %v401, %v2015
    %v2017 = vpop.f32.mrf.mxu0
    %v2018 = vpop.f32.mrf.mxu0
    %2019 = vdwg.mxu0
    %2020 = vmatprep.subr.bf16.mxu0 %v1421
    %2021 = vmatpush1.bf16.msra.mxu0 %v1420
    %2022 = vmatprep.subr.bf16.mxu0 %v1415
    %2023 = vmatpush1.bf16.msra.mxu0 %v1414
    %2024 = vmatprep.subr.bf16.mxu0 %v1409
    %2025 = vmatpush1.bf16.msra.mxu0 %v1408
    %2026 = vmatprep.subr.bf16.mxu0 %v1403
    %2027 = vmatpush1.bf16.msra.mxu0 %v1402
    %2028 = vmatprep.subr.bf16.mxu0 %v1397
    %2029 = vmatpush1.bf16.msra.mxu0 %v1396
    %2030 = vmatprep.subr.bf16.mxu0 %v1391
    %2031 = vmatpush1.bf16.msra.mxu0 %v1390
    %2032 = vmatprep.subr.bf16.mxu0 %v1385
    %2033 = vmatpush1.bf16.msra.mxu0 %v1384
    %2034 = vmatprep.subr.bf16.mxu0 %v1379
    %2035 = vmatpush1.bf16.msra.mxu0 %v1378
    %2036 = vmatprep.subr.bf16.mxu0 %v1469
    %2037 = vmatpush2.bf16.msra.mxu0 %v1468
    %2038 = vmatprep.subr.bf16.mxu0 %v1463
    %2039 = vmatpush2.bf16.msra.mxu0 %v1462
    %2040 = vmatprep.subr.bf16.mxu0 %v1457
    %2041 = vmatpush2.bf16.msra.mxu0 %v1456
    %2042 = vmatprep.subr.bf16.mxu0 %v1451
    %2043 = vmatpush2.bf16.msra.mxu0 %v1450
    %2044 = vmatprep.subr.bf16.mxu0 %v1445
    %2045 = vmatpush2.bf16.msra.mxu0 %v1444
    %2046 = vmatprep.subr.bf16.mxu0 %v1439
    %2047 = vmatpush2.bf16.msra.mxu0 %v1438
    %2048 = vmatprep.subr.bf16.mxu0 %v1433
    %2049 = vmatpush2.bf16.msra.mxu0 %v1432
    %2050 = vmatprep.subr.bf16.mxu0 %v1427
    %2051 = vmatpush2.bf16.msra.mxu0 %v1426
    %2052 = vmatprep.mubr.bf16.mxu0 %v94
    %2053 = vmatmul.mubr.bf16.gmra.mxu0 %v93
    %v2054 = vpop.f32.mrf.mxu0
    %v2055 = vadd.f32 %v2014, %v2054
    %v2056 = vpop.f32.mrf.mxu0
    %v2057 = vadd.f32 %v2016, %v2056
    %v2058 = vpop.f32.mrf.mxu0
    %v2059 = vpop.f32.mrf.mxu0
    %2060 = vdwg.mxu0
    %2061 = vmatprep.subr.bf16.mxu0 %v1517
    %2062 = vmatpush1.bf16.msra.mxu0 %v1516
    %2063 = vmatprep.subr.bf16.mxu0 %v1511
    %2064 = vmatpush1.bf16.msra.mxu0 %v1510
    %2065 = vmatprep.subr.bf16.mxu0 %v1505
    %2066 = vmatpush1.bf16.msra.mxu0 %v1504
    %2067 = vmatprep.subr.bf16.mxu0 %v1499
    %2068 = vmatpush1.bf16.msra.mxu0 %v1498
    %2069 = vmatprep.subr.bf16.mxu0 %v1493
    %2070 = vmatpush1.bf16.msra.mxu0 %v1492
    %2071 = vmatprep.subr.bf16.mxu0 %v1487
    %2072 = vmatpush1.bf16.msra.mxu0 %v1486
    %2073 = vmatprep.subr.bf16.mxu0 %v1481
    %2074 = vmatpush1.bf16.msra.mxu0 %v1480
    %2075 = vmatprep.subr.bf16.mxu0 %v1475
    %2076 = vmatpush1.bf16.msra.mxu0 %v1474
    %2077 = vmatprep.subr.bf16.mxu0 %v1565
    %2078 = vmatpush2.bf16.msra.mxu0 %v1564
    %2079 = vmatprep.subr.bf16.mxu0 %v1559
    %2080 = vmatpush2.bf16.msra.mxu0 %v1558
    %2081 = vmatprep.subr.bf16.mxu0 %v1553
    %2082 = vmatpush2.bf16.msra.mxu0 %v1552
    %2083 = vmatprep.subr.bf16.mxu0 %v1547
    %2084 = vmatpush2.bf16.msra.mxu0 %v1546
    %2085 = vmatprep.subr.bf16.mxu0 %v1541
    %2086 = vmatpush2.bf16.msra.mxu0 %v1540
    %2087 = vmatprep.subr.bf16.mxu0 %v1535
    %2088 = vmatpush2.bf16.msra.mxu0 %v1534
    %2089 = vmatprep.subr.bf16.mxu0 %v1529
    %2090 = vmatpush2.bf16.msra.mxu0 %v1528
    %2091 = vmatprep.subr.bf16.mxu0 %v1523
    %2092 = vmatpush2.bf16.msra.mxu0 %v1522
    %2093 = vmatprep.mubr.bf16.mxu0 %v96
    %2094 = vmatmul.mubr.bf16.gmra.mxu0 %v95
    %v2095 = vpop.f32.mrf.mxu0
    %v2096 = vadd.f32 %v2055, %v2095
    %v2097 = vpop.f32.mrf.mxu0
    %v2098 = vadd.f32 %v2057, %v2097
    %v2099 = vpop.f32.mrf.mxu0
    %v2100 = vpop.f32.mrf.mxu0
    %2101 = vdwg.mxu0
    %2102 = vmatprep.subr.bf16.mxu0 %v1327
    %2103 = vmatpush1.bf16.msra.mxu0 %v1326
    %2104 = vmatprep.subr.bf16.mxu0 %v1321
    %2105 = vmatpush1.bf16.msra.mxu0 %v1320
    %2106 = vmatprep.subr.bf16.mxu0 %v1315
    %2107 = vmatpush1.bf16.msra.mxu0 %v1314
    %2108 = vmatprep.subr.bf16.mxu0 %v1309
    %2109 = vmatpush1.bf16.msra.mxu0 %v1308
    %2110 = vmatprep.subr.bf16.mxu0 %v1303
    %2111 = vmatpush1.bf16.msra.mxu0 %v1302
    %2112 = vmatprep.subr.bf16.mxu0 %v1297
    %2113 = vmatpush1.bf16.msra.mxu0 %v1296
    %2114 = vmatprep.subr.bf16.mxu0 %v1291
    %2115 = vmatpush1.bf16.msra.mxu0 %v1290
    %2116 = vmatprep.subr.bf16.mxu0 %v1285
    %2117 = vmatpush1.bf16.msra.mxu0 %v1284
    %2118 = vmatprep.subr.bf16.mxu0 %v1375
    %2119 = vmatpush2.bf16.msra.mxu0 %v1374
    %2120 = vmatprep.subr.bf16.mxu0 %v1369
    %2121 = vmatpush2.bf16.msra.mxu0 %v1368
    %2122 = vmatprep.subr.bf16.mxu0 %v1363
    %2123 = vmatpush2.bf16.msra.mxu0 %v1362
    %2124 = vmatprep.subr.bf16.mxu0 %v1357
    %2125 = vmatpush2.bf16.msra.mxu0 %v1356
    %2126 = vmatprep.subr.bf16.mxu0 %v1351
    %2127 = vmatpush2.bf16.msra.mxu0 %v1350
    %2128 = vmatprep.subr.bf16.mxu0 %v1345
    %2129 = vmatpush2.bf16.msra.mxu0 %v1344
    %2130 = vmatprep.subr.bf16.mxu0 %v1339
    %2131 = vmatpush2.bf16.msra.mxu0 %v1338
    %2132 = vmatprep.subr.bf16.mxu0 %v1333
    %2133 = vmatpush2.bf16.msra.mxu0 %v1332
    %2134 = vmatprep.mubr.bf16.mxu0 %v92
    %2135 = vmatmul.mubr.bf16.gmra.mxu0 %v91
    %v2136 = vpop.f32.mrf.mxu0
    %v2137 = vadd.f32 %v405, %v2136
    %v2138 = vpop.f32.mrf.mxu0
    %v2139 = vadd.f32 %v409, %v2138
    %v2140 = vpop.f32.mrf.mxu0
    %v2141 = vpop.f32.mrf.mxu0
    %2142 = vdwg.mxu0
    %2143 = vmatprep.subr.bf16.mxu0 %v1423
    %2144 = vmatpush1.bf16.msra.mxu0 %v1422
    %2145 = vmatprep.subr.bf16.mxu0 %v1417
    %2146 = vmatpush1.bf16.msra.mxu0 %v1416
    %2147 = vmatprep.subr.bf16.mxu0 %v1411
    %2148 = vmatpush1.bf16.msra.mxu0 %v1410
    %2149 = vmatprep.subr.bf16.mxu0 %v1405
    %2150 = vmatpush1.bf16.msra.mxu0 %v1404
    %2151 = vmatprep.subr.bf16.mxu0 %v1399
    %2152 = vmatpush1.bf16.msra.mxu0 %v1398
    %2153 = vmatprep.subr.bf16.mxu0 %v1393
    %2154 = vmatpush1.bf16.msra.mxu0 %v1392
    %2155 = vmatprep.subr.bf16.mxu0 %v1387
    %2156 = vmatpush1.bf16.msra.mxu0 %v1386
    %2157 = vmatprep.subr.bf16.mxu0 %v1381
    %2158 = vmatpush1.bf16.msra.mxu0 %v1380
    %2159 = vmatprep.subr.bf16.mxu0 %v1471
    %2160 = vmatpush2.bf16.msra.mxu0 %v1470
    %2161 = vmatprep.subr.bf16.mxu0 %v1465
    %2162 = vmatpush2.bf16.msra.mxu0 %v1464
    %2163 = vmatprep.subr.bf16.mxu0 %v1459
    %2164 = vmatpush2.bf16.msra.mxu0 %v1458
    %2165 = vmatprep.subr.bf16.mxu0 %v1453
    %2166 = vmatpush2.bf16.msra.mxu0 %v1452
    %2167 = vmatprep.subr.bf16.mxu0 %v1447
    %2168 = vmatpush2.bf16.msra.mxu0 %v1446
    %2169 = vmatprep.subr.bf16.mxu0 %v1441
    %2170 = vmatpush2.bf16.msra.mxu0 %v1440
    %2171 = vmatprep.subr.bf16.mxu0 %v1435
    %2172 = vmatpush2.bf16.msra.mxu0 %v1434
    %2173 = vmatprep.subr.bf16.mxu0 %v1429
    %2174 = vmatpush2.bf16.msra.mxu0 %v1428
    %2175 = vmatprep.mubr.bf16.mxu0 %v94
    %2176 = vmatmul.mubr.bf16.gmra.mxu0 %v93
    %v2177 = vpop.f32.mrf.mxu0
    %v2178 = vadd.f32 %v2137, %v2177
    %v2179 = vpop.f32.mrf.mxu0
    %v2180 = vadd.f32 %v2139, %v2179
    %v2181 = vpop.f32.mrf.mxu0
    %v2182 = vpop.f32.mrf.mxu0
    %2183 = vdwg.mxu0
    %2184 = vmatprep.subr.bf16.mxu0 %v1519
    %2185 = vmatpush1.bf16.msra.mxu0 %v1518
    %2186 = vmatprep.subr.bf16.mxu0 %v1513
    %2187 = vmatpush1.bf16.msra.mxu0 %v1512
    %2188 = vmatprep.subr.bf16.mxu0 %v1507
    %2189 = vmatpush1.bf16.msra.mxu0 %v1506
    %2190 = vmatprep.subr.bf16.mxu0 %v1501
    %2191 = vmatpush1.bf16.msra.mxu0 %v1500
    %2192 = vmatprep.subr.bf16.mxu0 %v1495
    %2193 = vmatpush1.bf16.msra.mxu0 %v1494
    %2194 = vmatprep.subr.bf16.mxu0 %v1489
    %2195 = vmatpush1.bf16.msra.mxu0 %v1488
    %2196 = vmatprep.subr.bf16.mxu0 %v1483
    %2197 = vmatpush1.bf16.msra.mxu0 %v1482
    %2198 = vmatprep.subr.bf16.mxu0 %v1477
    %2199 = vmatpush1.bf16.msra.mxu0 %v1476
    %2200 = vmatprep.subr.bf16.mxu0 %v1567
    %2201 = vmatpush2.bf16.msra.mxu0 %v1566
    %2202 = vmatprep.subr.bf16.mxu0 %v1561
    %2203 = vmatpush2.bf16.msra.mxu0 %v1560
    %2204 = vmatprep.subr.bf16.mxu0 %v1555
    %2205 = vmatpush2.bf16.msra.mxu0 %v1554
    %2206 = vmatprep.subr.bf16.mxu0 %v1549
    %2207 = vmatpush2.bf16.msra.mxu0 %v1548
    %2208 = vmatprep.subr.bf16.mxu0 %v1543
    %2209 = vmatpush2.bf16.msra.mxu0 %v1542
    %2210 = vmatprep.subr.bf16.mxu0 %v1537
    %2211 = vmatpush2.bf16.msra.mxu0 %v1536
    %2212 = vmatprep.subr.bf16.mxu0 %v1531
    %2213 = vmatpush2.bf16.msra.mxu0 %v1530
    %2214 = vmatprep.subr.bf16.mxu0 %v1525
    %2215 = vmatpush2.bf16.msra.mxu0 %v1524
    %2216 = vmatprep.mubr.bf16.mxu0 %v96
    %2217 = vmatmul.mubr.bf16.gmra.mxu0 %v95
    %v2218 = vpop.f32.mrf.mxu0
    %v2219 = vadd.f32 %v2178, %v2218
    %v2220 = vpop.f32.mrf.mxu0
    %v2221 = vadd.f32 %v2180, %v2220
    %v2222 = vpop.f32.mrf.mxu0
    %v2223 = vpop.f32.mrf.mxu0
    %2224 = vdwg.mxu0
    %v2225 = vtanh.pop %v1973
    %v2226 = vtanh.pop %v1975
    %v2227 = vtanh.pop %v2096
    %v2228 = vtanh.pop %v2098
    %v2229 = vtanh.pop %v2219
    %v2230 = vtanh.pop %v2221
    %v2231 = vpack.c.bf16 %v2225, %v2225
    %v2232 = vpack.c.bf16 %v2226, %v2226
    %v2233 = vpack.c.bf16 %v2227, %v2227
    %v2234 = vpack.c.bf16 %v2228, %v2228
    %v2235 = vpack.c.bf16 %v2229, %v2229
    %v2236 = vpack.c.bf16 %v2230, %v2230
    %v2237 = vld [vmem:[#allocation8] sm:$0xff]
    %v2238 = vld [vmem:[#allocation8 + $0x8] sm:$0xff]
    %v2239 = vld [vmem:[#allocation8 + $0x10] sm:$0xff]
    %v2240 = vld [vmem:[#allocation8 + $0x18] sm:$0xff]
    %v2241 = vld [vmem:[#allocation8 + $0x20] sm:$0xff]
    %v2242 = vld [vmem:[#allocation8 + $0x28] sm:$0xff]
    %v2243 = vld [vmem:[#allocation8 + $0x30] sm:$0xff]
    %v2244 = vld [vmem:[#allocation8 + $0x38] sm:$0xff]
    %v2245 = vld [vmem:[#allocation8 + $0x40] sm:$0xff]
    %v2246 = vld [vmem:[#allocation8 + $0x48] sm:$0xff]
    %v2247 = vld [vmem:[#allocation8 + $0x50] sm:$0xff]
    %v2248 = vld [vmem:[#allocation8 + $0x58] sm:$0xff]
    %v2249 = vld [vmem:[#allocation8 + $0x60] sm:$0xff]
    %v2250 = vld [vmem:[#allocation8 + $0x68] sm:$0xff]
    %v2251 = vld [vmem:[#allocation8 + $0x70] sm:$0xff]
    %v2252 = vld [vmem:[#allocation8 + $0x78] sm:$0xff]
    %v2253 = vld [vmem:[#allocation8 + $0x80] sm:$0xff]
    %v2254 = vld [vmem:[#allocation8 + $0x88] sm:$0xff]
    %v2255 = vld [vmem:[#allocation8 + $0x90] sm:$0xff]
    %v2256 = vld [vmem:[#allocation8 + $0x98] sm:$0xff]
    %v2257 = vld [vmem:[#allocation8 + $0xa0] sm:$0xff]
    %v2258 = vld [vmem:[#allocation8 + $0xa8] sm:$0xff]
    %v2259 = vld [vmem:[#allocation8 + $0xb0] sm:$0xff]
    %v2260 = vld [vmem:[#allocation8 + $0xb8] sm:$0xff]
    %v2261 = vld [vmem:[#allocation8 + $0xc0] sm:$0xff]
    %v2262 = vld [vmem:[#allocation8 + $0xc8] sm:$0xff]
    %v2263 = vld [vmem:[#allocation8 + $0xd0] sm:$0xff]
    %v2264 = vld [vmem:[#allocation8 + $0xd8] sm:$0xff]
    %v2265 = vld [vmem:[#allocation8 + $0xe0] sm:$0xff]
    %v2266 = vld [vmem:[#allocation8 + $0xe8] sm:$0xff]
    %v2267 = vld [vmem:[#allocation8 + $0xf0] sm:$0xff]
    %v2268 = vld [vmem:[#allocation8 + $0xf8] sm:$0xff]
    %v2269 = vld [vmem:[#allocation8 + $0x100] sm:$0xff]
    %v2270 = vld [vmem:[#allocation8 + $0x108] sm:$0xff]
    %v2271 = vld [vmem:[#allocation8 + $0x110] sm:$0xff]
    %v2272 = vld [vmem:[#allocation8 + $0x118] sm:$0xff]
    %v2273 = vld [vmem:[#allocation8 + $0x120] sm:$0xff]
    %v2274 = vld [vmem:[#allocation8 + $0x128] sm:$0xff]
    %v2275 = vld [vmem:[#allocation8 + $0x130] sm:$0xff]
    %v2276 = vld [vmem:[#allocation8 + $0x138] sm:$0xff]
    %v2277 = vld [vmem:[#allocation8 + $0x140] sm:$0xff]
    %v2278 = vld [vmem:[#allocation8 + $0x148] sm:$0xff]
    %v2279 = vld [vmem:[#allocation8 + $0x150] sm:$0xff]
    %v2280 = vld [vmem:[#allocation8 + $0x158] sm:$0xff]
    %v2281 = vld [vmem:[#allocation8 + $0x160] sm:$0xff]
    %v2282 = vld [vmem:[#allocation8 + $0x168] sm:$0xff]
    %v2283 = vld [vmem:[#allocation8 + $0x170] sm:$0xff]
    %v2284 = vld [vmem:[#allocation8 + $0x178] sm:$0xff]
    %v2285 = vld [vmem:[#allocation8 + $0x180] sm:$0xff]
    %v2286 = vld [vmem:[#allocation8 + $0x188] sm:$0xff]
    %v2287 = vld [vmem:[#allocation8 + $0x190] sm:$0xff]
    %v2288 = vld [vmem:[#allocation8 + $0x198] sm:$0xff]
    %v2289 = vld [vmem:[#allocation8 + $0x1a0] sm:$0xff]
    %v2290 = vld [vmem:[#allocation8 + $0x1a8] sm:$0xff]
    %v2291 = vld [vmem:[#allocation8 + $0x1b0] sm:$0xff]
    %v2292 = vld [vmem:[#allocation8 + $0x1b8] sm:$0xff]
    %v2293 = vld [vmem:[#allocation8 + $0x1c0] sm:$0xff]
    %v2294 = vld [vmem:[#allocation8 + $0x1c8] sm:$0xff]
    %v2295 = vld [vmem:[#allocation8 + $0x1d0] sm:$0xff]
    %v2296 = vld [vmem:[#allocation8 + $0x1d8] sm:$0xff]
    %v2297 = vld [vmem:[#allocation8 + $0x1e0] sm:$0xff]
    %v2298 = vld [vmem:[#allocation8 + $0x1e8] sm:$0xff]
    %v2299 = vld [vmem:[#allocation8 + $0x1f0] sm:$0xff]
    %v2300 = vld [vmem:[#allocation8 + $0x1f8] sm:$0xff]
    %v2301 = vld [vmem:[#allocation8 + $0x200] sm:$0xff]
    %v2302 = vld [vmem:[#allocation8 + $0x208] sm:$0xff]
    %v2303 = vld [vmem:[#allocation8 + $0x210] sm:$0xff]
    %v2304 = vld [vmem:[#allocation8 + $0x218] sm:$0xff]
    %v2305 = vld [vmem:[#allocation8 + $0x220] sm:$0xff]
    %v2306 = vld [vmem:[#allocation8 + $0x228] sm:$0xff]
    %v2307 = vld [vmem:[#allocation8 + $0x230] sm:$0xff]
    %v2308 = vld [vmem:[#allocation8 + $0x238] sm:$0xff]
    %v2309 = vld [vmem:[#allocation8 + $0x240] sm:$0xff]
    %v2310 = vld [vmem:[#allocation8 + $0x248] sm:$0xff]
    %v2311 = vld [vmem:[#allocation8 + $0x250] sm:$0xff]
    %v2312 = vld [vmem:[#allocation8 + $0x258] sm:$0xff]
    %v2313 = vld [vmem:[#allocation8 + $0x260] sm:$0xff]
    %v2314 = vld [vmem:[#allocation8 + $0x268] sm:$0xff]
    %v2315 = vld [vmem:[#allocation8 + $0x270] sm:$0xff]
    %v2316 = vld [vmem:[#allocation8 + $0x278] sm:$0xff]
    %v2317 = vld [vmem:[#allocation8 + $0x280] sm:$0xff]
    %v2318 = vld [vmem:[#allocation8 + $0x288] sm:$0xff]
    %v2319 = vld [vmem:[#allocation8 + $0x290] sm:$0xff]
    %v2320 = vld [vmem:[#allocation8 + $0x298] sm:$0xff]
    %v2321 = vld [vmem:[#allocation8 + $0x2a0] sm:$0xff]
    %v2322 = vld [vmem:[#allocation8 + $0x2a8] sm:$0xff]
    %v2323 = vld [vmem:[#allocation8 + $0x2b0] sm:$0xff]
    %v2324 = vld [vmem:[#allocation8 + $0x2b8] sm:$0xff]
    %v2325 = vld [vmem:[#allocation8 + $0x2c0] sm:$0xff]
    %v2326 = vld [vmem:[#allocation8 + $0x2c8] sm:$0xff]
    %v2327 = vld [vmem:[#allocation8 + $0x2d0] sm:$0xff]
    %v2328 = vld [vmem:[#allocation8 + $0x2d8] sm:$0xff]
    %v2329 = vld [vmem:[#allocation8 + $0x2e0] sm:$0xff]
    %v2330 = vld [vmem:[#allocation8 + $0x2e8] sm:$0xff]
    %v2331 = vld [vmem:[#allocation8 + $0x2f0] sm:$0xff]
    %v2332 = vld [vmem:[#allocation8 + $0x2f8] sm:$0xff]
    %v2333 = vld [vmem:[#allocation8 + $0x300] sm:$0xff]
    %v2334 = vld [vmem:[#allocation8 + $0x308] sm:$0xff]
    %v2335 = vld [vmem:[#allocation8 + $0x310] sm:$0xff]
    %v2336 = vld [vmem:[#allocation8 + $0x318] sm:$0xff]
    %v2337 = vld [vmem:[#allocation8 + $0x320] sm:$0xff]
    %v2338 = vld [vmem:[#allocation8 + $0x328] sm:$0xff]
    %v2339 = vld [vmem:[#allocation8 + $0x330] sm:$0xff]
    %v2340 = vld [vmem:[#allocation8 + $0x338] sm:$0xff]
    %v2341 = vld [vmem:[#allocation8 + $0x340] sm:$0xff]
    %v2342 = vld [vmem:[#allocation8 + $0x348] sm:$0xff]
    %v2343 = vld [vmem:[#allocation8 + $0x350] sm:$0xff]
    %v2344 = vld [vmem:[#allocation8 + $0x358] sm:$0xff]
    %v2345 = vld [vmem:[#allocation8 + $0x360] sm:$0xff]
    %v2346 = vld [vmem:[#allocation8 + $0x368] sm:$0xff]
    %v2347 = vld [vmem:[#allocation8 + $0x370] sm:$0xff]
    %v2348 = vld [vmem:[#allocation8 + $0x378] sm:$0xff]
    %v2349 = vld [vmem:[#allocation8 + $0x380] sm:$0xff]
    %v2350 = vld [vmem:[#allocation8 + $0x388] sm:$0xff]
    %v2351 = vld [vmem:[#allocation8 + $0x390] sm:$0xff]
    %v2352 = vld [vmem:[#allocation8 + $0x398] sm:$0xff]
    %v2353 = vld [vmem:[#allocation8 + $0x3a0] sm:$0xff]
    %v2354 = vld [vmem:[#allocation8 + $0x3a8] sm:$0xff]
    %v2355 = vld [vmem:[#allocation8 + $0x3b0] sm:$0xff]
    %v2356 = vld [vmem:[#allocation8 + $0x3b8] sm:$0xff]
    %v2357 = vld [vmem:[#allocation8 + $0x3c0] sm:$0xff]
    %v2358 = vld [vmem:[#allocation8 + $0x3c8] sm:$0xff]
    %v2359 = vld [vmem:[#allocation8 + $0x3d0] sm:$0xff]
    %v2360 = vld [vmem:[#allocation8 + $0x3d8] sm:$0xff]
    %v2361 = vld [vmem:[#allocation8 + $0x3e0] sm:$0xff]
    %v2362 = vld [vmem:[#allocation8 + $0x3e8] sm:$0xff]
    %v2363 = vld [vmem:[#allocation8 + $0x3f0] sm:$0xff]
    %v2364 = vld [vmem:[#allocation8 + $0x3f8] sm:$0xff]
    %v2365 = vld [vmem:[#allocation8 + $0x400] sm:$0xff]
    %v2366 = vld [vmem:[#allocation8 + $0x408] sm:$0xff]
    %v2367 = vld [vmem:[#allocation8 + $0x410] sm:$0xff]
    %v2368 = vld [vmem:[#allocation8 + $0x418] sm:$0xff]
    %v2369 = vld [vmem:[#allocation8 + $0x420] sm:$0xff]
    %v2370 = vld [vmem:[#allocation8 + $0x428] sm:$0xff]
    %v2371 = vld [vmem:[#allocation8 + $0x430] sm:$0xff]
    %v2372 = vld [vmem:[#allocation8 + $0x438] sm:$0xff]
    %v2373 = vld [vmem:[#allocation8 + $0x440] sm:$0xff]
    %v2374 = vld [vmem:[#allocation8 + $0x448] sm:$0xff]
    %v2375 = vld [vmem:[#allocation8 + $0x450] sm:$0xff]
    %v2376 = vld [vmem:[#allocation8 + $0x458] sm:$0xff]
    %v2377 = vld [vmem:[#allocation8 + $0x460] sm:$0xff]
    %v2378 = vld [vmem:[#allocation8 + $0x468] sm:$0xff]
    %v2379 = vld [vmem:[#allocation8 + $0x470] sm:$0xff]
    %v2380 = vld [vmem:[#allocation8 + $0x478] sm:$0xff]
    %v2381 = vld [vmem:[#allocation8 + $0x480] sm:$0xff]
    %v2382 = vld [vmem:[#allocation8 + $0x488] sm:$0xff]
    %v2383 = vld [vmem:[#allocation8 + $0x490] sm:$0xff]
    %v2384 = vld [vmem:[#allocation8 + $0x498] sm:$0xff]
    %v2385 = vld [vmem:[#allocation8 + $0x4a0] sm:$0xff]
    %v2386 = vld [vmem:[#allocation8 + $0x4a8] sm:$0xff]
    %v2387 = vld [vmem:[#allocation8 + $0x4b0] sm:$0xff]
    %v2388 = vld [vmem:[#allocation8 + $0x4b8] sm:$0xff]
    %v2389 = vld [vmem:[#allocation8 + $0x4c0] sm:$0xff]
    %v2390 = vld [vmem:[#allocation8 + $0x4c8] sm:$0xff]
    %v2391 = vld [vmem:[#allocation8 + $0x4d0] sm:$0xff]
    %v2392 = vld [vmem:[#allocation8 + $0x4d8] sm:$0xff]
    %v2393 = vld [vmem:[#allocation8 + $0x4e0] sm:$0xff]
    %v2394 = vld [vmem:[#allocation8 + $0x4e8] sm:$0xff]
    %v2395 = vld [vmem:[#allocation8 + $0x4f0] sm:$0xff]
    %v2396 = vld [vmem:[#allocation8 + $0x4f8] sm:$0xff]
    %v2397 = vld [vmem:[#allocation8 + $0x500] sm:$0xff]
    %v2398 = vld [vmem:[#allocation8 + $0x508] sm:$0xff]
    %v2399 = vld [vmem:[#allocation8 + $0x510] sm:$0xff]
    %v2400 = vld [vmem:[#allocation8 + $0x518] sm:$0xff]
    %v2401 = vld [vmem:[#allocation8 + $0x520] sm:$0xff]
    %v2402 = vld [vmem:[#allocation8 + $0x528] sm:$0xff]
    %v2403 = vld [vmem:[#allocation8 + $0x530] sm:$0xff]
    %v2404 = vld [vmem:[#allocation8 + $0x538] sm:$0xff]
    %v2405 = vld [vmem:[#allocation8 + $0x540] sm:$0xff]
    %v2406 = vld [vmem:[#allocation8 + $0x548] sm:$0xff]
    %v2407 = vld [vmem:[#allocation8 + $0x550] sm:$0xff]
    %v2408 = vld [vmem:[#allocation8 + $0x558] sm:$0xff]
    %v2409 = vld [vmem:[#allocation8 + $0x560] sm:$0xff]
    %v2410 = vld [vmem:[#allocation8 + $0x568] sm:$0xff]
    %v2411 = vld [vmem:[#allocation8 + $0x570] sm:$0xff]
    %v2412 = vld [vmem:[#allocation8 + $0x578] sm:$0xff]
    %v2413 = vld [vmem:[#allocation8 + $0x580] sm:$0xff]
    %v2414 = vld [vmem:[#allocation8 + $0x588] sm:$0xff]
    %v2415 = vld [vmem:[#allocation8 + $0x590] sm:$0xff]
    %v2416 = vld [vmem:[#allocation8 + $0x598] sm:$0xff]
    %v2417 = vld [vmem:[#allocation8 + $0x5a0] sm:$0xff]
    %v2418 = vld [vmem:[#allocation8 + $0x5a8] sm:$0xff]
    %v2419 = vld [vmem:[#allocation8 + $0x5b0] sm:$0xff]
    %v2420 = vld [vmem:[#allocation8 + $0x5b8] sm:$0xff]
    %v2421 = vld [vmem:[#allocation8 + $0x5c0] sm:$0xff]
    %v2422 = vld [vmem:[#allocation8 + $0x5c8] sm:$0xff]
    %v2423 = vld [vmem:[#allocation8 + $0x5d0] sm:$0xff]
    %v2424 = vld [vmem:[#allocation8 + $0x5d8] sm:$0xff]
    %v2425 = vld [vmem:[#allocation8 + $0x5e0] sm:$0xff]
    %v2426 = vld [vmem:[#allocation8 + $0x5e8] sm:$0xff]
    %v2427 = vld [vmem:[#allocation8 + $0x5f0] sm:$0xff]
    %v2428 = vld [vmem:[#allocation8 + $0x5f8] sm:$0xff]
    %v2429 = vld [vmem:[#allocation8 + $0x600] sm:$0xff]
    %v2430 = vld [vmem:[#allocation8 + $0x608] sm:$0xff]
    %v2431 = vld [vmem:[#allocation8 + $0x610] sm:$0xff]
    %v2432 = vld [vmem:[#allocation8 + $0x618] sm:$0xff]
    %v2433 = vld [vmem:[#allocation8 + $0x620] sm:$0xff]
    %v2434 = vld [vmem:[#allocation8 + $0x628] sm:$0xff]
    %v2435 = vld [vmem:[#allocation8 + $0x630] sm:$0xff]
    %v2436 = vld [vmem:[#allocation8 + $0x638] sm:$0xff]
    %v2437 = vld [vmem:[#allocation8 + $0x640] sm:$0xff]
    %v2438 = vld [vmem:[#allocation8 + $0x648] sm:$0xff]
    %v2439 = vld [vmem:[#allocation8 + $0x650] sm:$0xff]
    %v2440 = vld [vmem:[#allocation8 + $0x658] sm:$0xff]
    %v2441 = vld [vmem:[#allocation8 + $0x660] sm:$0xff]
    %v2442 = vld [vmem:[#allocation8 + $0x668] sm:$0xff]
    %v2443 = vld [vmem:[#allocation8 + $0x670] sm:$0xff]
    %v2444 = vld [vmem:[#allocation8 + $0x678] sm:$0xff]
    %v2445 = vld [vmem:[#allocation8 + $0x680] sm:$0xff]
    %v2446 = vld [vmem:[#allocation8 + $0x688] sm:$0xff]
    %v2447 = vld [vmem:[#allocation8 + $0x690] sm:$0xff]
    %v2448 = vld [vmem:[#allocation8 + $0x698] sm:$0xff]
    %v2449 = vld [vmem:[#allocation8 + $0x6a0] sm:$0xff]
    %v2450 = vld [vmem:[#allocation8 + $0x6a8] sm:$0xff]
    %v2451 = vld [vmem:[#allocation8 + $0x6b0] sm:$0xff]
    %v2452 = vld [vmem:[#allocation8 + $0x6b8] sm:$0xff]
    %v2453 = vld [vmem:[#allocation8 + $0x6c0] sm:$0xff]
    %v2454 = vld [vmem:[#allocation8 + $0x6c8] sm:$0xff]
    %v2455 = vld [vmem:[#allocation8 + $0x6d0] sm:$0xff]
    %v2456 = vld [vmem:[#allocation8 + $0x6d8] sm:$0xff]
    %v2457 = vld [vmem:[#allocation8 + $0x6e0] sm:$0xff]
    %v2458 = vld [vmem:[#allocation8 + $0x6e8] sm:$0xff]
    %v2459 = vld [vmem:[#allocation8 + $0x6f0] sm:$0xff]
    %v2460 = vld [vmem:[#allocation8 + $0x6f8] sm:$0xff]
    %v2461 = vld [vmem:[#allocation8 + $0x700] sm:$0xff]
    %v2462 = vld [vmem:[#allocation8 + $0x708] sm:$0xff]
    %v2463 = vld [vmem:[#allocation8 + $0x710] sm:$0xff]
    %v2464 = vld [vmem:[#allocation8 + $0x718] sm:$0xff]
    %v2465 = vld [vmem:[#allocation8 + $0x720] sm:$0xff]
    %v2466 = vld [vmem:[#allocation8 + $0x728] sm:$0xff]
    %v2467 = vld [vmem:[#allocation8 + $0x730] sm:$0xff]
    %v2468 = vld [vmem:[#allocation8 + $0x738] sm:$0xff]
    %v2469 = vld [vmem:[#allocation8 + $0x740] sm:$0xff]
    %v2470 = vld [vmem:[#allocation8 + $0x748] sm:$0xff]
    %v2471 = vld [vmem:[#allocation8 + $0x750] sm:$0xff]
    %v2472 = vld [vmem:[#allocation8 + $0x758] sm:$0xff]
    %v2473 = vld [vmem:[#allocation8 + $0x760] sm:$0xff]
    %v2474 = vld [vmem:[#allocation8 + $0x768] sm:$0xff]
    %v2475 = vld [vmem:[#allocation8 + $0x770] sm:$0xff]
    %v2476 = vld [vmem:[#allocation8 + $0x778] sm:$0xff]
    %v2477 = vld [vmem:[#allocation8 + $0x780] sm:$0xff]
    %v2478 = vld [vmem:[#allocation8 + $0x788] sm:$0xff]
    %v2479 = vld [vmem:[#allocation8 + $0x790] sm:$0xff]
    %v2480 = vld [vmem:[#allocation8 + $0x798] sm:$0xff]
    %v2481 = vld [vmem:[#allocation8 + $0x7a0] sm:$0xff]
    %v2482 = vld [vmem:[#allocation8 + $0x7a8] sm:$0xff]
    %v2483 = vld [vmem:[#allocation8 + $0x7b0] sm:$0xff]
    %v2484 = vld [vmem:[#allocation8 + $0x7b8] sm:$0xff]
    %v2485 = vld [vmem:[#allocation8 + $0x7c0] sm:$0xff]
    %v2486 = vld [vmem:[#allocation8 + $0x7c8] sm:$0xff]
    %v2487 = vld [vmem:[#allocation8 + $0x7d0] sm:$0xff]
    %v2488 = vld [vmem:[#allocation8 + $0x7d8] sm:$0xff]
    %v2489 = vld [vmem:[#allocation8 + $0x7e0] sm:$0xff]
    %v2490 = vld [vmem:[#allocation8 + $0x7e8] sm:$0xff]
    %v2491 = vld [vmem:[#allocation8 + $0x7f0] sm:$0xff]
    %v2492 = vld [vmem:[#allocation8 + $0x7f8] sm:$0xff]
    %v2493 = vld [vmem:[#allocation8 + $0x800] sm:$0xff]
    %v2494 = vld [vmem:[#allocation8 + $0x808] sm:$0xff]
    %v2495 = vld [vmem:[#allocation8 + $0x810] sm:$0xff]
    %v2496 = vld [vmem:[#allocation8 + $0x818] sm:$0xff]
    %v2497 = vld [vmem:[#allocation8 + $0x820] sm:$0xff]
    %v2498 = vld [vmem:[#allocation8 + $0x828] sm:$0xff]
    %v2499 = vld [vmem:[#allocation8 + $0x830] sm:$0xff]
    %v2500 = vld [vmem:[#allocation8 + $0x838] sm:$0xff]
    %v2501 = vld [vmem:[#allocation8 + $0x840] sm:$0xff]
    %v2502 = vld [vmem:[#allocation8 + $0x848] sm:$0xff]
    %v2503 = vld [vmem:[#allocation8 + $0x850] sm:$0xff]
    %v2504 = vld [vmem:[#allocation8 + $0x858] sm:$0xff]
    %v2505 = vld [vmem:[#allocation8 + $0x860] sm:$0xff]
    %v2506 = vld [vmem:[#allocation8 + $0x868] sm:$0xff]
    %v2507 = vld [vmem:[#allocation8 + $0x870] sm:$0xff]
    %v2508 = vld [vmem:[#allocation8 + $0x878] sm:$0xff]
    %v2509 = vld [vmem:[#allocation8 + $0x880] sm:$0xff]
    %v2510 = vld [vmem:[#allocation8 + $0x888] sm:$0xff]
    %v2511 = vld [vmem:[#allocation8 + $0x890] sm:$0xff]
    %v2512 = vld [vmem:[#allocation8 + $0x898] sm:$0xff]
    %v2513 = vld [vmem:[#allocation8 + $0x8a0] sm:$0xff]
    %v2514 = vld [vmem:[#allocation8 + $0x8a8] sm:$0xff]
    %v2515 = vld [vmem:[#allocation8 + $0x8b0] sm:$0xff]
    %v2516 = vld [vmem:[#allocation8 + $0x8b8] sm:$0xff]
    %v2517 = vld [vmem:[#allocation8 + $0x8c0] sm:$0xff]
    %v2518 = vld [vmem:[#allocation8 + $0x8c8] sm:$0xff]
    %v2519 = vld [vmem:[#allocation8 + $0x8d0] sm:$0xff]
    %v2520 = vld [vmem:[#allocation8 + $0x8d8] sm:$0xff]
    %v2521 = vld [vmem:[#allocation8 + $0x8e0] sm:$0xff]
    %v2522 = vld [vmem:[#allocation8 + $0x8e8] sm:$0xff]
    %v2523 = vld [vmem:[#allocation8 + $0x8f0] sm:$0xff]
    %v2524 = vld [vmem:[#allocation8 + $0x8f8] sm:$0xff]
    %v2526 = vlaneseq
    %v2527 = vshrl.u32 %v2526, 7
    %v2528 = vsub.s32 0, %v2527
    %v2529 = vrot.slane %v84, %v2528
    %v2530 = vlaneseq
    %v2531 = vshrl.u32 %v2530, 7
    %v2532 = vsub.s32 1, %v2531
    %v2533 = vrot.slane %v84, %v2532
    %v2534 = vlaneseq
    %v2535 = vshrl.u32 %v2534, 7
    %v2536 = vsub.s32 2, %v2535
    %v2537 = vrot.slane %v84, %v2536
    %v2538 = vlaneseq
    %v2539 = vshrl.u32 %v2538, 7
    %v2540 = vsub.s32 3, %v2539
    %v2541 = vrot.slane %v84, %v2540
    %v2542 = vlaneseq
    %v2543 = vshrl.u32 %v2542, 7
    %v2544 = vsub.s32 4, %v2543
    %v2545 = vrot.slane %v84, %v2544
    %v2546 = vlaneseq
    %v2547 = vshrl.u32 %v2546, 7
    %v2548 = vsub.s32 5, %v2547
    %v2549 = vrot.slane %v84, %v2548
    %v2844 = vunpack.c.l.b16 %v2237
    %v2845 = vunpack.c.h.b16 %v2237
    %v2846 = vunpack.c.l.b16 %v2238
    %v2847 = vunpack.c.h.b16 %v2238
    %v2848 = vunpack.c.l.b16 %v2239
    %v2849 = vunpack.c.h.b16 %v2239
    %v2850 = vunpack.c.l.b16 %v2240
    %v2851 = vunpack.c.h.b16 %v2240
    %v2852 = vunpack.c.l.b16 %v2241
    %v2853 = vunpack.c.h.b16 %v2241
    %v2854 = vunpack.c.l.b16 %v2242
    %v2855 = vunpack.c.h.b16 %v2242
    %v2856 = vunpack.c.l.b16 %v2243
    %v2857 = vunpack.c.h.b16 %v2243
    %v2858 = vunpack.c.l.b16 %v2244
    %v2859 = vunpack.c.h.b16 %v2244
    %v2860 = vunpack.c.l.b16 %v2245
    %v2861 = vunpack.c.h.b16 %v2245
    %v2862 = vunpack.c.l.b16 %v2246
    %v2863 = vunpack.c.h.b16 %v2246
    %v2864 = vunpack.c.l.b16 %v2247
    %v2865 = vunpack.c.h.b16 %v2247
    %v2866 = vunpack.c.l.b16 %v2248
    %v2867 = vunpack.c.h.b16 %v2248
    %v2868 = vunpack.c.l.b16 %v2249
    %v2869 = vunpack.c.h.b16 %v2249
    %v2870 = vunpack.c.l.b16 %v2250
    %v2871 = vunpack.c.h.b16 %v2250
    %v2872 = vunpack.c.l.b16 %v2251
    %v2873 = vunpack.c.h.b16 %v2251
    %v2874 = vunpack.c.l.b16 %v2252
    %v2875 = vunpack.c.h.b16 %v2252
    %v2876 = vunpack.c.l.b16 %v2253
    %v2877 = vunpack.c.h.b16 %v2253
    %v2878 = vunpack.c.l.b16 %v2254
    %v2879 = vunpack.c.h.b16 %v2254
    %v2880 = vunpack.c.l.b16 %v2255
    %v2881 = vunpack.c.h.b16 %v2255
    %v2882 = vunpack.c.l.b16 %v2256
    %v2883 = vunpack.c.h.b16 %v2256
    %v2884 = vunpack.c.l.b16 %v2257
    %v2885 = vunpack.c.h.b16 %v2257
    %v2886 = vunpack.c.l.b16 %v2258
    %v2887 = vunpack.c.h.b16 %v2258
    %v2888 = vunpack.c.l.b16 %v2259
    %v2889 = vunpack.c.h.b16 %v2259
    %v2890 = vunpack.c.l.b16 %v2260
    %v2891 = vunpack.c.h.b16 %v2260
    %v2892 = vunpack.c.l.b16 %v2261
    %v2893 = vunpack.c.h.b16 %v2261
    %v2894 = vunpack.c.l.b16 %v2262
    %v2895 = vunpack.c.h.b16 %v2262
    %v2896 = vunpack.c.l.b16 %v2263
    %v2897 = vunpack.c.h.b16 %v2263
    %v2898 = vunpack.c.l.b16 %v2264
    %v2899 = vunpack.c.h.b16 %v2264
    %v2900 = vunpack.c.l.b16 %v2265
    %v2901 = vunpack.c.h.b16 %v2265
    %v2902 = vunpack.c.l.b16 %v2266
    %v2903 = vunpack.c.h.b16 %v2266
    %v2904 = vunpack.c.l.b16 %v2267
    %v2905 = vunpack.c.h.b16 %v2267
    %v2906 = vunpack.c.l.b16 %v2268
    %v2907 = vunpack.c.h.b16 %v2268
    %v2908 = vunpack.c.l.b16 %v2269
    %v2909 = vunpack.c.h.b16 %v2269
    %v2910 = vunpack.c.l.b16 %v2270
    %v2911 = vunpack.c.h.b16 %v2270
    %v2912 = vunpack.c.l.b16 %v2271
    %v2913 = vunpack.c.h.b16 %v2271
    %v2914 = vunpack.c.l.b16 %v2272
    %v2915 = vunpack.c.h.b16 %v2272
    %v2916 = vunpack.c.l.b16 %v2273
    %v2917 = vunpack.c.h.b16 %v2273
    %v2918 = vunpack.c.l.b16 %v2274
    %v2919 = vunpack.c.h.b16 %v2274
    %v2920 = vunpack.c.l.b16 %v2275
    %v2921 = vunpack.c.h.b16 %v2275
    %v2922 = vunpack.c.l.b16 %v2276
    %v2923 = vunpack.c.h.b16 %v2276
    %v2924 = vunpack.c.l.b16 %v2277
    %v2925 = vunpack.c.h.b16 %v2277
    %v2926 = vunpack.c.l.b16 %v2278
    %v2927 = vunpack.c.h.b16 %v2278
    %v2928 = vunpack.c.l.b16 %v2279
    %v2929 = vunpack.c.h.b16 %v2279
    %v2930 = vunpack.c.l.b16 %v2280
    %v2931 = vunpack.c.h.b16 %v2280
    %v2932 = vunpack.c.l.b16 %v2281
    %v2933 = vunpack.c.h.b16 %v2281
    %v2934 = vunpack.c.l.b16 %v2282
    %v2935 = vunpack.c.h.b16 %v2282
    %v2936 = vunpack.c.l.b16 %v2283
    %v2937 = vunpack.c.h.b16 %v2283
    %v2938 = vunpack.c.l.b16 %v2284
    %v2939 = vunpack.c.h.b16 %v2284
    %v2940 = vunpack.c.l.b16 %v2285
    %v2941 = vunpack.c.h.b16 %v2285
    %v2942 = vunpack.c.l.b16 %v2286
    %v2943 = vunpack.c.h.b16 %v2286
    %v2944 = vunpack.c.l.b16 %v2287
    %v2945 = vunpack.c.h.b16 %v2287
    %v2946 = vunpack.c.l.b16 %v2288
    %v2947 = vunpack.c.h.b16 %v2288
    %v2948 = vunpack.c.l.b16 %v2289
    %v2949 = vunpack.c.h.b16 %v2289
    %v2950 = vunpack.c.l.b16 %v2290
    %v2951 = vunpack.c.h.b16 %v2290
    %v2952 = vunpack.c.l.b16 %v2291
    %v2953 = vunpack.c.h.b16 %v2291
    %v2954 = vunpack.c.l.b16 %v2292
    %v2955 = vunpack.c.h.b16 %v2292
    %v2956 = vunpack.c.l.b16 %v2293
    %v2957 = vunpack.c.h.b16 %v2293
    %v2958 = vunpack.c.l.b16 %v2294
    %v2959 = vunpack.c.h.b16 %v2294
    %v2960 = vunpack.c.l.b16 %v2295
    %v2961 = vunpack.c.h.b16 %v2295
    %v2962 = vunpack.c.l.b16 %v2296
    %v2963 = vunpack.c.h.b16 %v2296
    %v2964 = vunpack.c.l.b16 %v2297
    %v2965 = vunpack.c.h.b16 %v2297
    %v2966 = vunpack.c.l.b16 %v2298
    %v2967 = vunpack.c.h.b16 %v2298
    %v2968 = vunpack.c.l.b16 %v2299
    %v2969 = vunpack.c.h.b16 %v2299
    %v2970 = vunpack.c.l.b16 %v2300
    %v2971 = vunpack.c.h.b16 %v2300
    %v2972 = vunpack.c.l.b16 %v2301
    %v2973 = vunpack.c.h.b16 %v2301
    %v2974 = vunpack.c.l.b16 %v2302
    %v2975 = vunpack.c.h.b16 %v2302
    %v2976 = vunpack.c.l.b16 %v2303
    %v2977 = vunpack.c.h.b16 %v2303
    %v2978 = vunpack.c.l.b16 %v2304
    %v2979 = vunpack.c.h.b16 %v2304
    %v2980 = vunpack.c.l.b16 %v2305
    %v2981 = vunpack.c.h.b16 %v2305
    %v2982 = vunpack.c.l.b16 %v2306
    %v2983 = vunpack.c.h.b16 %v2306
    %v2984 = vunpack.c.l.b16 %v2307
    %v2985 = vunpack.c.h.b16 %v2307
    %v2986 = vunpack.c.l.b16 %v2308
    %v2987 = vunpack.c.h.b16 %v2308
    %v2988 = vunpack.c.l.b16 %v2309
    %v2989 = vunpack.c.h.b16 %v2309
    %v2990 = vunpack.c.l.b16 %v2310
    %v2991 = vunpack.c.h.b16 %v2310
    %v2992 = vunpack.c.l.b16 %v2311
    %v2993 = vunpack.c.h.b16 %v2311
    %v2994 = vunpack.c.l.b16 %v2312
    %v2995 = vunpack.c.h.b16 %v2312
    %v2996 = vunpack.c.l.b16 %v2313
    %v2997 = vunpack.c.h.b16 %v2313
    %v2998 = vunpack.c.l.b16 %v2314
    %v2999 = vunpack.c.h.b16 %v2314
    %v3000 = vunpack.c.l.b16 %v2315
    %v3001 = vunpack.c.h.b16 %v2315
    %v3002 = vunpack.c.l.b16 %v2316
    %v3003 = vunpack.c.h.b16 %v2316
    %v3004 = vunpack.c.l.b16 %v2317
    %v3005 = vunpack.c.h.b16 %v2317
    %v3006 = vunpack.c.l.b16 %v2318
    %v3007 = vunpack.c.h.b16 %v2318
    %v3008 = vunpack.c.l.b16 %v2319
    %v3009 = vunpack.c.h.b16 %v2319
    %v3010 = vunpack.c.l.b16 %v2320
    %v3011 = vunpack.c.h.b16 %v2320
    %v3012 = vunpack.c.l.b16 %v2321
    %v3013 = vunpack.c.h.b16 %v2321
    %v3014 = vunpack.c.l.b16 %v2322
    %v3015 = vunpack.c.h.b16 %v2322
    %v3016 = vunpack.c.l.b16 %v2323
    %v3017 = vunpack.c.h.b16 %v2323
    %v3018 = vunpack.c.l.b16 %v2324
    %v3019 = vunpack.c.h.b16 %v2324
    %v3020 = vunpack.c.l.b16 %v2325
    %v3021 = vunpack.c.h.b16 %v2325
    %v3022 = vunpack.c.l.b16 %v2326
    %v3023 = vunpack.c.h.b16 %v2326
    %v3024 = vunpack.c.l.b16 %v2327
    %v3025 = vunpack.c.h.b16 %v2327
    %v3026 = vunpack.c.l.b16 %v2328
    %v3027 = vunpack.c.h.b16 %v2328
    %v3028 = vunpack.c.l.b16 %v2329
    %v3029 = vunpack.c.h.b16 %v2329
    %v3030 = vunpack.c.l.b16 %v2330
    %v3031 = vunpack.c.h.b16 %v2330
    %v3032 = vunpack.c.l.b16 %v2331
    %v3033 = vunpack.c.h.b16 %v2331
    %v3034 = vunpack.c.l.b16 %v2332
    %v3035 = vunpack.c.h.b16 %v2332
    %v3036 = vunpack.c.l.b16 %v2333
    %v3037 = vunpack.c.h.b16 %v2333
    %v3038 = vunpack.c.l.b16 %v2334
    %v3039 = vunpack.c.h.b16 %v2334
    %v3040 = vunpack.c.l.b16 %v2335
    %v3041 = vunpack.c.h.b16 %v2335
    %v3042 = vunpack.c.l.b16 %v2336
    %v3043 = vunpack.c.h.b16 %v2336
    %v3044 = vunpack.c.l.b16 %v2337
    %v3045 = vunpack.c.h.b16 %v2337
    %v3046 = vunpack.c.l.b16 %v2338
    %v3047 = vunpack.c.h.b16 %v2338
    %v3048 = vunpack.c.l.b16 %v2339
    %v3049 = vunpack.c.h.b16 %v2339
    %v3050 = vunpack.c.l.b16 %v2340
    %v3051 = vunpack.c.h.b16 %v2340
    %v3052 = vunpack.c.l.b16 %v2341
    %v3053 = vunpack.c.h.b16 %v2341
    %v3054 = vunpack.c.l.b16 %v2342
    %v3055 = vunpack.c.h.b16 %v2342
    %v3056 = vunpack.c.l.b16 %v2343
    %v3057 = vunpack.c.h.b16 %v2343
    %v3058 = vunpack.c.l.b16 %v2344
    %v3059 = vunpack.c.h.b16 %v2344
    %v3060 = vunpack.c.l.b16 %v2345
    %v3061 = vunpack.c.h.b16 %v2345
    %v3062 = vunpack.c.l.b16 %v2346
    %v3063 = vunpack.c.h.b16 %v2346
    %v3064 = vunpack.c.l.b16 %v2347
    %v3065 = vunpack.c.h.b16 %v2347
    %v3066 = vunpack.c.l.b16 %v2348
    %v3067 = vunpack.c.h.b16 %v2348
    %v3068 = vunpack.c.l.b16 %v2349
    %v3069 = vunpack.c.h.b16 %v2349
    %v3070 = vunpack.c.l.b16 %v2350
    %v3071 = vunpack.c.h.b16 %v2350
    %v3072 = vunpack.c.l.b16 %v2351
    %v3073 = vunpack.c.h.b16 %v2351
    %v3074 = vunpack.c.l.b16 %v2352
    %v3075 = vunpack.c.h.b16 %v2352
    %v3076 = vunpack.c.l.b16 %v2353
    %v3077 = vunpack.c.h.b16 %v2353
    %v3078 = vunpack.c.l.b16 %v2354
    %v3079 = vunpack.c.h.b16 %v2354
    %v3080 = vunpack.c.l.b16 %v2355
    %v3081 = vunpack.c.h.b16 %v2355
    %v3082 = vunpack.c.l.b16 %v2356
    %v3083 = vunpack.c.h.b16 %v2356
    %v3084 = vunpack.c.l.b16 %v2357
    %v3085 = vunpack.c.h.b16 %v2357
    %v3086 = vunpack.c.l.b16 %v2358
    %v3087 = vunpack.c.h.b16 %v2358
    %v3088 = vunpack.c.l.b16 %v2359
    %v3089 = vunpack.c.h.b16 %v2359
    %v3090 = vunpack.c.l.b16 %v2360
    %v3091 = vunpack.c.h.b16 %v2360
    %v3092 = vunpack.c.l.b16 %v2361
    %v3093 = vunpack.c.h.b16 %v2361
    %v3094 = vunpack.c.l.b16 %v2362
    %v3095 = vunpack.c.h.b16 %v2362
    %v3096 = vunpack.c.l.b16 %v2363
    %v3097 = vunpack.c.h.b16 %v2363
    %v3098 = vunpack.c.l.b16 %v2364
    %v3099 = vunpack.c.h.b16 %v2364
    %v3100 = vunpack.c.l.b16 %v2365
    %v3101 = vunpack.c.h.b16 %v2365
    %v3102 = vunpack.c.l.b16 %v2366
    %v3103 = vunpack.c.h.b16 %v2366
    %v3104 = vunpack.c.l.b16 %v2367
    %v3105 = vunpack.c.h.b16 %v2367
    %v3106 = vunpack.c.l.b16 %v2368
    %v3107 = vunpack.c.h.b16 %v2368
    %v3108 = vunpack.c.l.b16 %v2369
    %v3109 = vunpack.c.h.b16 %v2369
    %v3110 = vunpack.c.l.b16 %v2370
    %v3111 = vunpack.c.h.b16 %v2370
    %v3112 = vunpack.c.l.b16 %v2371
    %v3113 = vunpack.c.h.b16 %v2371
    %v3114 = vunpack.c.l.b16 %v2372
    %v3115 = vunpack.c.h.b16 %v2372
    %v3116 = vunpack.c.l.b16 %v2373
    %v3117 = vunpack.c.h.b16 %v2373
    %v3118 = vunpack.c.l.b16 %v2374
    %v3119 = vunpack.c.h.b16 %v2374
    %v3120 = vunpack.c.l.b16 %v2375
    %v3121 = vunpack.c.h.b16 %v2375
    %v3122 = vunpack.c.l.b16 %v2376
    %v3123 = vunpack.c.h.b16 %v2376
    %v3124 = vunpack.c.l.b16 %v2377
    %v3125 = vunpack.c.h.b16 %v2377
    %v3126 = vunpack.c.l.b16 %v2378
    %v3127 = vunpack.c.h.b16 %v2378
    %v3128 = vunpack.c.l.b16 %v2379
    %v3129 = vunpack.c.h.b16 %v2379
    %v3130 = vunpack.c.l.b16 %v2380
    %v3131 = vunpack.c.h.b16 %v2380
    %v3132 = vunpack.c.l.b16 %v2381
    %v3133 = vunpack.c.h.b16 %v2381
    %v3134 = vunpack.c.l.b16 %v2382
    %v3135 = vunpack.c.h.b16 %v2382
    %v3136 = vunpack.c.l.b16 %v2383
    %v3137 = vunpack.c.h.b16 %v2383
    %v3138 = vunpack.c.l.b16 %v2384
    %v3139 = vunpack.c.h.b16 %v2384
    %v3140 = vunpack.c.l.b16 %v2385
    %v3141 = vunpack.c.h.b16 %v2385
    %v3142 = vunpack.c.l.b16 %v2386
    %v3143 = vunpack.c.h.b16 %v2386
    %v3144 = vunpack.c.l.b16 %v2387
    %v3145 = vunpack.c.h.b16 %v2387
    %v3146 = vunpack.c.l.b16 %v2388
    %v3147 = vunpack.c.h.b16 %v2388
    %v3148 = vunpack.c.l.b16 %v2389
    %v3149 = vunpack.c.h.b16 %v2389
    %v3150 = vunpack.c.l.b16 %v2390
    %v3151 = vunpack.c.h.b16 %v2390
    %v3152 = vunpack.c.l.b16 %v2391
    %v3153 = vunpack.c.h.b16 %v2391
    %v3154 = vunpack.c.l.b16 %v2392
    %v3155 = vunpack.c.h.b16 %v2392
    %v3156 = vunpack.c.l.b16 %v2393
    %v3157 = vunpack.c.h.b16 %v2393
    %v3158 = vunpack.c.l.b16 %v2394
    %v3159 = vunpack.c.h.b16 %v2394
    %v3160 = vunpack.c.l.b16 %v2395
    %v3161 = vunpack.c.h.b16 %v2395
    %v3162 = vunpack.c.l.b16 %v2396
    %v3163 = vunpack.c.h.b16 %v2396
    %v3164 = vunpack.c.l.b16 %v2397
    %v3165 = vunpack.c.h.b16 %v2397
    %v3166 = vunpack.c.l.b16 %v2398
    %v3167 = vunpack.c.h.b16 %v2398
    %v3168 = vunpack.c.l.b16 %v2399
    %v3169 = vunpack.c.h.b16 %v2399
    %v3170 = vunpack.c.l.b16 %v2400
    %v3171 = vunpack.c.h.b16 %v2400
    %v3172 = vunpack.c.l.b16 %v2401
    %v3173 = vunpack.c.h.b16 %v2401
    %v3174 = vunpack.c.l.b16 %v2402
    %v3175 = vunpack.c.h.b16 %v2402
    %v3176 = vunpack.c.l.b16 %v2403
    %v3177 = vunpack.c.h.b16 %v2403
    %v3178 = vunpack.c.l.b16 %v2404
    %v3179 = vunpack.c.h.b16 %v2404
    %v3180 = vunpack.c.l.b16 %v2405
    %v3181 = vunpack.c.h.b16 %v2405
    %v3182 = vunpack.c.l.b16 %v2406
    %v3183 = vunpack.c.h.b16 %v2406
    %v3184 = vunpack.c.l.b16 %v2407
    %v3185 = vunpack.c.h.b16 %v2407
    %v3186 = vunpack.c.l.b16 %v2408
    %v3187 = vunpack.c.h.b16 %v2408
    %v3188 = vunpack.c.l.b16 %v2409
    %v3189 = vunpack.c.h.b16 %v2409
    %v3190 = vunpack.c.l.b16 %v2410
    %v3191 = vunpack.c.h.b16 %v2410
    %v3192 = vunpack.c.l.b16 %v2411
    %v3193 = vunpack.c.h.b16 %v2411
    %v3194 = vunpack.c.l.b16 %v2412
    %v3195 = vunpack.c.h.b16 %v2412
    %v3196 = vunpack.c.l.b16 %v2413
    %v3197 = vunpack.c.h.b16 %v2413
    %v3198 = vunpack.c.l.b16 %v2414
    %v3199 = vunpack.c.h.b16 %v2414
    %v3200 = vunpack.c.l.b16 %v2415
    %v3201 = vunpack.c.h.b16 %v2415
    %v3202 = vunpack.c.l.b16 %v2416
    %v3203 = vunpack.c.h.b16 %v2416
    %v3204 = vunpack.c.l.b16 %v2417
    %v3205 = vunpack.c.h.b16 %v2417
    %v3206 = vunpack.c.l.b16 %v2418
    %v3207 = vunpack.c.h.b16 %v2418
    %v3208 = vunpack.c.l.b16 %v2419
    %v3209 = vunpack.c.h.b16 %v2419
    %v3210 = vunpack.c.l.b16 %v2420
    %v3211 = vunpack.c.h.b16 %v2420
    %v3212 = vunpack.c.l.b16 %v2421
    %v3213 = vunpack.c.h.b16 %v2421
    %v3214 = vunpack.c.l.b16 %v2422
    %v3215 = vunpack.c.h.b16 %v2422
    %v3216 = vunpack.c.l.b16 %v2423
    %v3217 = vunpack.c.h.b16 %v2423
    %v3218 = vunpack.c.l.b16 %v2424
    %v3219 = vunpack.c.h.b16 %v2424
    %v3220 = vunpack.c.l.b16 %v2425
    %v3221 = vunpack.c.h.b16 %v2425
    %v3222 = vunpack.c.l.b16 %v2426
    %v3223 = vunpack.c.h.b16 %v2426
    %v3224 = vunpack.c.l.b16 %v2427
    %v3225 = vunpack.c.h.b16 %v2427
    %v3226 = vunpack.c.l.b16 %v2428
    %v3227 = vunpack.c.h.b16 %v2428
    %v3228 = vunpack.c.l.b16 %v2429
    %v3229 = vunpack.c.h.b16 %v2429
    %v3230 = vunpack.c.l.b16 %v2430
    %v3231 = vunpack.c.h.b16 %v2430
    %v3232 = vunpack.c.l.b16 %v2431
    %v3233 = vunpack.c.h.b16 %v2431
    %v3234 = vunpack.c.l.b16 %v2432
    %v3235 = vunpack.c.h.b16 %v2432
    %v3236 = vunpack.c.l.b16 %v2433
    %v3237 = vunpack.c.h.b16 %v2433
    %v3238 = vunpack.c.l.b16 %v2434
    %v3239 = vunpack.c.h.b16 %v2434
    %v3240 = vunpack.c.l.b16 %v2435
    %v3241 = vunpack.c.h.b16 %v2435
    %v3242 = vunpack.c.l.b16 %v2436
    %v3243 = vunpack.c.h.b16 %v2436
    %v3244 = vunpack.c.l.b16 %v2437
    %v3245 = vunpack.c.h.b16 %v2437
    %v3246 = vunpack.c.l.b16 %v2438
    %v3247 = vunpack.c.h.b16 %v2438
    %v3248 = vunpack.c.l.b16 %v2439
    %v3249 = vunpack.c.h.b16 %v2439
    %v3250 = vunpack.c.l.b16 %v2440
    %v3251 = vunpack.c.h.b16 %v2440
    %v3252 = vunpack.c.l.b16 %v2441
    %v3253 = vunpack.c.h.b16 %v2441
    %v3254 = vunpack.c.l.b16 %v2442
    %v3255 = vunpack.c.h.b16 %v2442
    %v3256 = vunpack.c.l.b16 %v2443
    %v3257 = vunpack.c.h.b16 %v2443
    %v3258 = vunpack.c.l.b16 %v2444
    %v3259 = vunpack.c.h.b16 %v2444
    %v3260 = vunpack.c.l.b16 %v2445
    %v3261 = vunpack.c.h.b16 %v2445
    %v3262 = vunpack.c.l.b16 %v2446
    %v3263 = vunpack.c.h.b16 %v2446
    %v3264 = vunpack.c.l.b16 %v2447
    %v3265 = vunpack.c.h.b16 %v2447
    %v3266 = vunpack.c.l.b16 %v2448
    %v3267 = vunpack.c.h.b16 %v2448
    %v3268 = vunpack.c.l.b16 %v2449
    %v3269 = vunpack.c.h.b16 %v2449
    %v3270 = vunpack.c.l.b16 %v2450
    %v3271 = vunpack.c.h.b16 %v2450
    %v3272 = vunpack.c.l.b16 %v2451
    %v3273 = vunpack.c.h.b16 %v2451
    %v3274 = vunpack.c.l.b16 %v2452
    %v3275 = vunpack.c.h.b16 %v2452
    %v3276 = vunpack.c.l.b16 %v2453
    %v3277 = vunpack.c.h.b16 %v2453
    %v3278 = vunpack.c.l.b16 %v2454
    %v3279 = vunpack.c.h.b16 %v2454
    %v3280 = vunpack.c.l.b16 %v2455
    %v3281 = vunpack.c.h.b16 %v2455
    %v3282 = vunpack.c.l.b16 %v2456
    %v3283 = vunpack.c.h.b16 %v2456
    %v3284 = vunpack.c.l.b16 %v2457
    %v3285 = vunpack.c.h.b16 %v2457
    %v3286 = vunpack.c.l.b16 %v2458
    %v3287 = vunpack.c.h.b16 %v2458
    %v3288 = vunpack.c.l.b16 %v2459
    %v3289 = vunpack.c.h.b16 %v2459
    %v3290 = vunpack.c.l.b16 %v2460
    %v3291 = vunpack.c.h.b16 %v2460
    %v3292 = vunpack.c.l.b16 %v2461
    %v3293 = vunpack.c.h.b16 %v2461
    %v3294 = vunpack.c.l.b16 %v2462
    %v3295 = vunpack.c.h.b16 %v2462
    %v3296 = vunpack.c.l.b16 %v2463
    %v3297 = vunpack.c.h.b16 %v2463
    %v3298 = vunpack.c.l.b16 %v2464
    %v3299 = vunpack.c.h.b16 %v2464
    %v3300 = vunpack.c.l.b16 %v2465
    %v3301 = vunpack.c.h.b16 %v2465
    %v3302 = vunpack.c.l.b16 %v2466
    %v3303 = vunpack.c.h.b16 %v2466
    %v3304 = vunpack.c.l.b16 %v2467
    %v3305 = vunpack.c.h.b16 %v2467
    %v3306 = vunpack.c.l.b16 %v2468
    %v3307 = vunpack.c.h.b16 %v2468
    %v3308 = vunpack.c.l.b16 %v2469
    %v3309 = vunpack.c.h.b16 %v2469
    %v3310 = vunpack.c.l.b16 %v2470
    %v3311 = vunpack.c.h.b16 %v2470
    %v3312 = vunpack.c.l.b16 %v2471
    %v3313 = vunpack.c.h.b16 %v2471
    %v3314 = vunpack.c.l.b16 %v2472
    %v3315 = vunpack.c.h.b16 %v2472
    %v3316 = vunpack.c.l.b16 %v2473
    %v3317 = vunpack.c.h.b16 %v2473
    %v3318 = vunpack.c.l.b16 %v2474
    %v3319 = vunpack.c.h.b16 %v2474
    %v3320 = vunpack.c.l.b16 %v2475
    %v3321 = vunpack.c.h.b16 %v2475
    %v3322 = vunpack.c.l.b16 %v2476
    %v3323 = vunpack.c.h.b16 %v2476
    %v3324 = vunpack.c.l.b16 %v2477
    %v3325 = vunpack.c.h.b16 %v2477
    %v3326 = vunpack.c.l.b16 %v2478
    %v3327 = vunpack.c.h.b16 %v2478
    %v3328 = vunpack.c.l.b16 %v2479
    %v3329 = vunpack.c.h.b16 %v2479
    %v3330 = vunpack.c.l.b16 %v2480
    %v3331 = vunpack.c.h.b16 %v2480
    %v3332 = vunpack.c.l.b16 %v2481
    %v3333 = vunpack.c.h.b16 %v2481
    %v3334 = vunpack.c.l.b16 %v2482
    %v3335 = vunpack.c.h.b16 %v2482
    %v3336 = vunpack.c.l.b16 %v2483
    %v3337 = vunpack.c.h.b16 %v2483
    %v3338 = vunpack.c.l.b16 %v2484
    %v3339 = vunpack.c.h.b16 %v2484
    %v3340 = vunpack.c.l.b16 %v2485
    %v3341 = vunpack.c.h.b16 %v2485
    %v3342 = vunpack.c.l.b16 %v2486
    %v3343 = vunpack.c.h.b16 %v2486
    %v3344 = vunpack.c.l.b16 %v2487
    %v3345 = vunpack.c.h.b16 %v2487
    %v3346 = vunpack.c.l.b16 %v2488
    %v3347 = vunpack.c.h.b16 %v2488
    %v3348 = vunpack.c.l.b16 %v2489
    %v3349 = vunpack.c.h.b16 %v2489
    %v3350 = vunpack.c.l.b16 %v2490
    %v3351 = vunpack.c.h.b16 %v2490
    %v3352 = vunpack.c.l.b16 %v2491
    %v3353 = vunpack.c.h.b16 %v2491
    %v3354 = vunpack.c.l.b16 %v2492
    %v3355 = vunpack.c.h.b16 %v2492
    %v3356 = vunpack.c.l.b16 %v2493
    %v3357 = vunpack.c.h.b16 %v2493
    %v3358 = vunpack.c.l.b16 %v2494
    %v3359 = vunpack.c.h.b16 %v2494
    %v3360 = vunpack.c.l.b16 %v2495
    %v3361 = vunpack.c.h.b16 %v2495
    %v3362 = vunpack.c.l.b16 %v2496
    %v3363 = vunpack.c.h.b16 %v2496
    %v3364 = vunpack.c.l.b16 %v2497
    %v3365 = vunpack.c.h.b16 %v2497
    %v3366 = vunpack.c.l.b16 %v2498
    %v3367 = vunpack.c.h.b16 %v2498
    %v3368 = vunpack.c.l.b16 %v2499
    %v3369 = vunpack.c.h.b16 %v2499
    %v3370 = vunpack.c.l.b16 %v2500
    %v3371 = vunpack.c.h.b16 %v2500
    %v3372 = vunpack.c.l.b16 %v2501
    %v3373 = vunpack.c.h.b16 %v2501
    %v3374 = vunpack.c.l.b16 %v2502
    %v3375 = vunpack.c.h.b16 %v2502
    %v3376 = vunpack.c.l.b16 %v2503
    %v3377 = vunpack.c.h.b16 %v2503
    %v3378 = vunpack.c.l.b16 %v2504
    %v3379 = vunpack.c.h.b16 %v2504
    %v3380 = vunpack.c.l.b16 %v2505
    %v3381 = vunpack.c.h.b16 %v2505
    %v3382 = vunpack.c.l.b16 %v2506
    %v3383 = vunpack.c.h.b16 %v2506
    %v3384 = vunpack.c.l.b16 %v2507
    %v3385 = vunpack.c.h.b16 %v2507
    %v3386 = vunpack.c.l.b16 %v2508
    %v3387 = vunpack.c.h.b16 %v2508
    %v3388 = vunpack.c.l.b16 %v2509
    %v3389 = vunpack.c.h.b16 %v2509
    %v3390 = vunpack.c.l.b16 %v2510
    %v3391 = vunpack.c.h.b16 %v2510
    %v3392 = vunpack.c.l.b16 %v2511
    %v3393 = vunpack.c.h.b16 %v2511
    %v3394 = vunpack.c.l.b16 %v2512
    %v3395 = vunpack.c.h.b16 %v2512
    %v3396 = vunpack.c.l.b16 %v2513
    %v3397 = vunpack.c.h.b16 %v2513
    %v3398 = vunpack.c.l.b16 %v2514
    %v3399 = vunpack.c.h.b16 %v2514
    %v3400 = vunpack.c.l.b16 %v2515
    %v3401 = vunpack.c.h.b16 %v2515
    %v3402 = vunpack.c.l.b16 %v2516
    %v3403 = vunpack.c.h.b16 %v2516
    %v3404 = vunpack.c.l.b16 %v2517
    %v3405 = vunpack.c.h.b16 %v2517
    %v3406 = vunpack.c.l.b16 %v2518
    %v3407 = vunpack.c.h.b16 %v2518
    %v3408 = vunpack.c.l.b16 %v2519
    %v3409 = vunpack.c.h.b16 %v2519
    %v3410 = vunpack.c.l.b16 %v2520
    %v3411 = vunpack.c.h.b16 %v2520
    %v3412 = vunpack.c.l.b16 %v2521
    %v3413 = vunpack.c.h.b16 %v2521
    %v3414 = vunpack.c.l.b16 %v2522
    %v3415 = vunpack.c.h.b16 %v2522
    %v3416 = vunpack.c.l.b16 %v2523
    %v3417 = vunpack.c.h.b16 %v2523
    %v3418 = vunpack.c.l.b16 %v2524
    %v3419 = vunpack.c.h.b16 %v2524
    %v3420 = vpack.c.b16 %v2850, %v2844
    %v3421 = vpack.c.b16 %v2851, %v2845
    %v3422 = vpack.c.b16 %v2852, %v2846
    %v3423 = vpack.c.b16 %v2853, %v2847
    %v3424 = vpack.c.b16 %v2854, %v2848
    %v3425 = vpack.c.b16 %v2855, %v2849
    %v3426 = vpack.c.b16 %v2862, %v2856
    %v3427 = vpack.c.b16 %v2863, %v2857
    %v3428 = vpack.c.b16 %v2864, %v2858
    %v3429 = vpack.c.b16 %v2865, %v2859
    %v3430 = vpack.c.b16 %v2866, %v2860
    %v3431 = vpack.c.b16 %v2867, %v2861
    %v3432 = vpack.c.b16 %v2874, %v2868
    %v3433 = vpack.c.b16 %v2875, %v2869
    %v3434 = vpack.c.b16 %v2876, %v2870
    %v3435 = vpack.c.b16 %v2877, %v2871
    %v3436 = vpack.c.b16 %v2878, %v2872
    %v3437 = vpack.c.b16 %v2879, %v2873
    %v3438 = vpack.c.b16 %v2886, %v2880
    %v3439 = vpack.c.b16 %v2887, %v2881
    %v3440 = vpack.c.b16 %v2888, %v2882
    %v3441 = vpack.c.b16 %v2889, %v2883
    %v3442 = vpack.c.b16 %v2890, %v2884
    %v3443 = vpack.c.b16 %v2891, %v2885
    %v3444 = vpack.c.b16 %v2898, %v2892
    %v3445 = vpack.c.b16 %v2899, %v2893
    %v3446 = vpack.c.b16 %v2900, %v2894
    %v3447 = vpack.c.b16 %v2901, %v2895
    %v3448 = vpack.c.b16 %v2902, %v2896
    %v3449 = vpack.c.b16 %v2903, %v2897
    %v3450 = vpack.c.b16 %v2910, %v2904
    %v3451 = vpack.c.b16 %v2911, %v2905
    %v3452 = vpack.c.b16 %v2912, %v2906
    %v3453 = vpack.c.b16 %v2913, %v2907
    %v3454 = vpack.c.b16 %v2914, %v2908
    %v3455 = vpack.c.b16 %v2915, %v2909
    %v3456 = vpack.c.b16 %v2922, %v2916
    %v3457 = vpack.c.b16 %v2923, %v2917
    %v3458 = vpack.c.b16 %v2924, %v2918
    %v3459 = vpack.c.b16 %v2925, %v2919
    %v3460 = vpack.c.b16 %v2926, %v2920
    %v3461 = vpack.c.b16 %v2927, %v2921
    %v3462 = vpack.c.b16 %v2934, %v2928
    %v3463 = vpack.c.b16 %v2935, %v2929
    %v3464 = vpack.c.b16 %v2936, %v2930
    %v3465 = vpack.c.b16 %v2937, %v2931
    %v3466 = vpack.c.b16 %v2938, %v2932
    %v3467 = vpack.c.b16 %v2939, %v2933
    %v3468 = vpack.c.b16 %v2946, %v2940
    %v3469 = vpack.c.b16 %v2947, %v2941
    %v3470 = vpack.c.b16 %v2948, %v2942
    %v3471 = vpack.c.b16 %v2949, %v2943
    %v3472 = vpack.c.b16 %v2950, %v2944
    %v3473 = vpack.c.b16 %v2951, %v2945
    %v3474 = vpack.c.b16 %v2958, %v2952
    %v3475 = vpack.c.b16 %v2959, %v2953
    %v3476 = vpack.c.b16 %v2960, %v2954
    %v3477 = vpack.c.b16 %v2961, %v2955
    %v3478 = vpack.c.b16 %v2962, %v2956
    %v3479 = vpack.c.b16 %v2963, %v2957
    %v3480 = vpack.c.b16 %v2970, %v2964
    %v3481 = vpack.c.b16 %v2971, %v2965
    %v3482 = vpack.c.b16 %v2972, %v2966
    %v3483 = vpack.c.b16 %v2973, %v2967
    %v3484 = vpack.c.b16 %v2974, %v2968
    %v3485 = vpack.c.b16 %v2975, %v2969
    %v3486 = vpack.c.b16 %v2982, %v2976
    %v3487 = vpack.c.b16 %v2983, %v2977
    %v3488 = vpack.c.b16 %v2984, %v2978
    %v3489 = vpack.c.b16 %v2985, %v2979
    %v3490 = vpack.c.b16 %v2986, %v2980
    %v3491 = vpack.c.b16 %v2987, %v2981
    %v3492 = vpack.c.b16 %v2994, %v2988
    %v3493 = vpack.c.b16 %v2995, %v2989
    %v3494 = vpack.c.b16 %v2996, %v2990
    %v3495 = vpack.c.b16 %v2997, %v2991
    %v3496 = vpack.c.b16 %v2998, %v2992
    %v3497 = vpack.c.b16 %v2999, %v2993
    %v3498 = vpack.c.b16 %v3006, %v3000
    %v3499 = vpack.c.b16 %v3007, %v3001
    %v3500 = vpack.c.b16 %v3008, %v3002
    %v3501 = vpack.c.b16 %v3009, %v3003
    %v3502 = vpack.c.b16 %v3010, %v3004
    %v3503 = vpack.c.b16 %v3011, %v3005
    %v3504 = vpack.c.b16 %v3018, %v3012
    %v3505 = vpack.c.b16 %v3019, %v3013
    %v3506 = vpack.c.b16 %v3020, %v3014
    %v3507 = vpack.c.b16 %v3021, %v3015
    %v3508 = vpack.c.b16 %v3022, %v3016
    %v3509 = vpack.c.b16 %v3023, %v3017
    %v3510 = vpack.c.b16 %v3030, %v3024
    %v3511 = vpack.c.b16 %v3031, %v3025
    %v3512 = vpack.c.b16 %v3032, %v3026
    %v3513 = vpack.c.b16 %v3033, %v3027
    %v3514 = vpack.c.b16 %v3034, %v3028
    %v3515 = vpack.c.b16 %v3035, %v3029
    %v3516 = vpack.c.b16 %v3042, %v3036
    %v3517 = vpack.c.b16 %v3043, %v3037
    %v3518 = vpack.c.b16 %v3044, %v3038
    %v3519 = vpack.c.b16 %v3045, %v3039
    %v3520 = vpack.c.b16 %v3046, %v3040
    %v3521 = vpack.c.b16 %v3047, %v3041
    %v3522 = vpack.c.b16 %v3054, %v3048
    %v3523 = vpack.c.b16 %v3055, %v3049
    %v3524 = vpack.c.b16 %v3056, %v3050
    %v3525 = vpack.c.b16 %v3057, %v3051
    %v3526 = vpack.c.b16 %v3058, %v3052
    %v3527 = vpack.c.b16 %v3059, %v3053
    %v3528 = vpack.c.b16 %v3066, %v3060
    %v3529 = vpack.c.b16 %v3067, %v3061
    %v3530 = vpack.c.b16 %v3068, %v3062
    %v3531 = vpack.c.b16 %v3069, %v3063
    %v3532 = vpack.c.b16 %v3070, %v3064
    %v3533 = vpack.c.b16 %v3071, %v3065
    %v3534 = vpack.c.b16 %v3078, %v3072
    %v3535 = vpack.c.b16 %v3079, %v3073
    %v3536 = vpack.c.b16 %v3080, %v3074
    %v3537 = vpack.c.b16 %v3081, %v3075
    %v3538 = vpack.c.b16 %v3082, %v3076
    %v3539 = vpack.c.b16 %v3083, %v3077
    %v3540 = vpack.c.b16 %v3090, %v3084
    %v3541 = vpack.c.b16 %v3091, %v3085
    %v3542 = vpack.c.b16 %v3092, %v3086
    %v3543 = vpack.c.b16 %v3093, %v3087
    %v3544 = vpack.c.b16 %v3094, %v3088
    %v3545 = vpack.c.b16 %v3095, %v3089
    %v3546 = vpack.c.b16 %v3102, %v3096
    %v3547 = vpack.c.b16 %v3103, %v3097
    %v3548 = vpack.c.b16 %v3104, %v3098
    %v3549 = vpack.c.b16 %v3105, %v3099
    %v3550 = vpack.c.b16 %v3106, %v3100
    %v3551 = vpack.c.b16 %v3107, %v3101
    %v3552 = vpack.c.b16 %v3114, %v3108
    %v3553 = vpack.c.b16 %v3115, %v3109
    %v3554 = vpack.c.b16 %v3116, %v3110
    %v3555 = vpack.c.b16 %v3117, %v3111
    %v3556 = vpack.c.b16 %v3118, %v3112
    %v3557 = vpack.c.b16 %v3119, %v3113
    %v3558 = vpack.c.b16 %v3126, %v3120
    %v3559 = vpack.c.b16 %v3127, %v3121
    %v3560 = vpack.c.b16 %v3128, %v3122
    %v3561 = vpack.c.b16 %v3129, %v3123
    %v3562 = vpack.c.b16 %v3130, %v3124
    %v3563 = vpack.c.b16 %v3131, %v3125
    %v3564 = vpack.c.b16 %v3138, %v3132
    %v3565 = vpack.c.b16 %v3139, %v3133
    %v3566 = vpack.c.b16 %v3140, %v3134
    %v3567 = vpack.c.b16 %v3141, %v3135
    %v3568 = vpack.c.b16 %v3142, %v3136
    %v3569 = vpack.c.b16 %v3143, %v3137
    %v3570 = vpack.c.b16 %v3150, %v3144
    %v3571 = vpack.c.b16 %v3151, %v3145
    %v3572 = vpack.c.b16 %v3152, %v3146
    %v3573 = vpack.c.b16 %v3153, %v3147
    %v3574 = vpack.c.b16 %v3154, %v3148
    %v3575 = vpack.c.b16 %v3155, %v3149
    %v3576 = vpack.c.b16 %v3162, %v3156
    %v3577 = vpack.c.b16 %v3163, %v3157
    %v3578 = vpack.c.b16 %v3164, %v3158
    %v3579 = vpack.c.b16 %v3165, %v3159
    %v3580 = vpack.c.b16 %v3166, %v3160
    %v3581 = vpack.c.b16 %v3167, %v3161
    %v3582 = vpack.c.b16 %v3174, %v3168
    %v3583 = vpack.c.b16 %v3175, %v3169
    %v3584 = vpack.c.b16 %v3176, %v3170
    %v3585 = vpack.c.b16 %v3177, %v3171
    %v3586 = vpack.c.b16 %v3178, %v3172
    %v3587 = vpack.c.b16 %v3179, %v3173
    %v3588 = vpack.c.b16 %v3186, %v3180
    %v3589 = vpack.c.b16 %v3187, %v3181
    %v3590 = vpack.c.b16 %v3188, %v3182
    %v3591 = vpack.c.b16 %v3189, %v3183
    %v3592 = vpack.c.b16 %v3190, %v3184
    %v3593 = vpack.c.b16 %v3191, %v3185
    %v3594 = vpack.c.b16 %v3198, %v3192
    %v3595 = vpack.c.b16 %v3199, %v3193
    %v3596 = vpack.c.b16 %v3200, %v3194
    %v3597 = vpack.c.b16 %v3201, %v3195
    %v3598 = vpack.c.b16 %v3202, %v3196
    %v3599 = vpack.c.b16 %v3203, %v3197
    %v3600 = vpack.c.b16 %v3210, %v3204
    %v3601 = vpack.c.b16 %v3211, %v3205
    %v3602 = vpack.c.b16 %v3212, %v3206
    %v3603 = vpack.c.b16 %v3213, %v3207
    %v3604 = vpack.c.b16 %v3214, %v3208
    %v3605 = vpack.c.b16 %v3215, %v3209
    %v3606 = vpack.c.b16 %v3222, %v3216
    %v3607 = vpack.c.b16 %v3223, %v3217
    %v3608 = vpack.c.b16 %v3224, %v3218
    %v3609 = vpack.c.b16 %v3225, %v3219
    %v3610 = vpack.c.b16 %v3226, %v3220
    %v3611 = vpack.c.b16 %v3227, %v3221
    %v3612 = vpack.c.b16 %v3234, %v3228
    %v3613 = vpack.c.b16 %v3235, %v3229
    %v3614 = vpack.c.b16 %v3236, %v3230
    %v3615 = vpack.c.b16 %v3237, %v3231
    %v3616 = vpack.c.b16 %v3238, %v3232
    %v3617 = vpack.c.b16 %v3239, %v3233
    %v3618 = vpack.c.b16 %v3246, %v3240
    %v3619 = vpack.c.b16 %v3247, %v3241
    %v3620 = vpack.c.b16 %v3248, %v3242
    %v3621 = vpack.c.b16 %v3249, %v3243
    %v3622 = vpack.c.b16 %v3250, %v3244
    %v3623 = vpack.c.b16 %v3251, %v3245
    %v3624 = vpack.c.b16 %v3258, %v3252
    %v3625 = vpack.c.b16 %v3259, %v3253
    %v3626 = vpack.c.b16 %v3260, %v3254
    %v3627 = vpack.c.b16 %v3261, %v3255
    %v3628 = vpack.c.b16 %v3262, %v3256
    %v3629 = vpack.c.b16 %v3263, %v3257
    %v3630 = vpack.c.b16 %v3270, %v3264
    %v3631 = vpack.c.b16 %v3271, %v3265
    %v3632 = vpack.c.b16 %v3272, %v3266
    %v3633 = vpack.c.b16 %v3273, %v3267
    %v3634 = vpack.c.b16 %v3274, %v3268
    %v3635 = vpack.c.b16 %v3275, %v3269
    %v3636 = vpack.c.b16 %v3282, %v3276
    %v3637 = vpack.c.b16 %v3283, %v3277
    %v3638 = vpack.c.b16 %v3284, %v3278
    %v3639 = vpack.c.b16 %v3285, %v3279
    %v3640 = vpack.c.b16 %v3286, %v3280
    %v3641 = vpack.c.b16 %v3287, %v3281
    %v3642 = vpack.c.b16 %v3294, %v3288
    %v3643 = vpack.c.b16 %v3295, %v3289
    %v3644 = vpack.c.b16 %v3296, %v3290
    %v3645 = vpack.c.b16 %v3297, %v3291
    %v3646 = vpack.c.b16 %v3298, %v3292
    %v3647 = vpack.c.b16 %v3299, %v3293
    %v3648 = vpack.c.b16 %v3306, %v3300
    %v3649 = vpack.c.b16 %v3307, %v3301
    %v3650 = vpack.c.b16 %v3308, %v3302
    %v3651 = vpack.c.b16 %v3309, %v3303
    %v3652 = vpack.c.b16 %v3310, %v3304
    %v3653 = vpack.c.b16 %v3311, %v3305
    %v3654 = vpack.c.b16 %v3318, %v3312
    %v3655 = vpack.c.b16 %v3319, %v3313
    %v3656 = vpack.c.b16 %v3320, %v3314
    %v3657 = vpack.c.b16 %v3321, %v3315
    %v3658 = vpack.c.b16 %v3322, %v3316
    %v3659 = vpack.c.b16 %v3323, %v3317
    %v3660 = vpack.c.b16 %v3330, %v3324
    %v3661 = vpack.c.b16 %v3331, %v3325
    %v3662 = vpack.c.b16 %v3332, %v3326
    %v3663 = vpack.c.b16 %v3333, %v3327
    %v3664 = vpack.c.b16 %v3334, %v3328
    %v3665 = vpack.c.b16 %v3335, %v3329
    %v3666 = vpack.c.b16 %v3342, %v3336
    %v3667 = vpack.c.b16 %v3343, %v3337
    %v3668 = vpack.c.b16 %v3344, %v3338
    %v3669 = vpack.c.b16 %v3345, %v3339
    %v3670 = vpack.c.b16 %v3346, %v3340
    %v3671 = vpack.c.b16 %v3347, %v3341
    %v3672 = vpack.c.b16 %v3354, %v3348
    %v3673 = vpack.c.b16 %v3355, %v3349
    %v3674 = vpack.c.b16 %v3356, %v3350
    %v3675 = vpack.c.b16 %v3357, %v3351
    %v3676 = vpack.c.b16 %v3358, %v3352
    %v3677 = vpack.c.b16 %v3359, %v3353
    %v3678 = vpack.c.b16 %v3366, %v3360
    %v3679 = vpack.c.b16 %v3367, %v3361
    %v3680 = vpack.c.b16 %v3368, %v3362
    %v3681 = vpack.c.b16 %v3369, %v3363
    %v3682 = vpack.c.b16 %v3370, %v3364
    %v3683 = vpack.c.b16 %v3371, %v3365
    %v3684 = vpack.c.b16 %v3378, %v3372
    %v3685 = vpack.c.b16 %v3379, %v3373
    %v3686 = vpack.c.b16 %v3380, %v3374
    %v3687 = vpack.c.b16 %v3381, %v3375
    %v3688 = vpack.c.b16 %v3382, %v3376
    %v3689 = vpack.c.b16 %v3383, %v3377
    %v3690 = vpack.c.b16 %v3390, %v3384
    %v3691 = vpack.c.b16 %v3391, %v3385
    %v3692 = vpack.c.b16 %v3392, %v3386
    %v3693 = vpack.c.b16 %v3393, %v3387
    %v3694 = vpack.c.b16 %v3394, %v3388
    %v3695 = vpack.c.b16 %v3395, %v3389
    %v3696 = vpack.c.b16 %v3402, %v3396
    %v3697 = vpack.c.b16 %v3403, %v3397
    %v3698 = vpack.c.b16 %v3404, %v3398
    %v3699 = vpack.c.b16 %v3405, %v3399
    %v3700 = vpack.c.b16 %v3406, %v3400
    %v3701 = vpack.c.b16 %v3407, %v3401
    %v3702 = vpack.c.b16 %v3414, %v3408
    %v3703 = vpack.c.b16 %v3415, %v3409
    %v3704 = vpack.c.b16 %v3416, %v3410
    %v3705 = vpack.c.b16 %v3417, %v3411
    %v3706 = vpack.c.b16 %v3418, %v3412
    %v3707 = vpack.c.b16 %v3419, %v3413
    %3996 = vmatprep.subr.bf16.mxu0 %v3463
    %3997 = vmatpush1.bf16.msra.mxu0 %v3462
    %3998 = vmatprep.subr.bf16.mxu0 %v3457
    %3999 = vmatpush1.bf16.msra.mxu0 %v3456
    %4000 = vmatprep.subr.bf16.mxu0 %v3451
    %4001 = vmatpush1.bf16.msra.mxu0 %v3450
    %4002 = vmatprep.subr.bf16.mxu0 %v3445
    %4003 = vmatpush1.bf16.msra.mxu0 %v3444
    %4004 = vmatprep.subr.bf16.mxu0 %v3439
    %4005 = vmatpush1.bf16.msra.mxu0 %v3438
    %4006 = vmatprep.subr.bf16.mxu0 %v3433
    %4007 = vmatpush1.bf16.msra.mxu0 %v3432
    %4008 = vmatprep.subr.bf16.mxu0 %v3427
    %4009 = vmatpush1.bf16.msra.mxu0 %v3426
    %4010 = vmatprep.subr.bf16.mxu0 %v3421
    %4011 = vmatpush1.bf16.msra.mxu0 %v3420
    %4012 = vmatprep.subr.bf16.mxu0 %v3511
    %4013 = vmatpush2.bf16.msra.mxu0 %v3510
    %4014 = vmatprep.subr.bf16.mxu0 %v3505
    %4015 = vmatpush2.bf16.msra.mxu0 %v3504
    %4016 = vmatprep.subr.bf16.mxu0 %v3499
    %4017 = vmatpush2.bf16.msra.mxu0 %v3498
    %4018 = vmatprep.subr.bf16.mxu0 %v3493
    %4019 = vmatpush2.bf16.msra.mxu0 %v3492
    %4020 = vmatprep.subr.bf16.mxu0 %v3487
    %4021 = vmatpush2.bf16.msra.mxu0 %v3486
    %4022 = vmatprep.subr.bf16.mxu0 %v3481
    %4023 = vmatpush2.bf16.msra.mxu0 %v3480
    %4024 = vmatprep.subr.bf16.mxu0 %v3475
    %4025 = vmatpush2.bf16.msra.mxu0 %v3474
    %4026 = vmatprep.subr.bf16.mxu0 %v3469
    %4027 = vmatpush2.bf16.msra.mxu0 %v3468
    %4028 = vmatprep.mubr.bf16.mxu0 %v2232
    %4029 = vmatmul.mubr.bf16.gmra.mxu0 %v2231
    %v4030 = vpop.f32.mrf.mxu0
    %v4031 = vadd.f32 %v2529, %v4030
    %v4032 = vpop.f32.mrf.mxu0
    %v4033 = vadd.f32 %v2533, %v4032
    %v4034 = vpop.f32.mrf.mxu0
    %v4035 = vpop.f32.mrf.mxu0
    %4036 = vdwg.mxu0
    %4037 = vmatprep.subr.bf16.mxu0 %v3559
    %4038 = vmatpush1.bf16.msra.mxu0 %v3558
    %4039 = vmatprep.subr.bf16.mxu0 %v3553
    %4040 = vmatpush1.bf16.msra.mxu0 %v3552
    %4041 = vmatprep.subr.bf16.mxu0 %v3547
    %4042 = vmatpush1.bf16.msra.mxu0 %v3546
    %4043 = vmatprep.subr.bf16.mxu0 %v3541
    %4044 = vmatpush1.bf16.msra.mxu0 %v3540
    %4045 = vmatprep.subr.bf16.mxu0 %v3535
    %4046 = vmatpush1.bf16.msra.mxu0 %v3534
    %4047 = vmatprep.subr.bf16.mxu0 %v3529
    %4048 = vmatpush1.bf16.msra.mxu0 %v3528
    %4049 = vmatprep.subr.bf16.mxu0 %v3523
    %4050 = vmatpush1.bf16.msra.mxu0 %v3522
    %4051 = vmatprep.subr.bf16.mxu0 %v3517
    %4052 = vmatpush1.bf16.msra.mxu0 %v3516
    %4053 = vmatprep.subr.bf16.mxu0 %v3607
    %4054 = vmatpush2.bf16.msra.mxu0 %v3606
    %4055 = vmatprep.subr.bf16.mxu0 %v3601
    %4056 = vmatpush2.bf16.msra.mxu0 %v3600
    %4057 = vmatprep.subr.bf16.mxu0 %v3595
    %4058 = vmatpush2.bf16.msra.mxu0 %v3594
    %4059 = vmatprep.subr.bf16.mxu0 %v3589
    %4060 = vmatpush2.bf16.msra.mxu0 %v3588
    %4061 = vmatprep.subr.bf16.mxu0 %v3583
    %4062 = vmatpush2.bf16.msra.mxu0 %v3582
    %4063 = vmatprep.subr.bf16.mxu0 %v3577
    %4064 = vmatpush2.bf16.msra.mxu0 %v3576
    %4065 = vmatprep.subr.bf16.mxu0 %v3571
    %4066 = vmatpush2.bf16.msra.mxu0 %v3570
    %4067 = vmatprep.subr.bf16.mxu0 %v3565
    %4068 = vmatpush2.bf16.msra.mxu0 %v3564
    %4069 = vmatprep.mubr.bf16.mxu0 %v2234
    %4070 = vmatmul.mubr.bf16.gmra.mxu0 %v2233
    %v4071 = vpop.f32.mrf.mxu0
    %v4072 = vadd.f32 %v4031, %v4071
    %v4073 = vpop.f32.mrf.mxu0
    %v4074 = vadd.f32 %v4033, %v4073
    %v4075 = vpop.f32.mrf.mxu0
    %v4076 = vpop.f32.mrf.mxu0
    %4077 = vdwg.mxu0
    %4078 = vmatprep.subr.bf16.mxu0 %v3655
    %4079 = vmatpush1.bf16.msra.mxu0 %v3654
    %4080 = vmatprep.subr.bf16.mxu0 %v3649
    %4081 = vmatpush1.bf16.msra.mxu0 %v3648
    %4082 = vmatprep.subr.bf16.mxu0 %v3643
    %4083 = vmatpush1.bf16.msra.mxu0 %v3642
    %4084 = vmatprep.subr.bf16.mxu0 %v3637
    %4085 = vmatpush1.bf16.msra.mxu0 %v3636
    %4086 = vmatprep.subr.bf16.mxu0 %v3631
    %4087 = vmatpush1.bf16.msra.mxu0 %v3630
    %4088 = vmatprep.subr.bf16.mxu0 %v3625
    %4089 = vmatpush1.bf16.msra.mxu0 %v3624
    %4090 = vmatprep.subr.bf16.mxu0 %v3619
    %4091 = vmatpush1.bf16.msra.mxu0 %v3618
    %4092 = vmatprep.subr.bf16.mxu0 %v3613
    %4093 = vmatpush1.bf16.msra.mxu0 %v3612
    %4094 = vmatprep.subr.bf16.mxu0 %v3703
    %4095 = vmatpush2.bf16.msra.mxu0 %v3702
    %4096 = vmatprep.subr.bf16.mxu0 %v3697
    %4097 = vmatpush2.bf16.msra.mxu0 %v3696
    %4098 = vmatprep.subr.bf16.mxu0 %v3691
    %4099 = vmatpush2.bf16.msra.mxu0 %v3690
    %4100 = vmatprep.subr.bf16.mxu0 %v3685
    %4101 = vmatpush2.bf16.msra.mxu0 %v3684
    %4102 = vmatprep.subr.bf16.mxu0 %v3679
    %4103 = vmatpush2.bf16.msra.mxu0 %v3678
    %4104 = vmatprep.subr.bf16.mxu0 %v3673
    %4105 = vmatpush2.bf16.msra.mxu0 %v3672
    %4106 = vmatprep.subr.bf16.mxu0 %v3667
    %4107 = vmatpush2.bf16.msra.mxu0 %v3666
    %4108 = vmatprep.subr.bf16.mxu0 %v3661
    %4109 = vmatpush2.bf16.msra.mxu0 %v3660
    %4110 = vmatprep.mubr.bf16.mxu0 %v2236
    %4111 = vmatmul.mubr.bf16.gmra.mxu0 %v2235
    %v4112 = vpop.f32.mrf.mxu0
    %v4113 = vadd.f32 %v4072, %v4112
    %v4114 = vpop.f32.mrf.mxu0
    %v4115 = vadd.f32 %v4074, %v4114
    %v4116 = vpop.f32.mrf.mxu0
    %v4117 = vpop.f32.mrf.mxu0
    %4118 = vdwg.mxu0
    %4119 = vmatprep.subr.bf16.mxu0 %v3465
    %4120 = vmatpush1.bf16.msra.mxu0 %v3464
    %4121 = vmatprep.subr.bf16.mxu0 %v3459
    %4122 = vmatpush1.bf16.msra.mxu0 %v3458
    %4123 = vmatprep.subr.bf16.mxu0 %v3453
    %4124 = vmatpush1.bf16.msra.mxu0 %v3452
    %4125 = vmatprep.subr.bf16.mxu0 %v3447
    %4126 = vmatpush1.bf16.msra.mxu0 %v3446
    %4127 = vmatprep.subr.bf16.mxu0 %v3441
    %4128 = vmatpush1.bf16.msra.mxu0 %v3440
    %4129 = vmatprep.subr.bf16.mxu0 %v3435
    %4130 = vmatpush1.bf16.msra.mxu0 %v3434
    %4131 = vmatprep.subr.bf16.mxu0 %v3429
    %4132 = vmatpush1.bf16.msra.mxu0 %v3428
    %4133 = vmatprep.subr.bf16.mxu0 %v3423
    %4134 = vmatpush1.bf16.msra.mxu0 %v3422
    %4135 = vmatprep.subr.bf16.mxu0 %v3513
    %4136 = vmatpush2.bf16.msra.mxu0 %v3512
    %4137 = vmatprep.subr.bf16.mxu0 %v3507
    %4138 = vmatpush2.bf16.msra.mxu0 %v3506
    %4139 = vmatprep.subr.bf16.mxu0 %v3501
    %4140 = vmatpush2.bf16.msra.mxu0 %v3500
    %4141 = vmatprep.subr.bf16.mxu0 %v3495
    %4142 = vmatpush2.bf16.msra.mxu0 %v3494
    %4143 = vmatprep.subr.bf16.mxu0 %v3489
    %4144 = vmatpush2.bf16.msra.mxu0 %v3488
    %4145 = vmatprep.subr.bf16.mxu0 %v3483
    %4146 = vmatpush2.bf16.msra.mxu0 %v3482
    %4147 = vmatprep.subr.bf16.mxu0 %v3477
    %4148 = vmatpush2.bf16.msra.mxu0 %v3476
    %4149 = vmatprep.subr.bf16.mxu0 %v3471
    %4150 = vmatpush2.bf16.msra.mxu0 %v3470
    %4151 = vmatprep.mubr.bf16.mxu0 %v2232
    %4152 = vmatmul.mubr.bf16.gmra.mxu0 %v2231
    %v4153 = vpop.f32.mrf.mxu0
    %v4154 = vadd.f32 %v2537, %v4153
    %v4155 = vpop.f32.mrf.mxu0
    %v4156 = vadd.f32 %v2541, %v4155
    %v4157 = vpop.f32.mrf.mxu0
    %v4158 = vpop.f32.mrf.mxu0
    %4159 = vdwg.mxu0
    %4160 = vmatprep.subr.bf16.mxu0 %v3561
    %4161 = vmatpush1.bf16.msra.mxu0 %v3560
    %4162 = vmatprep.subr.bf16.mxu0 %v3555
    %4163 = vmatpush1.bf16.msra.mxu0 %v3554
    %4164 = vmatprep.subr.bf16.mxu0 %v3549
    %4165 = vmatpush1.bf16.msra.mxu0 %v3548
    %4166 = vmatprep.subr.bf16.mxu0 %v3543
    %4167 = vmatpush1.bf16.msra.mxu0 %v3542
    %4168 = vmatprep.subr.bf16.mxu0 %v3537
    %4169 = vmatpush1.bf16.msra.mxu0 %v3536
    %4170 = vmatprep.subr.bf16.mxu0 %v3531
    %4171 = vmatpush1.bf16.msra.mxu0 %v3530
    %4172 = vmatprep.subr.bf16.mxu0 %v3525
    %4173 = vmatpush1.bf16.msra.mxu0 %v3524
    %4174 = vmatprep.subr.bf16.mxu0 %v3519
    %4175 = vmatpush1.bf16.msra.mxu0 %v3518
    %4176 = vmatprep.subr.bf16.mxu0 %v3609
    %4177 = vmatpush2.bf16.msra.mxu0 %v3608
    %4178 = vmatprep.subr.bf16.mxu0 %v3603
    %4179 = vmatpush2.bf16.msra.mxu0 %v3602
    %4180 = vmatprep.subr.bf16.mxu0 %v3597
    %4181 = vmatpush2.bf16.msra.mxu0 %v3596
    %4182 = vmatprep.subr.bf16.mxu0 %v3591
    %4183 = vmatpush2.bf16.msra.mxu0 %v3590
    %4184 = vmatprep.subr.bf16.mxu0 %v3585
    %4185 = vmatpush2.bf16.msra.mxu0 %v3584
    %4186 = vmatprep.subr.bf16.mxu0 %v3579
    %4187 = vmatpush2.bf16.msra.mxu0 %v3578
    %4188 = vmatprep.subr.bf16.mxu0 %v3573
    %4189 = vmatpush2.bf16.msra.mxu0 %v3572
    %4190 = vmatprep.subr.bf16.mxu0 %v3567
    %4191 = vmatpush2.bf16.msra.mxu0 %v3566
    %4192 = vmatprep.mubr.bf16.mxu0 %v2234
    %4193 = vmatmul.mubr.bf16.gmra.mxu0 %v2233
    %v4194 = vpop.f32.mrf.mxu0
    %v4195 = vadd.f32 %v4154, %v4194
    %v4196 = vpop.f32.mrf.mxu0
    %v4197 = vadd.f32 %v4156, %v4196
    %v4198 = vpop.f32.mrf.mxu0
    %v4199 = vpop.f32.mrf.mxu0
    %4200 = vdwg.mxu0
    %4201 = vmatprep.subr.bf16.mxu0 %v3657
    %4202 = vmatpush1.bf16.msra.mxu0 %v3656
    %4203 = vmatprep.subr.bf16.mxu0 %v3651
    %4204 = vmatpush1.bf16.msra.mxu0 %v3650
    %4205 = vmatprep.subr.bf16.mxu0 %v3645
    %4206 = vmatpush1.bf16.msra.mxu0 %v3644
    %4207 = vmatprep.subr.bf16.mxu0 %v3639
    %4208 = vmatpush1.bf16.msra.mxu0 %v3638
    %4209 = vmatprep.subr.bf16.mxu0 %v3633
    %4210 = vmatpush1.bf16.msra.mxu0 %v3632
    %4211 = vmatprep.subr.bf16.mxu0 %v3627
    %4212 = vmatpush1.bf16.msra.mxu0 %v3626
    %4213 = vmatprep.subr.bf16.mxu0 %v3621
    %4214 = vmatpush1.bf16.msra.mxu0 %v3620
    %4215 = vmatprep.subr.bf16.mxu0 %v3615
    %4216 = vmatpush1.bf16.msra.mxu0 %v3614
    %4217 = vmatprep.subr.bf16.mxu0 %v3705
    %4218 = vmatpush2.bf16.msra.mxu0 %v3704
    %4219 = vmatprep.subr.bf16.mxu0 %v3699
    %4220 = vmatpush2.bf16.msra.mxu0 %v3698
    %4221 = vmatprep.subr.bf16.mxu0 %v3693
    %4222 = vmatpush2.bf16.msra.mxu0 %v3692
    %4223 = vmatprep.subr.bf16.mxu0 %v3687
    %4224 = vmatpush2.bf16.msra.mxu0 %v3686
    %4225 = vmatprep.subr.bf16.mxu0 %v3681
    %4226 = vmatpush2.bf16.msra.mxu0 %v3680
    %4227 = vmatprep.subr.bf16.mxu0 %v3675
    %4228 = vmatpush2.bf16.msra.mxu0 %v3674
    %4229 = vmatprep.subr.bf16.mxu0 %v3669
    %4230 = vmatpush2.bf16.msra.mxu0 %v3668
    %4231 = vmatprep.subr.bf16.mxu0 %v3663
    %4232 = vmatpush2.bf16.msra.mxu0 %v3662
    %4233 = vmatprep.mubr.bf16.mxu0 %v2236
    %4234 = vmatmul.mubr.bf16.gmra.mxu0 %v2235
    %v4235 = vpop.f32.mrf.mxu0
    %v4236 = vadd.f32 %v4195, %v4235
    %v4237 = vpop.f32.mrf.mxu0
    %v4238 = vadd.f32 %v4197, %v4237
    %v4239 = vpop.f32.mrf.mxu0
    %v4240 = vpop.f32.mrf.mxu0
    %4241 = vdwg.mxu0
    %4242 = vmatprep.subr.bf16.mxu0 %v3467
    %4243 = vmatpush1.bf16.msra.mxu0 %v3466
    %4244 = vmatprep.subr.bf16.mxu0 %v3461
    %4245 = vmatpush1.bf16.msra.mxu0 %v3460
    %4246 = vmatprep.subr.bf16.mxu0 %v3455
    %4247 = vmatpush1.bf16.msra.mxu0 %v3454
    %4248 = vmatprep.subr.bf16.mxu0 %v3449
    %4249 = vmatpush1.bf16.msra.mxu0 %v3448
    %4250 = vmatprep.subr.bf16.mxu0 %v3443
    %4251 = vmatpush1.bf16.msra.mxu0 %v3442
    %4252 = vmatprep.subr.bf16.mxu0 %v3437
    %4253 = vmatpush1.bf16.msra.mxu0 %v3436
    %4254 = vmatprep.subr.bf16.mxu0 %v3431
    %4255 = vmatpush1.bf16.msra.mxu0 %v3430
    %4256 = vmatprep.subr.bf16.mxu0 %v3425
    %4257 = vmatpush1.bf16.msra.mxu0 %v3424
    %4258 = vmatprep.subr.bf16.mxu0 %v3515
    %4259 = vmatpush2.bf16.msra.mxu0 %v3514
    %4260 = vmatprep.subr.bf16.mxu0 %v3509
    %4261 = vmatpush2.bf16.msra.mxu0 %v3508
    %4262 = vmatprep.subr.bf16.mxu0 %v3503
    %4263 = vmatpush2.bf16.msra.mxu0 %v3502
    %4264 = vmatprep.subr.bf16.mxu0 %v3497
    %4265 = vmatpush2.bf16.msra.mxu0 %v3496
    %4266 = vmatprep.subr.bf16.mxu0 %v3491
    %4267 = vmatpush2.bf16.msra.mxu0 %v3490
    %4268 = vmatprep.subr.bf16.mxu0 %v3485
    %4269 = vmatpush2.bf16.msra.mxu0 %v3484
    %4270 = vmatprep.subr.bf16.mxu0 %v3479
    %4271 = vmatpush2.bf16.msra.mxu0 %v3478
    %4272 = vmatprep.subr.bf16.mxu0 %v3473
    %4273 = vmatpush2.bf16.msra.mxu0 %v3472
    %4274 = vmatprep.mubr.bf16.mxu0 %v2232
    %4275 = vmatmul.mubr.bf16.gmra.mxu0 %v2231
    %v4276 = vpop.f32.mrf.mxu0
    %v4277 = vadd.f32 %v2545, %v4276
    %v4278 = vpop.f32.mrf.mxu0
    %v4279 = vadd.f32 %v2549, %v4278
    %v4280 = vpop.f32.mrf.mxu0
    %v4281 = vpop.f32.mrf.mxu0
    %4282 = vdwg.mxu0
    %4283 = vmatprep.subr.bf16.mxu0 %v3563
    %4284 = vmatpush1.bf16.msra.mxu0 %v3562
    %4285 = vmatprep.subr.bf16.mxu0 %v3557
    %4286 = vmatpush1.bf16.msra.mxu0 %v3556
    %4287 = vmatprep.subr.bf16.mxu0 %v3551
    %4288 = vmatpush1.bf16.msra.mxu0 %v3550
    %4289 = vmatprep.subr.bf16.mxu0 %v3545
    %4290 = vmatpush1.bf16.msra.mxu0 %v3544
    %4291 = vmatprep.subr.bf16.mxu0 %v3539
    %4292 = vmatpush1.bf16.msra.mxu0 %v3538
    %4293 = vmatprep.subr.bf16.mxu0 %v3533
    %4294 = vmatpush1.bf16.msra.mxu0 %v3532
    %4295 = vmatprep.subr.bf16.mxu0 %v3527
    %4296 = vmatpush1.bf16.msra.mxu0 %v3526
    %4297 = vmatprep.subr.bf16.mxu0 %v3521
    %4298 = vmatpush1.bf16.msra.mxu0 %v3520
    %4299 = vmatprep.subr.bf16.mxu0 %v3611
    %4300 = vmatpush2.bf16.msra.mxu0 %v3610
    %4301 = vmatprep.subr.bf16.mxu0 %v3605
    %4302 = vmatpush2.bf16.msra.mxu0 %v3604
    %4303 = vmatprep.subr.bf16.mxu0 %v3599
    %4304 = vmatpush2.bf16.msra.mxu0 %v3598
    %4305 = vmatprep.subr.bf16.mxu0 %v3593
    %4306 = vmatpush2.bf16.msra.mxu0 %v3592
    %4307 = vmatprep.subr.bf16.mxu0 %v3587
    %4308 = vmatpush2.bf16.msra.mxu0 %v3586
    %4309 = vmatprep.subr.bf16.mxu0 %v3581
    %4310 = vmatpush2.bf16.msra.mxu0 %v3580
    %4311 = vmatprep.subr.bf16.mxu0 %v3575
    %4312 = vmatpush2.bf16.msra.mxu0 %v3574
    %4313 = vmatprep.subr.bf16.mxu0 %v3569
    %4314 = vmatpush2.bf16.msra.mxu0 %v3568
    %4315 = vmatprep.mubr.bf16.mxu0 %v2234
    %4316 = vmatmul.mubr.bf16.gmra.mxu0 %v2233
    %v4317 = vpop.f32.mrf.mxu0
    %v4318 = vadd.f32 %v4277, %v4317
    %v4319 = vpop.f32.mrf.mxu0
    %v4320 = vadd.f32 %v4279, %v4319
    %v4321 = vpop.f32.mrf.mxu0
    %v4322 = vpop.f32.mrf.mxu0
    %4323 = vdwg.mxu0
    %4324 = vmatprep.subr.bf16.mxu0 %v3659
    %4325 = vmatpush1.bf16.msra.mxu0 %v3658
    %4326 = vmatprep.subr.bf16.mxu0 %v3653
    %4327 = vmatpush1.bf16.msra.mxu0 %v3652
    %4328 = vmatprep.subr.bf16.mxu0 %v3647
    %4329 = vmatpush1.bf16.msra.mxu0 %v3646
    %4330 = vmatprep.subr.bf16.mxu0 %v3641
    %4331 = vmatpush1.bf16.msra.mxu0 %v3640
    %4332 = vmatprep.subr.bf16.mxu0 %v3635
    %4333 = vmatpush1.bf16.msra.mxu0 %v3634
    %4334 = vmatprep.subr.bf16.mxu0 %v3629
    %4335 = vmatpush1.bf16.msra.mxu0 %v3628
    %4336 = vmatprep.subr.bf16.mxu0 %v3623
    %4337 = vmatpush1.bf16.msra.mxu0 %v3622
    %4338 = vmatprep.subr.bf16.mxu0 %v3617
    %4339 = vmatpush1.bf16.msra.mxu0 %v3616
    %4340 = vmatprep.subr.bf16.mxu0 %v3707
    %4341 = vmatpush2.bf16.msra.mxu0 %v3706
    %4342 = vmatprep.subr.bf16.mxu0 %v3701
    %4343 = vmatpush2.bf16.msra.mxu0 %v3700
    %4344 = vmatprep.subr.bf16.mxu0 %v3695
    %4345 = vmatpush2.bf16.msra.mxu0 %v3694
    %4346 = vmatprep.subr.bf16.mxu0 %v3689
    %4347 = vmatpush2.bf16.msra.mxu0 %v3688
    %4348 = vmatprep.subr.bf16.mxu0 %v3683
    %4349 = vmatpush2.bf16.msra.mxu0 %v3682
    %4350 = vmatprep.subr.bf16.mxu0 %v3677
    %4351 = vmatpush2.bf16.msra.mxu0 %v3676
    %4352 = vmatprep.subr.bf16.mxu0 %v3671
    %4353 = vmatpush2.bf16.msra.mxu0 %v3670
    %4354 = vmatprep.subr.bf16.mxu0 %v3665
    %4355 = vmatpush2.bf16.msra.mxu0 %v3664
    %4356 = vmatprep.mubr.bf16.mxu0 %v2236
    %4357 = vmatmul.mubr.bf16.gmra.mxu0 %v2235
    %v4358 = vpop.f32.mrf.mxu0
    %v4359 = vadd.f32 %v4318, %v4358
    %v4360 = vpop.f32.mrf.mxu0
    %v4361 = vadd.f32 %v4320, %v4360
    %v4362 = vpop.f32.mrf.mxu0
    %v4363 = vpop.f32.mrf.mxu0
    %4364 = vdwg.mxu0
    %4365 = vst [vmem:[#allocation11] sm:$0xff] %v4113
    %4366 = vst [vmem:[#allocation11 + $0x8] sm:$0xff] %v4115
    %4367 = vst [vmem:[#allocation11 + $0x10] sm:$0xff] %v4236
    %4368 = vst [vmem:[#allocation11 + $0x18] sm:$0xff] %v4238
    %4369 = vst [vmem:[#allocation11 + $0x20] sm:$0xff] %v4359
    %4370 = vst [vmem:[#allocation11 + $0x28] sm:$0xff] %v4361
    // Predicated region
    $region42: #{tpu_custom_call.1} parent=1 // pred_check
      _
    $region43: #{tpu_custom_call.1} parent=1 // pred_check_branch
      %4372 = sbr.rel (0) target = $region45
    $region44: #{tpu_custom_call.1} parent=1 // pred_region
      %s4374 = ssub.s32 768, 768
      %4375 = vsyncadd [#allocation4], %s4374
      %s4377 = sshll.u32 [#allocation11], 4
      %s4378 = int_to_ptr.vmem [resolvable:$true] %s4377
      %4380 = dma.vmem_to_hbm [thread:$0]  %s4378, 768, %s5, [#allocation4]
    $region45: #{tpu_custom_call.1} parent=1 // pred_fallthru
      _
    // Predicated region
    $region46: #{tpu_custom_call.1} parent=1 // pred_check
      _
    $region47: #{tpu_custom_call.1} parent=1 // pred_check_branch
      %4382 = sbr.rel (0) target = $region49
    $region48: #{tpu_custom_call.1} parent=1 // pred_region
      %4383 = dma.done [#allocation4], 768
    $region49: #{tpu_custom_call.1} parent=1 // pred_fallthru
      _
    %4384 = vsyncpa [#allocation3], 1
    %4385 = vsyncpa [#allocation6], 1
    %4386 = vsyncpa [#allocation9], 1
    %4387 = vsyncpa [#allocation4], 1

</llo_original>
